<compile_context>
chip_gen: v5e
topology: v5e:2x2
jax: 0.10.0
libtpu: 0.0.40
codegen_flags: <defaults>
</compile_context>

<pallas_src>
import jax
import jax.numpy as jnp
import numpy as np
from jax.experimental import pallas as pl
from jax.experimental.pallas import tpu as pltpu


# ----------------------------- Pallas kernel ------------------------------ #
def make_lstm_kernel(num_layers, T, B, H):
    """Builds a fused (all layers, all timesteps) LSTM kernel."""

    def kernel(*refs):
        x_ref = refs[0]                              # (T, B, I)
        mask_ref = refs[1]                           # (T, B, H) float {0,1}
        layer_refs = [tuple(refs[2 + 3 * l: 5 + 3 * l])
                      for l in range(num_layers)]    # (W_ih^T, W_hh^T, bias)
        out_ref = refs[2 + 3 * num_layers]           # (T, B, H)
        hN_ref = refs[3 + 3 * num_layers]            # (num_layers, B, H)
        pre_scr = refs[4 + 3 * num_layers]           # (T, B, 4H) VMEM scratch
        inter_scr = refs[5 + 3 * num_layers]         # (T, B, H)  VMEM scratch

        def run_layer(in_ref, wih_ref, whh_ref, b_ref, dst_ref, layer_idx):
            wih = wih_ref[...]                       # (in, 4H) bf16
            whh = whh_ref[...]                       # (H, 4H)  bf16
            bias = b_ref[...]                        # (1, 4H)  f32

            # ---- hoisted input projection (off the recurrent critical path)
            def proj(t, carry):
                x_t = in_ref[t]                      # (B, in)
                pre_scr[t] = (jnp.dot(x_t.astype(jnp.bfloat16), wih,
                                      preferred_element_type=jnp.float32)
                              + bias)
                return carry

            jax.lax.fori_loop(0, T, proj, 0, unroll=True)

            # ---- recurrence: one matmul per step on the serial chain
            def step(t, carry):
                h_prev, c_prev = carry
                gates = pre_scr[t] + jnp.dot(
                    h_prev.astype(jnp.bfloat16), whh,
                    preferred_element_type=jnp.float32)          # (B, 4H)
                # PyTorch gate order: i, f, g, o
                i_g = jax.nn.sigmoid(gates[:, 0 * H:1 * H])
                f_g = jax.nn.sigmoid(gates[:, 1 * H:2 * H])
                g_g = jnp.tanh(gates[:, 2 * H:3 * H])
                o_g = jax.nn.sigmoid(gates[:, 3 * H:4 * H])
                c_new = f_g * c_prev + i_g * g_g
                h_new = o_g * jnp.tanh(c_new)

                # PackedSequence masking: step t valid iff t < lengths[b]
                valid = mask_ref[t] > 0.0                        # (B, H) bool
                h_keep = jnp.where(valid, h_new, h_prev)
                c_keep = jnp.where(valid, c_new, c_prev)
                dst_ref[t] = jnp.where(valid, h_new, 0.0)
                return (h_keep, c_keep)

            init = (jnp.zeros((B, H), jnp.float32),
                    jnp.zeros((B, H), jnp.float32))
            h_fin, _ = jax.lax.fori_loop(0, T, step, init, unroll=True)
            hN_ref[layer_idx] = h_fin

        in_ref = x_ref
        for l in range(num_layers):
            wih_ref, whh_ref, b_ref = layer_refs[l]
            dst_ref = out_ref if l == num_layers - 1 else inter_scr
            run_layer(in_ref, wih_ref, whh_ref, b_ref, dst_ref, l)
            in_ref = inter_scr

    return kernel


# ------------------------------ model forward ------------------------------ #
def _lstm_forward(x, lengths, params):
    """Equivalent of LSTM.forward(x, lengths) -> (output, hidden)."""
    T, B, I = x.shape
    num_layers = len(params)
    H = params[0][1].shape[0]

    lengths = lengths.astype(jnp.int32)
    # (T, B, H) {0,1} validity mask, built once outside the recurrence
    # (fused under the same jit; stays resident in VMEM inside the kernel).
    mask = (jnp.arange(T, dtype=jnp.int32)[:, None] < lengths[None, :])
    mask = jnp.broadcast_to(mask[:, :, None].astype(jnp.float32), (T, B, H))

    flat_params = []
    in_specs = [
        pl.BlockSpec((T, B, I), lambda i: (0, 0, 0)),   # x (whole seq resident)
        pl.BlockSpec((T, B, H), lambda i: (0, 0, 0)),   # validity mask
    ]
    for (wih_t, whh_t, bias) in params:
        flat_params += [wih_t, whh_t, bias]
        in_specs += [
            pl.BlockSpec(wih_t.shape, lambda i: (0, 0)),   # W_ih^T (bf16)
            pl.BlockSpec(whh_t.shape, lambda i: (0, 0)),   # W_hh^T (bf16)
            pl.BlockSpec(bias.shape, lambda i: (0, 0)),    # combined bias
        ]

    grid_spec = pltpu.PrefetchScalarGridSpec(
        num_scalar_prefetch=0,
        grid=(1,),                       # everything fused: one grid step
        in_specs=in_specs,
        out_specs=[
            pl.BlockSpec((T, B, H), lambda i: (0, 0, 0)),            # output
            pl.BlockSpec((num_layers, B, H), lambda i: (0, 0, 0)),   # h_n
        ],
        scratch_shapes=[
            pltpu.VMEM((T, B, 4 * H), jnp.float32),   # hoisted pre-gates
            pltpu.VMEM((T, B, H), jnp.float32),       # inter-layer activation
        ],
    )

    out, h_n = pl.pallas_call(
        make_lstm_kernel(num_layers, T, B, H),
        out_shape=(jax.ShapeDtypeStruct((T, B, H), jnp.float32),
                   jax.ShapeDtypeStruct((num_layers, B, H), jnp.float32)),
        grid_spec=grid_spec,
        compiler_params=pltpu.CompilerParams(
            dimension_semantics=("arbitrary",)),      # sequential recurrence
    )(x, mask, *flat_params)
    return out, h_n


lstm_forward = jax.jit(_lstm_forward)


# --------------------------- parameter construction ------------------------ #
def _orthogonal(key, rows, cols):
    a = jax.random.normal(key, (rows, cols), dtype=jnp.float32)
    q, r = jnp.linalg.qr(a)
    q = q * jnp.sign(jnp.diagonal(r))[None, :]
    return q  # (rows, cols), orthonormal columns (rows >= cols here)


def _kaiming_normal(key, rows, cols):
    std = np.sqrt(2.0 / cols)  # fan_in = cols (in_features)
    return std * jax.random.normal(key, (rows, cols), dtype=jnp.float32)


def init_lstm_params(key, input_size, hidden_size, num_layers):
    """Mirrors LSTM.init_params(): orthogonal W_hh, kaiming W_ih,
    zero biases with forget-gate bias (chunk 1 of bias_hh) set to 1.
    Weights are stored pre-transposed and in bf16 (MXU inputs); math keeps
    f32 accumulation."""
    params = []
    for layer in range(num_layers):
        isz = input_size if layer == 0 else hidden_size
        key, k1, k2 = jax.random.split(key, 3)
        w_ih = _kaiming_normal(k1, 4 * hidden_size, isz)        # (4H, I)
        w_hh = _orthogonal(k2, 4 * hidden_size, hidden_size)    # (4H, H)
        b_ih = jnp.zeros((4 * hidden_size,), jnp.float32)
        b_hh = jnp.zeros((4 * hidden_size,), jnp.float32)
        b_hh = b_hh.at[hidden_size:2 * hidden_size].set(1.0)    # forget gate
        params.append((
            jnp.asarray(w_ih.T, dtype=jnp.bfloat16),            # (I, 4H)
            jnp.asarray(w_hh.T, dtype=jnp.bfloat16),            # (H, 4H)
            (b_ih + b_hh).reshape(1, 4 * hidden_size)
                .astype(jnp.float32),                           # (1, 4H)
        ))
    return params


# ------------------------- pure-JAX reference (check) ---------------------- #
def lstm_forward_ref(x, lengths, params):
    T, B, _ = x.shape
    inp = x
    h_finals = []
    for (wih_t, whh_t, bias) in params:
        H = whh_t.shape[0]

        def step(carry, xt_t, wih_t=wih_t, whh_t=whh_t, bias=bias, H=H):
            h, c = carry
            xt, t = xt_t
            g = (jnp.dot(xt.astype(jnp.bfloat16), wih_t,
                         preferred_element_type=jnp.float32)
                 + jnp.dot(h.astype(jnp.bfloat16), whh_t,
                           preferred_element_type=jnp.float32)
                 + bias)
            i = jax.nn.sigmoid(g[:, :H])
            f = jax.nn.sigmoid(g[:, H:2 * H])
            gg = jnp.tanh(g[:, 2 * H:3 * H])
            o = jax.nn.sigmoid(g[:, 3 * H:])
            c_new = f * c + i * gg
            h_new = o * jnp.tanh(c_new)
            valid = (t < lengths)[:, None]
            h = jnp.where(valid, h_new, h)
            c = jnp.where(valid, c_new, c)
            out = jnp.where(valid, h_new, 0.0)
            return (h, c), out

        (h_n, _), outs = jax.lax.scan(
            step,
            (jnp.zeros((B, H), jnp.float32), jnp.zeros((B, H), jnp.float32)),
            (inp, jnp.arange(T)))
        h_finals.append(h_n)
        inp = outs
    return inp, jnp.stack(h_finals, axis=0)


# ----------------------------------- main ----------------------------------- #
if __name__ == "__main__":
    INPUT_SIZE, HIDDEN_SIZE, NUM_LAYERS = 16, 32, 2
    T, B = 8, 2

    key = jax.random.PRNGKey(0)
    key, kx = jax.random.split(key)
    x = jax.random.normal(kx, (T, B, INPUT_SIZE), dtype=jnp.float32)
    lengths = jnp.array([8, 5], dtype=jnp.int32)   # sorted descending, max == T

    params = init_lstm_params(key, INPUT_SIZE, HIDDEN_SIZE, NUM_LAYERS)

    output, hidden = lstm_forward(x, lengths, params)
    output = jax.block_until_ready(output)
    hidden = jax.block_until_ready(hidden)

    assert output.shape == (T, B, HIDDEN_SIZE)
    assert hidden.shape == (NUM_LAYERS, B, HIDDEN_SIZE)

    out_ref, hid_ref = lstm_forward_ref(x, lengths, params)
    np.testing.assert_allclose(np.asarray(output), np.asarray(out_ref),
                               rtol=2e-3, atol=2e-3)
    np.testing.assert_allclose(np.asarray(hidden), np.asarray(hid_ref),
                               rtol=2e-3, atol=2e-3)

    print("KERNEL_OK")
</pallas_src>

<mosaic_0001>
module attributes {stable_mosaic.version = 11 : i64} {
  func.func @kernel(%arg0: i32, %arg1: memref<8x2x16xf32, #tpu.memory_space<vmem>>, %arg2: memref<8x2x32xf32, #tpu.memory_space<vmem>>, %arg3: memref<16x128xbf16, #tpu.memory_space<vmem>>, %arg4: memref<32x128xbf16, #tpu.memory_space<vmem>>, %arg5: memref<1x128xf32, #tpu.memory_space<vmem>>, %arg6: memref<32x128xbf16, #tpu.memory_space<vmem>>, %arg7: memref<32x128xbf16, #tpu.memory_space<vmem>>, %arg8: memref<1x128xf32, #tpu.memory_space<vmem>>, %arg9: memref<8x2x32xf32, #tpu.memory_space<vmem>>, %arg10: memref<2x2x32xf32, #tpu.memory_space<vmem>>, %arg11: memref<8x2x128xf32, #tpu.memory_space<vmem>>, %arg12: memref<8x2x32xf32, #tpu.memory_space<vmem>>) attributes {dimension_semantics = [#tpu.dimension_semantics<arbitrary>], iteration_bounds = array<i64: 1>, scalar_prefetch = 0 : i64, scratch_operands = 2 : i64, tpu.core_type = #tpu.core_type<tc>, window_params = [{pipeline_mode = #tpu.pipeline_mode<synchronous>, transform_indices = @transform_0, window_bounds = array<i64: 8, 2, 16>}, {pipeline_mode = #tpu.pipeline_mode<synchronous>, transform_indices = @transform_1, window_bounds = array<i64: 8, 2, 32>}, {pipeline_mode = #tpu.pipeline_mode<synchronous>, transform_indices = @transform_2, window_bounds = array<i64: 16, 128>}, {pipeline_mode = #tpu.pipeline_mode<synchronous>, transform_indices = @transform_3, window_bounds = array<i64: 32, 128>}, {pipeline_mode = #tpu.pipeline_mode<synchronous>, transform_indices = @transform_4, window_bounds = array<i64: 1, 128>}, {pipeline_mode = #tpu.pipeline_mode<synchronous>, transform_indices = @transform_5, window_bounds = array<i64: 32, 128>}, {pipeline_mode = #tpu.pipeline_mode<synchronous>, transform_indices = @transform_6, window_bounds = array<i64: 32, 128>}, {pipeline_mode = #tpu.pipeline_mode<synchronous>, transform_indices = @transform_7, window_bounds = array<i64: 1, 128>}, {pipeline_mode = #tpu.pipeline_mode<synchronous>, transform_indices = @transform_8, window_bounds = array<i64: 8, 2, 32>}, {pipeline_mode = #tpu.pipeline_mode<synchronous>, transform_indices = @transform_9, window_bounds = array<i64: 2, 2, 32>}]} {
    %c0 = arith.constant 0 : index
    %c0_0 = arith.constant 0 : index
    %0 = vector.load %arg3[%c0, %c0_0] : memref<16x128xbf16, #tpu.memory_space<vmem>>, vector<16x128xbf16>
    %c0_1 = arith.constant 0 : index
    %c0_2 = arith.constant 0 : index
    %1 = vector.load %arg4[%c0_1, %c0_2] : memref<32x128xbf16, #tpu.memory_space<vmem>>, vector<32x128xbf16>
    %c0_3 = arith.constant 0 : index
    %c0_4 = arith.constant 0 : index
    %2 = vector.load %arg5[%c0_3, %c0_4] : memref<1x128xf32, #tpu.memory_space<vmem>>, vector<1x128xf32>
    %c0_i32 = arith.constant 0 : i32
    %3 = arith.index_cast %c0_i32 : i32 to index
    %c0_5 = arith.constant 0 : index
    %c0_6 = arith.constant 0 : index
    %4 = vector.load %arg1[%3, %c0_5, %c0_6] : memref<8x2x16xf32, #tpu.memory_space<vmem>>, vector<1x2x16xf32>
    %5 = vector.shape_cast %4 : vector<1x2x16xf32> to vector<2x16xf32>
    %6 = arith.truncf %5 : vector<2x16xf32> to vector<2x16xbf16>
    %cst = arith.constant dense<0.000000e+00> : vector<2x128xf32>
    %7 = tpu.matmul %6, %0, %cst {dimension_numbers = #tpu.dot_dimension_numbers<[1], [0], [0], [1], [0, 0, 1, 1], [], []>} : vector<2x16xbf16>, vector<16x128xbf16>, vector<2x128xf32> -> vector<2x128xf32>
    %8 = vector.broadcast %2 : vector<1x128xf32> to vector<2x128xf32>
    %9 = arith.addf %7, %8 : vector<2x128xf32>
    %10 = arith.index_cast %c0_i32 : i32 to index
    %c0_7 = arith.constant 0 : index
    %c0_8 = arith.constant 0 : index
    %11 = vector.load %arg11[%10, %c0_7, %c0_8] : memref<8x2x128xf32, #tpu.memory_space<vmem>>, vector<1x2x128xf32>
    %12 = vector.shape_cast %11 : vector<1x2x128xf32> to vector<2x128xf32>
    %13 = vector.shape_cast %9 : vector<2x128xf32> to vector<1x2x128xf32>
    tpu.vector_store %arg11[%10, %c0_7, %c0_8], %13 {strides = array<i32>} : memref<8x2x128xf32, #tpu.memory_space<vmem>>, vector<1x2x128xf32>,
    %c1_i32 = arith.constant 1 : i32
    %14 = arith.index_cast %c1_i32 : i32 to index
    %c0_9 = arith.constant 0 : index
    %c0_10 = arith.constant 0 : index
    %15 = vector.load %arg1[%14, %c0_9, %c0_10] : memref<8x2x16xf32, #tpu.memory_space<vmem>>, vector<1x2x16xf32>
    %16 = vector.shape_cast %15 : vector<1x2x16xf32> to vector<2x16xf32>
    %17 = arith.truncf %16 : vector<2x16xf32> to vector<2x16xbf16>
    %cst_11 = arith.constant dense<0.000000e+00> : vector<2x128xf32>
    %18 = tpu.matmul %17, %0, %cst_11 {dimension_numbers = #tpu.dot_dimension_numbers<[1], [0], [0], [1], [0, 0, 1, 1], [], []>} : vector<2x16xbf16>, vector<16x128xbf16>, vector<2x128xf32> -> vector<2x128xf32>
    %19 = vector.broadcast %2 : vector<1x128xf32> to vector<2x128xf32>
    %20 = arith.addf %18, %19 : vector<2x128xf32>
    %21 = arith.index_cast %c1_i32 : i32 to index
    %c0_12 = arith.constant 0 : index
    %c0_13 = arith.constant 0 : index
    %22 = vector.load %arg11[%21, %c0_12, %c0_13] : memref<8x2x128xf32, #tpu.memory_space<vmem>>, vector<1x2x128xf32>
    %23 = vector.shape_cast %22 : vector<1x2x128xf32> to vector<2x128xf32>
    %24 = vector.shape_cast %20 : vector<2x128xf32> to vector<1x2x128xf32>
    tpu.vector_store %arg11[%21, %c0_12, %c0_13], %24 {strides = array<i32>} : memref<8x2x128xf32, #tpu.memory_space<vmem>>, vector<1x2x128xf32>,
    %c2_i32 = arith.constant 2 : i32
    %25 = arith.index_cast %c2_i32 : i32 to index
    %c0_14 = arith.constant 0 : index
    %c0_15 = arith.constant 0 : index
    %26 = vector.load %arg1[%25, %c0_14, %c0_15] : memref<8x2x16xf32, #tpu.memory_space<vmem>>, vector<1x2x16xf32>
    %27 = vector.shape_cast %26 : vector<1x2x16xf32> to vector<2x16xf32>
    %28 = arith.truncf %27 : vector<2x16xf32> to vector<2x16xbf16>
    %cst_16 = arith.constant dense<0.000000e+00> : vector<2x128xf32>
    %29 = tpu.matmul %28, %0, %cst_16 {dimension_numbers = #tpu.dot_dimension_numbers<[1], [0], [0], [1], [0, 0, 1, 1], [], []>} : vector<2x16xbf16>, vector<16x128xbf16>, vector<2x128xf32> -> vector<2x128xf32>
    %30 = vector.broadcast %2 : vector<1x128xf32> to vector<2x128xf32>
    %31 = arith.addf %29, %30 : vector<2x128xf32>
    %32 = arith.index_cast %c2_i32 : i32 to index
    %c0_17 = arith.constant 0 : index
    %c0_18 = arith.constant 0 : index
    %33 = vector.load %arg11[%32, %c0_17, %c0_18] : memref<8x2x128xf32, #tpu.memory_space<vmem>>, vector<1x2x128xf32>
    %34 = vector.shape_cast %33 : vector<1x2x128xf32> to vector<2x128xf32>
    %35 = vector.shape_cast %31 : vector<2x128xf32> to vector<1x2x128xf32>
    tpu.vector_store %arg11[%32, %c0_17, %c0_18], %35 {strides = array<i32>} : memref<8x2x128xf32, #tpu.memory_space<vmem>>, vector<1x2x128xf32>,
    %c3_i32 = arith.constant 3 : i32
    %36 = arith.index_cast %c3_i32 : i32 to index
    %c0_19 = arith.constant 0 : index
    %c0_20 = arith.constant 0 : index
    %37 = vector.load %arg1[%36, %c0_19, %c0_20] : memref<8x2x16xf32, #tpu.memory_space<vmem>>, vector<1x2x16xf32>
    %38 = vector.shape_cast %37 : vector<1x2x16xf32> to vector<2x16xf32>
    %39 = arith.truncf %38 : vector<2x16xf32> to vector<2x16xbf16>
    %cst_21 = arith.constant dense<0.000000e+00> : vector<2x128xf32>
    %40 = tpu.matmul %39, %0, %cst_21 {dimension_numbers = #tpu.dot_dimension_numbers<[1], [0], [0], [1], [0, 0, 1, 1], [], []>} : vector<2x16xbf16>, vector<16x128xbf16>, vector<2x128xf32> -> vector<2x128xf32>
    %41 = vector.broadcast %2 : vector<1x128xf32> to vector<2x128xf32>
    %42 = arith.addf %40, %41 : vector<2x128xf32>
    %43 = arith.index_cast %c3_i32 : i32 to index
    %c0_22 = arith.constant 0 : index
    %c0_23 = arith.constant 0 : index
    %44 = vector.load %arg11[%43, %c0_22, %c0_23] : memref<8x2x128xf32, #tpu.memory_space<vmem>>, vector<1x2x128xf32>
    %45 = vector.shape_cast %44 : vector<1x2x128xf32> to vector<2x128xf32>
    %46 = vector.shape_cast %42 : vector<2x128xf32> to vector<1x2x128xf32>
    tpu.vector_store %arg11[%43, %c0_22, %c0_23], %46 {strides = array<i32>} : memref<8x2x128xf32, #tpu.memory_space<vmem>>, vector<1x2x128xf32>,
    %c4_i32 = arith.constant 4 : i32
    %47 = arith.index_cast %c4_i32 : i32 to index
    %c0_24 = arith.constant 0 : index
    %c0_25 = arith.constant 0 : index
    %48 = vector.load %arg1[%47, %c0_24, %c0_25] : memref<8x2x16xf32, #tpu.memory_space<vmem>>, vector<1x2x16xf32>
    %49 = vector.shape_cast %48 : vector<1x2x16xf32> to vector<2x16xf32>
    %50 = arith.truncf %49 : vector<2x16xf32> to vector<2x16xbf16>
    %cst_26 = arith.constant dense<0.000000e+00> : vector<2x128xf32>
    %51 = tpu.matmul %50, %0, %cst_26 {dimension_numbers = #tpu.dot_dimension_numbers<[1], [0], [0], [1], [0, 0, 1, 1], [], []>} : vector<2x16xbf16>, vector<16x128xbf16>, vector<2x128xf32> -> vector<2x128xf32>
    %52 = vector.broadcast %2 : vector<1x128xf32> to vector<2x128xf32>
    %53 = arith.addf %51, %52 : vector<2x128xf32>
    %54 = arith.index_cast %c4_i32 : i32 to index
    %c0_27 = arith.constant 0 : index
    %c0_28 = arith.constant 0 : index
    %55 = vector.load %arg11[%54, %c0_27, %c0_28] : memref<8x2x128xf32, #tpu.memory_space<vmem>>, vector<1x2x128xf32>
    %56 = vector.shape_cast %55 : vector<1x2x128xf32> to vector<2x128xf32>
    %57 = vector.shape_cast %53 : vector<2x128xf32> to vector<1x2x128xf32>
    tpu.vector_store %arg11[%54, %c0_27, %c0_28], %57 {strides = array<i32>} : memref<8x2x128xf32, #tpu.memory_space<vmem>>, vector<1x2x128xf32>,
    %c5_i32 = arith.constant 5 : i32
    %58 = arith.index_cast %c5_i32 : i32 to index
    %c0_29 = arith.constant 0 : index
    %c0_30 = arith.constant 0 : index
    %59 = vector.load %arg1[%58, %c0_29, %c0_30] : memref<8x2x16xf32, #tpu.memory_space<vmem>>, vector<1x2x16xf32>
    %60 = vector.shape_cast %59 : vector<1x2x16xf32> to vector<2x16xf32>
    %61 = arith.truncf %60 : vector<2x16xf32> to vector<2x16xbf16>
    %cst_31 = arith.constant dense<0.000000e+00> : vector<2x128xf32>
    %62 = tpu.matmul %61, %0, %cst_31 {dimension_numbers = #tpu.dot_dimension_numbers<[1], [0], [0], [1], [0, 0, 1, 1], [], []>} : vector<2x16xbf16>, vector<16x128xbf16>, vector<2x128xf32> -> vector<2x128xf32>
    %63 = vector.broadcast %2 : vector<1x128xf32> to vector<2x128xf32>
    %64 = arith.addf %62, %63 : vector<2x128xf32>
    %65 = arith.index_cast %c5_i32 : i32 to index
    %c0_32 = arith.constant 0 : index
    %c0_33 = arith.constant 0 : index
    %66 = vector.load %arg11[%65, %c0_32, %c0_33] : memref<8x2x128xf32, #tpu.memory_space<vmem>>, vector<1x2x128xf32>
    %67 = vector.shape_cast %66 : vector<1x2x128xf32> to vector<2x128xf32>
    %68 = vector.shape_cast %64 : vector<2x128xf32> to vector<1x2x128xf32>
    tpu.vector_store %arg11[%65, %c0_32, %c0_33], %68 {strides = array<i32>} : memref<8x2x128xf32, #tpu.memory_space<vmem>>, vector<1x2x128xf32>,
    %c6_i32 = arith.constant 6 : i32
    %69 = arith.index_cast %c6_i32 : i32 to index
    %c0_34 = arith.constant 0 : index
    %c0_35 = arith.constant 0 : index
    %70 = vector.load %arg1[%69, %c0_34, %c0_35] : memref<8x2x16xf32, #tpu.memory_space<vmem>>, vector<1x2x16xf32>
    %71 = vector.shape_cast %70 : vector<1x2x16xf32> to vector<2x16xf32>
    %72 = arith.truncf %71 : vector<2x16xf32> to vector<2x16xbf16>
    %cst_36 = arith.constant dense<0.000000e+00> : vector<2x128xf32>
    %73 = tpu.matmul %72, %0, %cst_36 {dimension_numbers = #tpu.dot_dimension_numbers<[1], [0], [0], [1], [0, 0, 1, 1], [], []>} : vector<2x16xbf16>, vector<16x128xbf16>, vector<2x128xf32> -> vector<2x128xf32>
    %74 = vector.broadcast %2 : vector<1x128xf32> to vector<2x128xf32>
    %75 = arith.addf %73, %74 : vector<2x128xf32>
    %76 = arith.index_cast %c6_i32 : i32 to index
    %c0_37 = arith.constant 0 : index
    %c0_38 = arith.constant 0 : index
    %77 = vector.load %arg11[%76, %c0_37, %c0_38] : memref<8x2x128xf32, #tpu.memory_space<vmem>>, vector<1x2x128xf32>
    %78 = vector.shape_cast %77 : vector<1x2x128xf32> to vector<2x128xf32>
    %79 = vector.shape_cast %75 : vector<2x128xf32> to vector<1x2x128xf32>
    tpu.vector_store %arg11[%76, %c0_37, %c0_38], %79 {strides = array<i32>} : memref<8x2x128xf32, #tpu.memory_space<vmem>>, vector<1x2x128xf32>,
    %c7_i32 = arith.constant 7 : i32
    %80 = arith.index_cast %c7_i32 : i32 to index
    %c0_39 = arith.constant 0 : index
    %c0_40 = arith.constant 0 : index
    %81 = vector.load %arg1[%80, %c0_39, %c0_40] : memref<8x2x16xf32, #tpu.memory_space<vmem>>, vector<1x2x16xf32>
    %82 = vector.shape_cast %81 : vector<1x2x16xf32> to vector<2x16xf32>
    %83 = arith.truncf %82 : vector<2x16xf32> to vector<2x16xbf16>
    %cst_41 = arith.constant dense<0.000000e+00> : vector<2x128xf32>
    %84 = tpu.matmul %83, %0, %cst_41 {dimension_numbers = #tpu.dot_dimension_numbers<[1], [0], [0], [1], [0, 0, 1, 1], [], []>} : vector<2x16xbf16>, vector<16x128xbf16>, vector<2x128xf32> -> vector<2x128xf32>
    %85 = vector.broadcast %2 : vector<1x128xf32> to vector<2x128xf32>
    %86 = arith.addf %84, %85 : vector<2x128xf32>
    %87 = arith.index_cast %c7_i32 : i32 to index
    %c0_42 = arith.constant 0 : index
    %c0_43 = arith.constant 0 : index
    %88 = vector.load %arg11[%87, %c0_42, %c0_43] : memref<8x2x128xf32, #tpu.memory_space<vmem>>, vector<1x2x128xf32>
    %89 = vector.shape_cast %88 : vector<1x2x128xf32> to vector<2x128xf32>
    %90 = vector.shape_cast %86 : vector<2x128xf32> to vector<1x2x128xf32>
    tpu.vector_store %arg11[%87, %c0_42, %c0_43], %90 {strides = array<i32>} : memref<8x2x128xf32, #tpu.memory_space<vmem>>, vector<1x2x128xf32>,
    %c8_i32 = arith.constant 8 : i32
    %cst_44 = arith.constant 0.000000e+00 : f32
    %91 = vector.broadcast %cst_44 : f32 to vector<2x32xf32>
    %cst_45 = arith.constant 0.000000e+00 : f32
    %92 = vector.broadcast %cst_45 : f32 to vector<2x32xf32>
    %c0_i32_46 = arith.constant 0 : i32
    %93 = arith.index_cast %c0_i32_46 : i32 to index
    %c0_47 = arith.constant 0 : index
    %c0_48 = arith.constant 0 : index
    %94 = vector.load %arg11[%93, %c0_47, %c0_48] : memref<8x2x128xf32, #tpu.memory_space<vmem>>, vector<1x2x128xf32>
    %95 = vector.shape_cast %94 : vector<1x2x128xf32> to vector<2x128xf32>
    %96 = arith.truncf %91 : vector<2x32xf32> to vector<2x32xbf16>
    %cst_49 = arith.constant dense<0.000000e+00> : vector<2x128xf32>
    %97 = tpu.matmul %96, %1, %cst_49 {dimension_numbers = #tpu.dot_dimension_numbers<[1], [0], [0], [1], [0, 0, 1, 1], [], []>} : vector<2x32xbf16>, vector<32x128xbf16>, vector<2x128xf32> -> vector<2x128xf32>
    %98 = arith.addf %95, %97 : vector<2x128xf32>
    %99 = vector.extract_strided_slice %98 {offsets = [0, 0], sizes = [2, 32], strides = [1, 1]} : vector<2x128xf32> to vector<2x32xf32>
    %100 = arith.negf %99 : vector<2x32xf32>
    %101 = math.exp %100 : vector<2x32xf32>
    %cst_50 = arith.constant 1.000000e+00 : f32
    %102 = vector.broadcast %cst_50 : f32 to vector<2x32xf32>
    %103 = arith.addf %102, %101 : vector<2x32xf32>
    %104 = arith.divf %102, %103 : vector<2x32xf32>
    %105 = vector.extract_strided_slice %98 {offsets = [0, 32], sizes = [2, 32], strides = [1, 1]} : vector<2x128xf32> to vector<2x32xf32>
    %106 = arith.negf %105 : vector<2x32xf32>
    %107 = math.exp %106 : vector<2x32xf32>
    %cst_51 = arith.constant 1.000000e+00 : f32
    %108 = vector.broadcast %cst_51 : f32 to vector<2x32xf32>
    %109 = arith.addf %108, %107 : vector<2x32xf32>
    %110 = arith.divf %108, %109 : vector<2x32xf32>
    %111 = vector.extract_strided_slice %98 {offsets = [0, 64], sizes = [2, 32], strides = [1, 1]} : vector<2x128xf32> to vector<2x32xf32>
    %112 = math.tanh %111 : vector<2x32xf32>
    %113 = vector.extract_strided_slice %98 {offsets = [0, 96], sizes = [2, 32], strides = [1, 1]} : vector<2x128xf32> to vector<2x32xf32>
    %114 = arith.negf %113 : vector<2x32xf32>
    %115 = math.exp %114 : vector<2x32xf32>
    %cst_52 = arith.constant 1.000000e+00 : f32
    %116 = vector.broadcast %cst_52 : f32 to vector<2x32xf32>
    %117 = arith.addf %116, %115 : vector<2x32xf32>
    %118 = arith.divf %116, %117 : vector<2x32xf32>
    %119 = arith.mulf %110, %92 : vector<2x32xf32>
    %120 = arith.mulf %104, %112 : vector<2x32xf32>
    %121 = arith.addf %119, %120 : vector<2x32xf32>
    %122 = math.tanh %121 : vector<2x32xf32>
    %123 = arith.mulf %118, %122 : vector<2x32xf32>
    %124 = arith.index_cast %c0_i32_46 : i32 to index
    %c0_53 = arith.constant 0 : index
    %c0_54 = arith.constant 0 : index
    %125 = vector.load %arg2[%124, %c0_53, %c0_54] : memref<8x2x32xf32, #tpu.memory_space<vmem>>, vector<1x2x32xf32>
    %126 = vector.shape_cast %125 : vector<1x2x32xf32> to vector<2x32xf32>
    %cst_55 = arith.constant 0.000000e+00 : f32
    %127 = vector.broadcast %cst_55 : f32 to vector<2x32xf32>
    %128 = arith.cmpf ogt, %126, %127 : vector<2x32xf32>
    %129 = arith.select %128, %123, %91 : vector<2x32xi1>, vector<2x32xf32>
    %130 = arith.select %128, %121, %92 : vector<2x32xi1>, vector<2x32xf32>
    %cst_56 = arith.constant 0.000000e+00 : f32
    %131 = vector.broadcast %cst_56 : f32 to vector<2x32xf32>
    %132 = arith.select %128, %123, %131 : vector<2x32xi1>, vector<2x32xf32>
    %133 = arith.index_cast %c0_i32_46 : i32 to index
    %c0_57 = arith.constant 0 : index
    %c0_58 = arith.constant 0 : index
    %134 = vector.load %arg12[%133, %c0_57, %c0_58] : memref<8x2x32xf32, #tpu.memory_space<vmem>>, vector<1x2x32xf32>
    %135 = vector.shape_cast %134 : vector<1x2x32xf32> to vector<2x32xf32>
    %136 = vector.shape_cast %132 : vector<2x32xf32> to vector<1x2x32xf32>
    tpu.vector_store %arg12[%133, %c0_57, %c0_58], %136 {strides = array<i32>} : memref<8x2x32xf32, #tpu.memory_space<vmem>>, vector<1x2x32xf32>,
    %c1_i32_59 = arith.constant 1 : i32
    %137 = arith.index_cast %c1_i32_59 : i32 to index
    %c0_60 = arith.constant 0 : index
    %c0_61 = arith.constant 0 : index
    %138 = vector.load %arg11[%137, %c0_60, %c0_61] : memref<8x2x128xf32, #tpu.memory_space<vmem>>, vector<1x2x128xf32>
    %139 = vector.shape_cast %138 : vector<1x2x128xf32> to vector<2x128xf32>
    %140 = arith.truncf %129 : vector<2x32xf32> to vector<2x32xbf16>
    %cst_62 = arith.constant dense<0.000000e+00> : vector<2x128xf32>
    %141 = tpu.matmul %140, %1, %cst_62 {dimension_numbers = #tpu.dot_dimension_numbers<[1], [0], [0], [1], [0, 0, 1, 1], [], []>} : vector<2x32xbf16>, vector<32x128xbf16>, vector<2x128xf32> -> vector<2x128xf32>
    %142 = arith.addf %139, %141 : vector<2x128xf32>
    %143 = vector.extract_strided_slice %142 {offsets = [0, 0], sizes = [2, 32], strides = [1, 1]} : vector<2x128xf32> to vector<2x32xf32>
    %144 = arith.negf %143 : vector<2x32xf32>
    %145 = math.exp %144 : vector<2x32xf32>
    %cst_63 = arith.constant 1.000000e+00 : f32
    %146 = vector.broadcast %cst_63 : f32 to vector<2x32xf32>
    %147 = arith.addf %146, %145 : vector<2x32xf32>
    %148 = arith.divf %146, %147 : vector<2x32xf32>
    %149 = vector.extract_strided_slice %142 {offsets = [0, 32], sizes = [2, 32], strides = [1, 1]} : vector<2x128xf32> to vector<2x32xf32>
    %150 = arith.negf %149 : vector<2x32xf32>
    %151 = math.exp %150 : vector<2x32xf32>
    %cst_64 = arith.constant 1.000000e+00 : f32
    %152 = vector.broadcast %cst_64 : f32 to vector<2x32xf32>
    %153 = arith.addf %152, %151 : vector<2x32xf32>
    %154 = arith.divf %152, %153 : vector<2x32xf32>
    %155 = vector.extract_strided_slice %142 {offsets = [0, 64], sizes = [2, 32], strides = [1, 1]} : vector<2x128xf32> to vector<2x32xf32>
    %156 = math.tanh %155 : vector<2x32xf32>
    %157 = vector.extract_strided_slice %142 {offsets = [0, 96], sizes = [2, 32], strides = [1, 1]} : vector<2x128xf32> to vector<2x32xf32>
    %158 = arith.negf %157 : vector<2x32xf32>
    %159 = math.exp %158 : vector<2x32xf32>
    %cst_65 = arith.constant 1.000000e+00 : f32
    %160 = vector.broadcast %cst_65 : f32 to vector<2x32xf32>
    %161 = arith.addf %160, %159 : vector<2x32xf32>
    %162 = arith.divf %160, %161 : vector<2x32xf32>
    %163 = arith.mulf %154, %130 : vector<2x32xf32>
    %164 = arith.mulf %148, %156 : vector<2x32xf32>
    %165 = arith.addf %163, %164 : vector<2x32xf32>
    %166 = math.tanh %165 : vector<2x32xf32>
    %167 = arith.mulf %162, %166 : vector<2x32xf32>
    %168 = arith.index_cast %c1_i32_59 : i32 to index
    %c0_66 = arith.constant 0 : index
    %c0_67 = arith.constant 0 : index
    %169 = vector.load %arg2[%168, %c0_66, %c0_67] : memref<8x2x32xf32, #tpu.memory_space<vmem>>, vector<1x2x32xf32>
    %170 = vector.shape_cast %169 : vector<1x2x32xf32> to vector<2x32xf32>
    %cst_68 = arith.constant 0.000000e+00 : f32
    %171 = vector.broadcast %cst_68 : f32 to vector<2x32xf32>
    %172 = arith.cmpf ogt, %170, %171 : vector<2x32xf32>
    %173 = arith.select %172, %167, %129 : vector<2x32xi1>, vector<2x32xf32>
    %174 = arith.select %172, %165, %130 : vector<2x32xi1>, vector<2x32xf32>
    %cst_69 = arith.constant 0.000000e+00 : f32
    %175 = vector.broadcast %cst_69 : f32 to vector<2x32xf32>
    %176 = arith.select %172, %167, %175 : vector<2x32xi1>, vector<2x32xf32>
    %177 = arith.index_cast %c1_i32_59 : i32 to index
    %c0_70 = arith.constant 0 : index
    %c0_71 = arith.constant 0 : index
    %178 = vector.load %arg12[%177, %c0_70, %c0_71] : memref<8x2x32xf32, #tpu.memory_space<vmem>>, vector<1x2x32xf32>
    %179 = vector.shape_cast %178 : vector<1x2x32xf32> to vector<2x32xf32>
    %180 = vector.shape_cast %176 : vector<2x32xf32> to vector<1x2x32xf32>
    tpu.vector_store %arg12[%177, %c0_70, %c0_71], %180 {strides = array<i32>} : memref<8x2x32xf32, #tpu.memory_space<vmem>>, vector<1x2x32xf32>,
    %c2_i32_72 = arith.constant 2 : i32
    %181 = arith.index_cast %c2_i32_72 : i32 to index
    %c0_73 = arith.constant 0 : index
    %c0_74 = arith.constant 0 : index
    %182 = vector.load %arg11[%181, %c0_73, %c0_74] : memref<8x2x128xf32, #tpu.memory_space<vmem>>, vector<1x2x128xf32>
    %183 = vector.shape_cast %182 : vector<1x2x128xf32> to vector<2x128xf32>
    %184 = arith.truncf %173 : vector<2x32xf32> to vector<2x32xbf16>
    %cst_75 = arith.constant dense<0.000000e+00> : vector<2x128xf32>
    %185 = tpu.matmul %184, %1, %cst_75 {dimension_numbers = #tpu.dot_dimension_numbers<[1], [0], [0], [1], [0, 0, 1, 1], [], []>} : vector<2x32xbf16>, vector<32x128xbf16>, vector<2x128xf32> -> vector<2x128xf32>
    %186 = arith.addf %183, %185 : vector<2x128xf32>
    %187 = vector.extract_strided_slice %186 {offsets = [0, 0], sizes = [2, 32], strides = [1, 1]} : vector<2x128xf32> to vector<2x32xf32>
    %188 = arith.negf %187 : vector<2x32xf32>
    %189 = math.exp %188 : vector<2x32xf32>
    %cst_76 = arith.constant 1.000000e+00 : f32
    %190 = vector.broadcast %cst_76 : f32 to vector<2x32xf32>
    %191 = arith.addf %190, %189 : vector<2x32xf32>
    %192 = arith.divf %190, %191 : vector<2x32xf32>
    %193 = vector.extract_strided_slice %186 {offsets = [0, 32], sizes = [2, 32], strides = [1, 1]} : vector<2x128xf32> to vector<2x32xf32>
    %194 = arith.negf %193 : vector<2x32xf32>
    %195 = math.exp %194 : vector<2x32xf32>
    %cst_77 = arith.constant 1.000000e+00 : f32
    %196 = vector.broadcast %cst_77 : f32 to vector<2x32xf32>
    %197 = arith.addf %196, %195 : vector<2x32xf32>
    %198 = arith.divf %196, %197 : vector<2x32xf32>
    %199 = vector.extract_strided_slice %186 {offsets = [0, 64], sizes = [2, 32], strides = [1, 1]} : vector<2x128xf32> to vector<2x32xf32>
    %200 = math.tanh %199 : vector<2x32xf32>
    %201 = vector.extract_strided_slice %186 {offsets = [0, 96], sizes = [2, 32], strides = [1, 1]} : vector<2x128xf32> to vector<2x32xf32>
    %202 = arith.negf %201 : vector<2x32xf32>
    %203 = math.exp %202 : vector<2x32xf32>
    %cst_78 = arith.constant 1.000000e+00 : f32
    %204 = vector.broadcast %cst_78 : f32 to vector<2x32xf32>
    %205 = arith.addf %204, %203 : vector<2x32xf32>
    %206 = arith.divf %204, %205 : vector<2x32xf32>
    %207 = arith.mulf %198, %174 : vector<2x32xf32>
    %208 = arith.mulf %192, %200 : vector<2x32xf32>
    %209 = arith.addf %207, %208 : vector<2x32xf32>
    %210 = math.tanh %209 : vector<2x32xf32>
    %211 = arith.mulf %206, %210 : vector<2x32xf32>
    %212 = arith.index_cast %c2_i32_72 : i32 to index
    %c0_79 = arith.constant 0 : index
    %c0_80 = arith.constant 0 : index
    %213 = vector.load %arg2[%212, %c0_79, %c0_80] : memref<8x2x32xf32, #tpu.memory_space<vmem>>, vector<1x2x32xf32>
    %214 = vector.shape_cast %213 : vector<1x2x32xf32> to vector<2x32xf32>
    %cst_81 = arith.constant 0.000000e+00 : f32
    %215 = vector.broadcast %cst_81 : f32 to vector<2x32xf32>
    %216 = arith.cmpf ogt, %214, %215 : vector<2x32xf32>
    %217 = arith.select %216, %211, %173 : vector<2x32xi1>, vector<2x32xf32>
    %218 = arith.select %216, %209, %174 : vector<2x32xi1>, vector<2x32xf32>
    %cst_82 = arith.constant 0.000000e+00 : f32
    %219 = vector.broadcast %cst_82 : f32 to vector<2x32xf32>
    %220 = arith.select %216, %211, %219 : vector<2x32xi1>, vector<2x32xf32>
    %221 = arith.index_cast %c2_i32_72 : i32 to index
    %c0_83 = arith.constant 0 : index
    %c0_84 = arith.constant 0 : index
    %222 = vector.load %arg12[%221, %c0_83, %c0_84] : memref<8x2x32xf32, #tpu.memory_space<vmem>>, vector<1x2x32xf32>
    %223 = vector.shape_cast %222 : vector<1x2x32xf32> to vector<2x32xf32>
    %224 = vector.shape_cast %220 : vector<2x32xf32> to vector<1x2x32xf32>
    tpu.vector_store %arg12[%221, %c0_83, %c0_84], %224 {strides = array<i32>} : memref<8x2x32xf32, #tpu.memory_space<vmem>>, vector<1x2x32xf32>,
    %c3_i32_85 = arith.constant 3 : i32
    %225 = arith.index_cast %c3_i32_85 : i32 to index
    %c0_86 = arith.constant 0 : index
    %c0_87 = arith.constant 0 : index
    %226 = vector.load %arg11[%225, %c0_86, %c0_87] : memref<8x2x128xf32, #tpu.memory_space<vmem>>, vector<1x2x128xf32>
    %227 = vector.shape_cast %226 : vector<1x2x128xf32> to vector<2x128xf32>
    %228 = arith.truncf %217 : vector<2x32xf32> to vector<2x32xbf16>
    %cst_88 = arith.constant dense<0.000000e+00> : vector<2x128xf32>
    %229 = tpu.matmul %228, %1, %cst_88 {dimension_numbers = #tpu.dot_dimension_numbers<[1], [0], [0], [1], [0, 0, 1, 1], [], []>} : vector<2x32xbf16>, vector<32x128xbf16>, vector<2x128xf32> -> vector<2x128xf32>
    %230 = arith.addf %227, %229 : vector<2x128xf32>
    %231 = vector.extract_strided_slice %230 {offsets = [0, 0], sizes = [2, 32], strides = [1, 1]} : vector<2x128xf32> to vector<2x32xf32>
    %232 = arith.negf %231 : vector<2x32xf32>
    %233 = math.exp %232 : vector<2x32xf32>
    %cst_89 = arith.constant 1.000000e+00 : f32
    %234 = vector.broadcast %cst_89 : f32 to vector<2x32xf32>
    %235 = arith.addf %234, %233 : vector<2x32xf32>
    %236 = arith.divf %234, %235 : vector<2x32xf32>
    %237 = vector.extract_strided_slice %230 {offsets = [0, 32], sizes = [2, 32], strides = [1, 1]} : vector<2x128xf32> to vector<2x32xf32>
    %238 = arith.negf %237 : vector<2x32xf32>
    %239 = math.exp %238 : vector<2x32xf32>
    %cst_90 = arith.constant 1.000000e+00 : f32
    %240 = vector.broadcast %cst_90 : f32 to vector<2x32xf32>
    %241 = arith.addf %240, %239 : vector<2x32xf32>
    %242 = arith.divf %240, %241 : vector<2x32xf32>
    %243 = vector.extract_strided_slice %230 {offsets = [0, 64], sizes = [2, 32], strides = [1, 1]} : vector<2x128xf32> to vector<2x32xf32>
    %244 = math.tanh %243 : vector<2x32xf32>
    %245 = vector.extract_strided_slice %230 {offsets = [0, 96], sizes = [2, 32], strides = [1, 1]} : vector<2x128xf32> to vector<2x32xf32>
    %246 = arith.negf %245 : vector<2x32xf32>
    %247 = math.exp %246 : vector<2x32xf32>
    %cst_91 = arith.constant 1.000000e+00 : f32
    %248 = vector.broadcast %cst_91 : f32 to vector<2x32xf32>
    %249 = arith.addf %248, %247 : vector<2x32xf32>
    %250 = arith.divf %248, %249 : vector<2x32xf32>
    %251 = arith.mulf %242, %218 : vector<2x32xf32>
    %252 = arith.mulf %236, %244 : vector<2x32xf32>
    %253 = arith.addf %251, %252 : vector<2x32xf32>
    %254 = math.tanh %253 : vector<2x32xf32>
    %255 = arith.mulf %250, %254 : vector<2x32xf32>
    %256 = arith.index_cast %c3_i32_85 : i32 to index
    %c0_92 = arith.constant 0 : index
    %c0_93 = arith.constant 0 : index
    %257 = vector.load %arg2[%256, %c0_92, %c0_93] : memref<8x2x32xf32, #tpu.memory_space<vmem>>, vector<1x2x32xf32>
    %258 = vector.shape_cast %257 : vector<1x2x32xf32> to vector<2x32xf32>
    %cst_94 = arith.constant 0.000000e+00 : f32
    %259 = vector.broadcast %cst_94 : f32 to vector<2x32xf32>
    %260 = arith.cmpf ogt, %258, %259 : vector<2x32xf32>
    %261 = arith.select %260, %255, %217 : vector<2x32xi1>, vector<2x32xf32>
    %262 = arith.select %260, %253, %218 : vector<2x32xi1>, vector<2x32xf32>
    %cst_95 = arith.constant 0.000000e+00 : f32
    %263 = vector.broadcast %cst_95 : f32 to vector<2x32xf32>
    %264 = arith.select %260, %255, %263 : vector<2x32xi1>, vector<2x32xf32>
    %265 = arith.index_cast %c3_i32_85 : i32 to index
    %c0_96 = arith.constant 0 : index
    %c0_97 = arith.constant 0 : index
    %266 = vector.load %arg12[%265, %c0_96, %c0_97] : memref<8x2x32xf32, #tpu.memory_space<vmem>>, vector<1x2x32xf32>
    %267 = vector.shape_cast %266 : vector<1x2x32xf32> to vector<2x32xf32>
    %268 = vector.shape_cast %264 : vector<2x32xf32> to vector<1x2x32xf32>
    tpu.vector_store %arg12[%265, %c0_96, %c0_97], %268 {strides = array<i32>} : memref<8x2x32xf32, #tpu.memory_space<vmem>>, vector<1x2x32xf32>,
    %c4_i32_98 = arith.constant 4 : i32
    %269 = arith.index_cast %c4_i32_98 : i32 to index
    %c0_99 = arith.constant 0 : index
    %c0_100 = arith.constant 0 : index
    %270 = vector.load %arg11[%269, %c0_99, %c0_100] : memref<8x2x128xf32, #tpu.memory_space<vmem>>, vector<1x2x128xf32>
    %271 = vector.shape_cast %270 : vector<1x2x128xf32> to vector<2x128xf32>
    %272 = arith.truncf %261 : vector<2x32xf32> to vector<2x32xbf16>
    %cst_101 = arith.constant dense<0.000000e+00> : vector<2x128xf32>
    %273 = tpu.matmul %272, %1, %cst_101 {dimension_numbers = #tpu.dot_dimension_numbers<[1], [0], [0], [1], [0, 0, 1, 1], [], []>} : vector<2x32xbf16>, vector<32x128xbf16>, vector<2x128xf32> -> vector<2x128xf32>
    %274 = arith.addf %271, %273 : vector<2x128xf32>
    %275 = vector.extract_strided_slice %274 {offsets = [0, 0], sizes = [2, 32], strides = [1, 1]} : vector<2x128xf32> to vector<2x32xf32>
    %276 = arith.negf %275 : vector<2x32xf32>
    %277 = math.exp %276 : vector<2x32xf32>
    %cst_102 = arith.constant 1.000000e+00 : f32
    %278 = vector.broadcast %cst_102 : f32 to vector<2x32xf32>
    %279 = arith.addf %278, %277 : vector<2x32xf32>
    %280 = arith.divf %278, %279 : vector<2x32xf32>
    %281 = vector.extract_strided_slice %274 {offsets = [0, 32], sizes = [2, 32], strides = [1, 1]} : vector<2x128xf32> to vector<2x32xf32>
    %282 = arith.negf %281 : vector<2x32xf32>
    %283 = math.exp %282 : vector<2x32xf32>
    %cst_103 = arith.constant 1.000000e+00 : f32
    %284 = vector.broadcast %cst_103 : f32 to vector<2x32xf32>
    %285 = arith.addf %284, %283 : vector<2x32xf32>
    %286 = arith.divf %284, %285 : vector<2x32xf32>
    %287 = vector.extract_strided_slice %274 {offsets = [0, 64], sizes = [2, 32], strides = [1, 1]} : vector<2x128xf32> to vector<2x32xf32>
    %288 = math.tanh %287 : vector<2x32xf32>
    %289 = vector.extract_strided_slice %274 {offsets = [0, 96], sizes = [2, 32], strides = [1, 1]} : vector<2x128xf32> to vector<2x32xf32>
    %290 = arith.negf %289 : vector<2x32xf32>
    %291 = math.exp %290 : vector<2x32xf32>
    %cst_104 = arith.constant 1.000000e+00 : f32
    %292 = vector.broadcast %cst_104 : f32 to vector<2x32xf32>
    %293 = arith.addf %292, %291 : vector<2x32xf32>
    %294 = arith.divf %292, %293 : vector<2x32xf32>
    %295 = arith.mulf %286, %262 : vector<2x32xf32>
    %296 = arith.mulf %280, %288 : vector<2x32xf32>
    %297 = arith.addf %295, %296 : vector<2x32xf32>
    %298 = math.tanh %297 : vector<2x32xf32>
    %299 = arith.mulf %294, %298 : vector<2x32xf32>
    %300 = arith.index_cast %c4_i32_98 : i32 to index
    %c0_105 = arith.constant 0 : index
    %c0_106 = arith.constant 0 : index
    %301 = vector.load %arg2[%300, %c0_105, %c0_106] : memref<8x2x32xf32, #tpu.memory_space<vmem>>, vector<1x2x32xf32>
    %302 = vector.shape_cast %301 : vector<1x2x32xf32> to vector<2x32xf32>
    %cst_107 = arith.constant 0.000000e+00 : f32
    %303 = vector.broadcast %cst_107 : f32 to vector<2x32xf32>
    %304 = arith.cmpf ogt, %302, %303 : vector<2x32xf32>
    %305 = arith.select %304, %299, %261 : vector<2x32xi1>, vector<2x32xf32>
    %306 = arith.select %304, %297, %262 : vector<2x32xi1>, vector<2x32xf32>
    %cst_108 = arith.constant 0.000000e+00 : f32
    %307 = vector.broadcast %cst_108 : f32 to vector<2x32xf32>
    %308 = arith.select %304, %299, %307 : vector<2x32xi1>, vector<2x32xf32>
    %309 = arith.index_cast %c4_i32_98 : i32 to index
    %c0_109 = arith.constant 0 : index
    %c0_110 = arith.constant 0 : index
    %310 = vector.load %arg12[%309, %c0_109, %c0_110] : memref<8x2x32xf32, #tpu.memory_space<vmem>>, vector<1x2x32xf32>
    %311 = vector.shape_cast %310 : vector<1x2x32xf32> to vector<2x32xf32>
    %312 = vector.shape_cast %308 : vector<2x32xf32> to vector<1x2x32xf32>
    tpu.vector_store %arg12[%309, %c0_109, %c0_110], %312 {strides = array<i32>} : memref<8x2x32xf32, #tpu.memory_space<vmem>>, vector<1x2x32xf32>,
    %c5_i32_111 = arith.constant 5 : i32
    %313 = arith.index_cast %c5_i32_111 : i32 to index
    %c0_112 = arith.constant 0 : index
    %c0_113 = arith.constant 0 : index
    %314 = vector.load %arg11[%313, %c0_112, %c0_113] : memref<8x2x128xf32, #tpu.memory_space<vmem>>, vector<1x2x128xf32>
    %315 = vector.shape_cast %314 : vector<1x2x128xf32> to vector<2x128xf32>
    %316 = arith.truncf %305 : vector<2x32xf32> to vector<2x32xbf16>
    %cst_114 = arith.constant dense<0.000000e+00> : vector<2x128xf32>
    %317 = tpu.matmul %316, %1, %cst_114 {dimension_numbers = #tpu.dot_dimension_numbers<[1], [0], [0], [1], [0, 0, 1, 1], [], []>} : vector<2x32xbf16>, vector<32x128xbf16>, vector<2x128xf32> -> vector<2x128xf32>
    %318 = arith.addf %315, %317 : vector<2x128xf32>
    %319 = vector.extract_strided_slice %318 {offsets = [0, 0], sizes = [2, 32], strides = [1, 1]} : vector<2x128xf32> to vector<2x32xf32>
    %320 = arith.negf %319 : vector<2x32xf32>
    %321 = math.exp %320 : vector<2x32xf32>
    %cst_115 = arith.constant 1.000000e+00 : f32
    %322 = vector.broadcast %cst_115 : f32 to vector<2x32xf32>
    %323 = arith.addf %322, %321 : vector<2x32xf32>
    %324 = arith.divf %322, %323 : vector<2x32xf32>
    %325 = vector.extract_strided_slice %318 {offsets = [0, 32], sizes = [2, 32], strides = [1, 1]} : vector<2x128xf32> to vector<2x32xf32>
    %326 = arith.negf %325 : vector<2x32xf32>
    %327 = math.exp %326 : vector<2x32xf32>
    %cst_116 = arith.constant 1.000000e+00 : f32
    %328 = vector.broadcast %cst_116 : f32 to vector<2x32xf32>
    %329 = arith.addf %328, %327 : vector<2x32xf32>
    %330 = arith.divf %328, %329 : vector<2x32xf32>
    %331 = vector.extract_strided_slice %318 {offsets = [0, 64], sizes = [2, 32], strides = [1, 1]} : vector<2x128xf32> to vector<2x32xf32>
    %332 = math.tanh %331 : vector<2x32xf32>
    %333 = vector.extract_strided_slice %318 {offsets = [0, 96], sizes = [2, 32], strides = [1, 1]} : vector<2x128xf32> to vector<2x32xf32>
    %334 = arith.negf %333 : vector<2x32xf32>
    %335 = math.exp %334 : vector<2x32xf32>
    %cst_117 = arith.constant 1.000000e+00 : f32
    %336 = vector.broadcast %cst_117 : f32 to vector<2x32xf32>
    %337 = arith.addf %336, %335 : vector<2x32xf32>
    %338 = arith.divf %336, %337 : vector<2x32xf32>
    %339 = arith.mulf %330, %306 : vector<2x32xf32>
    %340 = arith.mulf %324, %332 : vector<2x32xf32>
    %341 = arith.addf %339, %340 : vector<2x32xf32>
    %342 = math.tanh %341 : vector<2x32xf32>
    %343 = arith.mulf %338, %342 : vector<2x32xf32>
    %344 = arith.index_cast %c5_i32_111 : i32 to index
    %c0_118 = arith.constant 0 : index
    %c0_119 = arith.constant 0 : index
    %345 = vector.load %arg2[%344, %c0_118, %c0_119] : memref<8x2x32xf32, #tpu.memory_space<vmem>>, vector<1x2x32xf32>
    %346 = vector.shape_cast %345 : vector<1x2x32xf32> to vector<2x32xf32>
    %cst_120 = arith.constant 0.000000e+00 : f32
    %347 = vector.broadcast %cst_120 : f32 to vector<2x32xf32>
    %348 = arith.cmpf ogt, %346, %347 : vector<2x32xf32>
    %349 = arith.select %348, %343, %305 : vector<2x32xi1>, vector<2x32xf32>
    %350 = arith.select %348, %341, %306 : vector<2x32xi1>, vector<2x32xf32>
    %cst_121 = arith.constant 0.000000e+00 : f32
    %351 = vector.broadcast %cst_121 : f32 to vector<2x32xf32>
    %352 = arith.select %348, %343, %351 : vector<2x32xi1>, vector<2x32xf32>
    %353 = arith.index_cast %c5_i32_111 : i32 to index
    %c0_122 = arith.constant 0 : index
    %c0_123 = arith.constant 0 : index
    %354 = vector.load %arg12[%353, %c0_122, %c0_123] : memref<8x2x32xf32, #tpu.memory_space<vmem>>, vector<1x2x32xf32>
    %355 = vector.shape_cast %354 : vector<1x2x32xf32> to vector<2x32xf32>
    %356 = vector.shape_cast %352 : vector<2x32xf32> to vector<1x2x32xf32>
    tpu.vector_store %arg12[%353, %c0_122, %c0_123], %356 {strides = array<i32>} : memref<8x2x32xf32, #tpu.memory_space<vmem>>, vector<1x2x32xf32>,
    %c6_i32_124 = arith.constant 6 : i32
    %357 = arith.index_cast %c6_i32_124 : i32 to index
    %c0_125 = arith.constant 0 : index
    %c0_126 = arith.constant 0 : index
    %358 = vector.load %arg11[%357, %c0_125, %c0_126] : memref<8x2x128xf32, #tpu.memory_space<vmem>>, vector<1x2x128xf32>
    %359 = vector.shape_cast %358 : vector<1x2x128xf32> to vector<2x128xf32>
    %360 = arith.truncf %349 : vector<2x32xf32> to vector<2x32xbf16>
    %cst_127 = arith.constant dense<0.000000e+00> : vector<2x128xf32>
    %361 = tpu.matmul %360, %1, %cst_127 {dimension_numbers = #tpu.dot_dimension_numbers<[1], [0], [0], [1], [0, 0, 1, 1], [], []>} : vector<2x32xbf16>, vector<32x128xbf16>, vector<2x128xf32> -> vector<2x128xf32>
    %362 = arith.addf %359, %361 : vector<2x128xf32>
    %363 = vector.extract_strided_slice %362 {offsets = [0, 0], sizes = [2, 32], strides = [1, 1]} : vector<2x128xf32> to vector<2x32xf32>
    %364 = arith.negf %363 : vector<2x32xf32>
    %365 = math.exp %364 : vector<2x32xf32>
    %cst_128 = arith.constant 1.000000e+00 : f32
    %366 = vector.broadcast %cst_128 : f32 to vector<2x32xf32>
    %367 = arith.addf %366, %365 : vector<2x32xf32>
    %368 = arith.divf %366, %367 : vector<2x32xf32>
    %369 = vector.extract_strided_slice %362 {offsets = [0, 32], sizes = [2, 32], strides = [1, 1]} : vector<2x128xf32> to vector<2x32xf32>
    %370 = arith.negf %369 : vector<2x32xf32>
    %371 = math.exp %370 : vector<2x32xf32>
    %cst_129 = arith.constant 1.000000e+00 : f32
    %372 = vector.broadcast %cst_129 : f32 to vector<2x32xf32>
    %373 = arith.addf %372, %371 : vector<2x32xf32>
    %374 = arith.divf %372, %373 : vector<2x32xf32>
    %375 = vector.extract_strided_slice %362 {offsets = [0, 64], sizes = [2, 32], strides = [1, 1]} : vector<2x128xf32> to vector<2x32xf32>
    %376 = math.tanh %375 : vector<2x32xf32>
    %377 = vector.extract_strided_slice %362 {offsets = [0, 96], sizes = [2, 32], strides = [1, 1]} : vector<2x128xf32> to vector<2x32xf32>
    %378 = arith.negf %377 : vector<2x32xf32>
    %379 = math.exp %378 : vector<2x32xf32>
    %cst_130 = arith.constant 1.000000e+00 : f32
    %380 = vector.broadcast %cst_130 : f32 to vector<2x32xf32>
    %381 = arith.addf %380, %379 : vector<2x32xf32>
    %382 = arith.divf %380, %381 : vector<2x32xf32>
    %383 = arith.mulf %374, %350 : vector<2x32xf32>
    %384 = arith.mulf %368, %376 : vector<2x32xf32>
    %385 = arith.addf %383, %384 : vector<2x32xf32>
    %386 = math.tanh %385 : vector<2x32xf32>
    %387 = arith.mulf %382, %386 : vector<2x32xf32>
    %388 = arith.index_cast %c6_i32_124 : i32 to index
    %c0_131 = arith.constant 0 : index
    %c0_132 = arith.constant 0 : index
    %389 = vector.load %arg2[%388, %c0_131, %c0_132] : memref<8x2x32xf32, #tpu.memory_space<vmem>>, vector<1x2x32xf32>
    %390 = vector.shape_cast %389 : vector<1x2x32xf32> to vector<2x32xf32>
    %cst_133 = arith.constant 0.000000e+00 : f32
    %391 = vector.broadcast %cst_133 : f32 to vector<2x32xf32>
    %392 = arith.cmpf ogt, %390, %391 : vector<2x32xf32>
    %393 = arith.select %392, %387, %349 : vector<2x32xi1>, vector<2x32xf32>
    %394 = arith.select %392, %385, %350 : vector<2x32xi1>, vector<2x32xf32>
    %cst_134 = arith.constant 0.000000e+00 : f32
    %395 = vector.broadcast %cst_134 : f32 to vector<2x32xf32>
    %396 = arith.select %392, %387, %395 : vector<2x32xi1>, vector<2x32xf32>
    %397 = arith.index_cast %c6_i32_124 : i32 to index
    %c0_135 = arith.constant 0 : index
    %c0_136 = arith.constant 0 : index
    %398 = vector.load %arg12[%397, %c0_135, %c0_136] : memref<8x2x32xf32, #tpu.memory_space<vmem>>, vector<1x2x32xf32>
    %399 = vector.shape_cast %398 : vector<1x2x32xf32> to vector<2x32xf32>
    %400 = vector.shape_cast %396 : vector<2x32xf32> to vector<1x2x32xf32>
    tpu.vector_store %arg12[%397, %c0_135, %c0_136], %400 {strides = array<i32>} : memref<8x2x32xf32, #tpu.memory_space<vmem>>, vector<1x2x32xf32>,
    %c7_i32_137 = arith.constant 7 : i32
    %401 = arith.index_cast %c7_i32_137 : i32 to index
    %c0_138 = arith.constant 0 : index
    %c0_139 = arith.constant 0 : index
    %402 = vector.load %arg11[%401, %c0_138, %c0_139] : memref<8x2x128xf32, #tpu.memory_space<vmem>>, vector<1x2x128xf32>
    %403 = vector.shape_cast %402 : vector<1x2x128xf32> to vector<2x128xf32>
    %404 = arith.truncf %393 : vector<2x32xf32> to vector<2x32xbf16>
    %cst_140 = arith.constant dense<0.000000e+00> : vector<2x128xf32>
    %405 = tpu.matmul %404, %1, %cst_140 {dimension_numbers = #tpu.dot_dimension_numbers<[1], [0], [0], [1], [0, 0, 1, 1], [], []>} : vector<2x32xbf16>, vector<32x128xbf16>, vector<2x128xf32> -> vector<2x128xf32>
    %406 = arith.addf %403, %405 : vector<2x128xf32>
    %407 = vector.extract_strided_slice %406 {offsets = [0, 0], sizes = [2, 32], strides = [1, 1]} : vector<2x128xf32> to vector<2x32xf32>
    %408 = arith.negf %407 : vector<2x32xf32>
    %409 = math.exp %408 : vector<2x32xf32>
    %cst_141 = arith.constant 1.000000e+00 : f32
    %410 = vector.broadcast %cst_141 : f32 to vector<2x32xf32>
    %411 = arith.addf %410, %409 : vector<2x32xf32>
    %412 = arith.divf %410, %411 : vector<2x32xf32>
    %413 = vector.extract_strided_slice %406 {offsets = [0, 32], sizes = [2, 32], strides = [1, 1]} : vector<2x128xf32> to vector<2x32xf32>
    %414 = arith.negf %413 : vector<2x32xf32>
    %415 = math.exp %414 : vector<2x32xf32>
    %cst_142 = arith.constant 1.000000e+00 : f32
    %416 = vector.broadcast %cst_142 : f32 to vector<2x32xf32>
    %417 = arith.addf %416, %415 : vector<2x32xf32>
    %418 = arith.divf %416, %417 : vector<2x32xf32>
    %419 = vector.extract_strided_slice %406 {offsets = [0, 64], sizes = [2, 32], strides = [1, 1]} : vector<2x128xf32> to vector<2x32xf32>
    %420 = math.tanh %419 : vector<2x32xf32>
    %421 = vector.extract_strided_slice %406 {offsets = [0, 96], sizes = [2, 32], strides = [1, 1]} : vector<2x128xf32> to vector<2x32xf32>
    %422 = arith.negf %421 : vector<2x32xf32>
    %423 = math.exp %422 : vector<2x32xf32>
    %cst_143 = arith.constant 1.000000e+00 : f32
    %424 = vector.broadcast %cst_143 : f32 to vector<2x32xf32>
    %425 = arith.addf %424, %423 : vector<2x32xf32>
    %426 = arith.divf %424, %425 : vector<2x32xf32>
    %427 = arith.mulf %418, %394 : vector<2x32xf32>
    %428 = arith.mulf %412, %420 : vector<2x32xf32>
    %429 = arith.addf %427, %428 : vector<2x32xf32>
    %430 = math.tanh %429 : vector<2x32xf32>
    %431 = arith.mulf %426, %430 : vector<2x32xf32>
    %432 = arith.index_cast %c7_i32_137 : i32 to index
    %c0_144 = arith.constant 0 : index
    %c0_145 = arith.constant 0 : index
    %433 = vector.load %arg2[%432, %c0_144, %c0_145] : memref<8x2x32xf32, #tpu.memory_space<vmem>>, vector<1x2x32xf32>
    %434 = vector.shape_cast %433 : vector<1x2x32xf32> to vector<2x32xf32>
    %cst_146 = arith.constant 0.000000e+00 : f32
    %435 = vector.broadcast %cst_146 : f32 to vector<2x32xf32>
    %436 = arith.cmpf ogt, %434, %435 : vector<2x32xf32>
    %437 = arith.select %436, %431, %393 : vector<2x32xi1>, vector<2x32xf32>
    %438 = arith.select %436, %429, %394 : vector<2x32xi1>, vector<2x32xf32>
    %cst_147 = arith.constant 0.000000e+00 : f32
    %439 = vector.broadcast %cst_147 : f32 to vector<2x32xf32>
    %440 = arith.select %436, %431, %439 : vector<2x32xi1>, vector<2x32xf32>
    %441 = arith.index_cast %c7_i32_137 : i32 to index
    %c0_148 = arith.constant 0 : index
    %c0_149 = arith.constant 0 : index
    %442 = vector.load %arg12[%441, %c0_148, %c0_149] : memref<8x2x32xf32, #tpu.memory_space<vmem>>, vector<1x2x32xf32>
    %443 = vector.shape_cast %442 : vector<1x2x32xf32> to vector<2x32xf32>
    %444 = vector.shape_cast %440 : vector<2x32xf32> to vector<1x2x32xf32>
    tpu.vector_store %arg12[%441, %c0_148, %c0_149], %444 {strides = array<i32>} : memref<8x2x32xf32, #tpu.memory_space<vmem>>, vector<1x2x32xf32>,
    %c8_i32_150 = arith.constant 8 : i32
    %c0_151 = arith.constant 0 : index
    %c0_152 = arith.constant 0 : index
    %c0_153 = arith.constant 0 : index
    %445 = vector.load %arg10[%c0_151, %c0_152, %c0_153] : memref<2x2x32xf32, #tpu.memory_space<vmem>>, vector<1x2x32xf32>
    %446 = vector.shape_cast %445 : vector<1x2x32xf32> to vector<2x32xf32>
    %447 = vector.shape_cast %437 : vector<2x32xf32> to vector<1x2x32xf32>
    tpu.vector_store %arg10[%c0_151, %c0_152, %c0_153], %447 {strides = array<i32>} : memref<2x2x32xf32, #tpu.memory_space<vmem>>, vector<1x2x32xf32>,
    %c0_154 = arith.constant 0 : index
    %c0_155 = arith.constant 0 : index
    %448 = vector.load %arg6[%c0_154, %c0_155] : memref<32x128xbf16, #tpu.memory_space<vmem>>, vector<32x128xbf16>
    %c0_156 = arith.constant 0 : index
    %c0_157 = arith.constant 0 : index
    %449 = vector.load %arg7[%c0_156, %c0_157] : memref<32x128xbf16, #tpu.memory_space<vmem>>, vector<32x128xbf16>
    %c0_158 = arith.constant 0 : index
    %c0_159 = arith.constant 0 : index
    %450 = vector.load %arg8[%c0_158, %c0_159] : memref<1x128xf32, #tpu.memory_space<vmem>>, vector<1x128xf32>
    %c0_i32_160 = arith.constant 0 : i32
    %451 = arith.index_cast %c0_i32_160 : i32 to index
    %c0_161 = arith.constant 0 : index
    %c0_162 = arith.constant 0 : index
    %452 = vector.load %arg12[%451, %c0_161, %c0_162] : memref<8x2x32xf32, #tpu.memory_space<vmem>>, vector<1x2x32xf32>
    %453 = vector.shape_cast %452 : vector<1x2x32xf32> to vector<2x32xf32>
    %454 = arith.truncf %453 : vector<2x32xf32> to vector<2x32xbf16>
    %cst_163 = arith.constant dense<0.000000e+00> : vector<2x128xf32>
    %455 = tpu.matmul %454, %448, %cst_163 {dimension_numbers = #tpu.dot_dimension_numbers<[1], [0], [0], [1], [0, 0, 1, 1], [], []>} : vector<2x32xbf16>, vector<32x128xbf16>, vector<2x128xf32> -> vector<2x128xf32>
    %456 = vector.broadcast %450 : vector<1x128xf32> to vector<2x128xf32>
    %457 = arith.addf %455, %456 : vector<2x128xf32>
    %458 = arith.index_cast %c0_i32_160 : i32 to index
    %c0_164 = arith.constant 0 : index
    %c0_165 = arith.constant 0 : index
    %459 = vector.load %arg11[%458, %c0_164, %c0_165] : memref<8x2x128xf32, #tpu.memory_space<vmem>>, vector<1x2x128xf32>
    %460 = vector.shape_cast %459 : vector<1x2x128xf32> to vector<2x128xf32>
    %461 = vector.shape_cast %457 : vector<2x128xf32> to vector<1x2x128xf32>
    tpu.vector_store %arg11[%458, %c0_164, %c0_165], %461 {strides = array<i32>} : memref<8x2x128xf32, #tpu.memory_space<vmem>>, vector<1x2x128xf32>,
    %c1_i32_166 = arith.constant 1 : i32
    %462 = arith.index_cast %c1_i32_166 : i32 to index
    %c0_167 = arith.constant 0 : index
    %c0_168 = arith.constant 0 : index
    %463 = vector.load %arg12[%462, %c0_167, %c0_168] : memref<8x2x32xf32, #tpu.memory_space<vmem>>, vector<1x2x32xf32>
    %464 = vector.shape_cast %463 : vector<1x2x32xf32> to vector<2x32xf32>
    %465 = arith.truncf %464 : vector<2x32xf32> to vector<2x32xbf16>
    %cst_169 = arith.constant dense<0.000000e+00> : vector<2x128xf32>
    %466 = tpu.matmul %465, %448, %cst_169 {dimension_numbers = #tpu.dot_dimension_numbers<[1], [0], [0], [1], [0, 0, 1, 1], [], []>} : vector<2x32xbf16>, vector<32x128xbf16>, vector<2x128xf32> -> vector<2x128xf32>
    %467 = vector.broadcast %450 : vector<1x128xf32> to vector<2x128xf32>
    %468 = arith.addf %466, %467 : vector<2x128xf32>
    %469 = arith.index_cast %c1_i32_166 : i32 to index
    %c0_170 = arith.constant 0 : index
    %c0_171 = arith.constant 0 : index
    %470 = vector.load %arg11[%469, %c0_170, %c0_171] : memref<8x2x128xf32, #tpu.memory_space<vmem>>, vector<1x2x128xf32>
    %471 = vector.shape_cast %470 : vector<1x2x128xf32> to vector<2x128xf32>
    %472 = vector.shape_cast %468 : vector<2x128xf32> to vector<1x2x128xf32>
    tpu.vector_store %arg11[%469, %c0_170, %c0_171], %472 {strides = array<i32>} : memref<8x2x128xf32, #tpu.memory_space<vmem>>, vector<1x2x128xf32>,
    %c2_i32_172 = arith.constant 2 : i32
    %473 = arith.index_cast %c2_i32_172 : i32 to index
    %c0_173 = arith.constant 0 : index
    %c0_174 = arith.constant 0 : index
    %474 = vector.load %arg12[%473, %c0_173, %c0_174] : memref<8x2x32xf32, #tpu.memory_space<vmem>>, vector<1x2x32xf32>
    %475 = vector.shape_cast %474 : vector<1x2x32xf32> to vector<2x32xf32>
    %476 = arith.truncf %475 : vector<2x32xf32> to vector<2x32xbf16>
    %cst_175 = arith.constant dense<0.000000e+00> : vector<2x128xf32>
    %477 = tpu.matmul %476, %448, %cst_175 {dimension_numbers = #tpu.dot_dimension_numbers<[1], [0], [0], [1], [0, 0, 1, 1], [], []>} : vector<2x32xbf16>, vector<32x128xbf16>, vector<2x128xf32> -> vector<2x128xf32>
    %478 = vector.broadcast %450 : vector<1x128xf32> to vector<2x128xf32>
    %479 = arith.addf %477, %478 : vector<2x128xf32>
    %480 = arith.index_cast %c2_i32_172 : i32 to index
    %c0_176 = arith.constant 0 : index
    %c0_177 = arith.constant 0 : index
    %481 = vector.load %arg11[%480, %c0_176, %c0_177] : memref<8x2x128xf32, #tpu.memory_space<vmem>>, vector<1x2x128xf32>
    %482 = vector.shape_cast %481 : vector<1x2x128xf32> to vector<2x128xf32>
    %483 = vector.shape_cast %479 : vector<2x128xf32> to vector<1x2x128xf32>
    tpu.vector_store %arg11[%480, %c0_176, %c0_177], %483 {strides = array<i32>} : memref<8x2x128xf32, #tpu.memory_space<vmem>>, vector<1x2x128xf32>,
    %c3_i32_178 = arith.constant 3 : i32
    %484 = arith.index_cast %c3_i32_178 : i32 to index
    %c0_179 = arith.constant 0 : index
    %c0_180 = arith.constant 0 : index
    %485 = vector.load %arg12[%484, %c0_179, %c0_180] : memref<8x2x32xf32, #tpu.memory_space<vmem>>, vector<1x2x32xf32>
    %486 = vector.shape_cast %485 : vector<1x2x32xf32> to vector<2x32xf32>
    %487 = arith.truncf %486 : vector<2x32xf32> to vector<2x32xbf16>
    %cst_181 = arith.constant dense<0.000000e+00> : vector<2x128xf32>
    %488 = tpu.matmul %487, %448, %cst_181 {dimension_numbers = #tpu.dot_dimension_numbers<[1], [0], [0], [1], [0, 0, 1, 1], [], []>} : vector<2x32xbf16>, vector<32x128xbf16>, vector<2x128xf32> -> vector<2x128xf32>
    %489 = vector.broadcast %450 : vector<1x128xf32> to vector<2x128xf32>
    %490 = arith.addf %488, %489 : vector<2x128xf32>
    %491 = arith.index_cast %c3_i32_178 : i32 to index
    %c0_182 = arith.constant 0 : index
    %c0_183 = arith.constant 0 : index
    %492 = vector.load %arg11[%491, %c0_182, %c0_183] : memref<8x2x128xf32, #tpu.memory_space<vmem>>, vector<1x2x128xf32>
    %493 = vector.shape_cast %492 : vector<1x2x128xf32> to vector<2x128xf32>
    %494 = vector.shape_cast %490 : vector<2x128xf32> to vector<1x2x128xf32>
    tpu.vector_store %arg11[%491, %c0_182, %c0_183], %494 {strides = array<i32>} : memref<8x2x128xf32, #tpu.memory_space<vmem>>, vector<1x2x128xf32>,
    %c4_i32_184 = arith.constant 4 : i32
    %495 = arith.index_cast %c4_i32_184 : i32 to index
    %c0_185 = arith.constant 0 : index
    %c0_186 = arith.constant 0 : index
    %496 = vector.load %arg12[%495, %c0_185, %c0_186] : memref<8x2x32xf32, #tpu.memory_space<vmem>>, vector<1x2x32xf32>
    %497 = vector.shape_cast %496 : vector<1x2x32xf32> to vector<2x32xf32>
    %498 = arith.truncf %497 : vector<2x32xf32> to vector<2x32xbf16>
    %cst_187 = arith.constant dense<0.000000e+00> : vector<2x128xf32>
    %499 = tpu.matmul %498, %448, %cst_187 {dimension_numbers = #tpu.dot_dimension_numbers<[1], [0], [0], [1], [0, 0, 1, 1], [], []>} : vector<2x32xbf16>, vector<32x128xbf16>, vector<2x128xf32> -> vector<2x128xf32>
    %500 = vector.broadcast %450 : vector<1x128xf32> to vector<2x128xf32>
    %501 = arith.addf %499, %500 : vector<2x128xf32>
    %502 = arith.index_cast %c4_i32_184 : i32 to index
    %c0_188 = arith.constant 0 : index
    %c0_189 = arith.constant 0 : index
    %503 = vector.load %arg11[%502, %c0_188, %c0_189] : memref<8x2x128xf32, #tpu.memory_space<vmem>>, vector<1x2x128xf32>
    %504 = vector.shape_cast %503 : vector<1x2x128xf32> to vector<2x128xf32>
    %505 = vector.shape_cast %501 : vector<2x128xf32> to vector<1x2x128xf32>
    tpu.vector_store %arg11[%502, %c0_188, %c0_189], %505 {strides = array<i32>} : memref<8x2x128xf32, #tpu.memory_space<vmem>>, vector<1x2x128xf32>,
    %c5_i32_190 = arith.constant 5 : i32
    %506 = arith.index_cast %c5_i32_190 : i32 to index
    %c0_191 = arith.constant 0 : index
    %c0_192 = arith.constant 0 : index
    %507 = vector.load %arg12[%506, %c0_191, %c0_192] : memref<8x2x32xf32, #tpu.memory_space<vmem>>, vector<1x2x32xf32>
    %508 = vector.shape_cast %507 : vector<1x2x32xf32> to vector<2x32xf32>
    %509 = arith.truncf %508 : vector<2x32xf32> to vector<2x32xbf16>
    %cst_193 = arith.constant dense<0.000000e+00> : vector<2x128xf32>
    %510 = tpu.matmul %509, %448, %cst_193 {dimension_numbers = #tpu.dot_dimension_numbers<[1], [0], [0], [1], [0, 0, 1, 1], [], []>} : vector<2x32xbf16>, vector<32x128xbf16>, vector<2x128xf32> -> vector<2x128xf32>
    %511 = vector.broadcast %450 : vector<1x128xf32> to vector<2x128xf32>
    %512 = arith.addf %510, %511 : vector<2x128xf32>
    %513 = arith.index_cast %c5_i32_190 : i32 to index
    %c0_194 = arith.constant 0 : index
    %c0_195 = arith.constant 0 : index
    %514 = vector.load %arg11[%513, %c0_194, %c0_195] : memref<8x2x128xf32, #tpu.memory_space<vmem>>, vector<1x2x128xf32>
    %515 = vector.shape_cast %514 : vector<1x2x128xf32> to vector<2x128xf32>
    %516 = vector.shape_cast %512 : vector<2x128xf32> to vector<1x2x128xf32>
    tpu.vector_store %arg11[%513, %c0_194, %c0_195], %516 {strides = array<i32>} : memref<8x2x128xf32, #tpu.memory_space<vmem>>, vector<1x2x128xf32>,
    %c6_i32_196 = arith.constant 6 : i32
    %517 = arith.index_cast %c6_i32_196 : i32 to index
    %c0_197 = arith.constant 0 : index
    %c0_198 = arith.constant 0 : index
    %518 = vector.load %arg12[%517, %c0_197, %c0_198] : memref<8x2x32xf32, #tpu.memory_space<vmem>>, vector<1x2x32xf32>
    %519 = vector.shape_cast %518 : vector<1x2x32xf32> to vector<2x32xf32>
    %520 = arith.truncf %519 : vector<2x32xf32> to vector<2x32xbf16>
    %cst_199 = arith.constant dense<0.000000e+00> : vector<2x128xf32>
    %521 = tpu.matmul %520, %448, %cst_199 {dimension_numbers = #tpu.dot_dimension_numbers<[1], [0], [0], [1], [0, 0, 1, 1], [], []>} : vector<2x32xbf16>, vector<32x128xbf16>, vector<2x128xf32> -> vector<2x128xf32>
    %522 = vector.broadcast %450 : vector<1x128xf32> to vector<2x128xf32>
    %523 = arith.addf %521, %522 : vector<2x128xf32>
    %524 = arith.index_cast %c6_i32_196 : i32 to index
    %c0_200 = arith.constant 0 : index
    %c0_201 = arith.constant 0 : index
    %525 = vector.load %arg11[%524, %c0_200, %c0_201] : memref<8x2x128xf32, #tpu.memory_space<vmem>>, vector<1x2x128xf32>
    %526 = vector.shape_cast %525 : vector<1x2x128xf32> to vector<2x128xf32>
    %527 = vector.shape_cast %523 : vector<2x128xf32> to vector<1x2x128xf32>
    tpu.vector_store %arg11[%524, %c0_200, %c0_201], %527 {strides = array<i32>} : memref<8x2x128xf32, #tpu.memory_space<vmem>>, vector<1x2x128xf32>,
    %c7_i32_202 = arith.constant 7 : i32
    %528 = arith.index_cast %c7_i32_202 : i32 to index
    %c0_203 = arith.constant 0 : index
    %c0_204 = arith.constant 0 : index
    %529 = vector.load %arg12[%528, %c0_203, %c0_204] : memref<8x2x32xf32, #tpu.memory_space<vmem>>, vector<1x2x32xf32>
    %530 = vector.shape_cast %529 : vector<1x2x32xf32> to vector<2x32xf32>
    %531 = arith.truncf %530 : vector<2x32xf32> to vector<2x32xbf16>
    %cst_205 = arith.constant dense<0.000000e+00> : vector<2x128xf32>
    %532 = tpu.matmul %531, %448, %cst_205 {dimension_numbers = #tpu.dot_dimension_numbers<[1], [0], [0], [1], [0, 0, 1, 1], [], []>} : vector<2x32xbf16>, vector<32x128xbf16>, vector<2x128xf32> -> vector<2x128xf32>
    %533 = vector.broadcast %450 : vector<1x128xf32> to vector<2x128xf32>
    %534 = arith.addf %532, %533 : vector<2x128xf32>
    %535 = arith.index_cast %c7_i32_202 : i32 to index
    %c0_206 = arith.constant 0 : index
    %c0_207 = arith.constant 0 : index
    %536 = vector.load %arg11[%535, %c0_206, %c0_207] : memref<8x2x128xf32, #tpu.memory_space<vmem>>, vector<1x2x128xf32>
    %537 = vector.shape_cast %536 : vector<1x2x128xf32> to vector<2x128xf32>
    %538 = vector.shape_cast %534 : vector<2x128xf32> to vector<1x2x128xf32>
    tpu.vector_store %arg11[%535, %c0_206, %c0_207], %538 {strides = array<i32>} : memref<8x2x128xf32, #tpu.memory_space<vmem>>, vector<1x2x128xf32>,
    %c8_i32_208 = arith.constant 8 : i32
    %cst_209 = arith.constant 0.000000e+00 : f32
    %539 = vector.broadcast %cst_209 : f32 to vector<2x32xf32>
    %cst_210 = arith.constant 0.000000e+00 : f32
    %540 = vector.broadcast %cst_210 : f32 to vector<2x32xf32>
    %c0_i32_211 = arith.constant 0 : i32
    %541 = arith.index_cast %c0_i32_211 : i32 to index
    %c0_212 = arith.constant 0 : index
    %c0_213 = arith.constant 0 : index
    %542 = vector.load %arg11[%541, %c0_212, %c0_213] : memref<8x2x128xf32, #tpu.memory_space<vmem>>, vector<1x2x128xf32>
    %543 = vector.shape_cast %542 : vector<1x2x128xf32> to vector<2x128xf32>
    %544 = arith.truncf %539 : vector<2x32xf32> to vector<2x32xbf16>
    %cst_214 = arith.constant dense<0.000000e+00> : vector<2x128xf32>
    %545 = tpu.matmul %544, %449, %cst_214 {dimension_numbers = #tpu.dot_dimension_numbers<[1], [0], [0], [1], [0, 0, 1, 1], [], []>} : vector<2x32xbf16>, vector<32x128xbf16>, vector<2x128xf32> -> vector<2x128xf32>
    %546 = arith.addf %543, %545 : vector<2x128xf32>
    %547 = vector.extract_strided_slice %546 {offsets = [0, 0], sizes = [2, 32], strides = [1, 1]} : vector<2x128xf32> to vector<2x32xf32>
    %548 = arith.negf %547 : vector<2x32xf32>
    %549 = math.exp %548 : vector<2x32xf32>
    %cst_215 = arith.constant 1.000000e+00 : f32
    %550 = vector.broadcast %cst_215 : f32 to vector<2x32xf32>
    %551 = arith.addf %550, %549 : vector<2x32xf32>
    %552 = arith.divf %550, %551 : vector<2x32xf32>
    %553 = vector.extract_strided_slice %546 {offsets = [0, 32], sizes = [2, 32], strides = [1, 1]} : vector<2x128xf32> to vector<2x32xf32>
    %554 = arith.negf %553 : vector<2x32xf32>
    %555 = math.exp %554 : vector<2x32xf32>
    %cst_216 = arith.constant 1.000000e+00 : f32
    %556 = vector.broadcast %cst_216 : f32 to vector<2x32xf32>
    %557 = arith.addf %556, %555 : vector<2x32xf32>
    %558 = arith.divf %556, %557 : vector<2x32xf32>
    %559 = vector.extract_strided_slice %546 {offsets = [0, 64], sizes = [2, 32], strides = [1, 1]} : vector<2x128xf32> to vector<2x32xf32>
    %560 = math.tanh %559 : vector<2x32xf32>
    %561 = vector.extract_strided_slice %546 {offsets = [0, 96], sizes = [2, 32], strides = [1, 1]} : vector<2x128xf32> to vector<2x32xf32>
    %562 = arith.negf %561 : vector<2x32xf32>
    %563 = math.exp %562 : vector<2x32xf32>
    %cst_217 = arith.constant 1.000000e+00 : f32
    %564 = vector.broadcast %cst_217 : f32 to vector<2x32xf32>
    %565 = arith.addf %564, %563 : vector<2x32xf32>
    %566 = arith.divf %564, %565 : vector<2x32xf32>
    %567 = arith.mulf %558, %540 : vector<2x32xf32>
    %568 = arith.mulf %552, %560 : vector<2x32xf32>
    %569 = arith.addf %567, %568 : vector<2x32xf32>
    %570 = math.tanh %569 : vector<2x32xf32>
    %571 = arith.mulf %566, %570 : vector<2x32xf32>
    %572 = arith.index_cast %c0_i32_211 : i32 to index
    %c0_218 = arith.constant 0 : index
    %c0_219 = arith.constant 0 : index
    %573 = vector.load %arg2[%572, %c0_218, %c0_219] : memref<8x2x32xf32, #tpu.memory_space<vmem>>, vector<1x2x32xf32>
    %574 = vector.shape_cast %573 : vector<1x2x32xf32> to vector<2x32xf32>
    %cst_220 = arith.constant 0.000000e+00 : f32
    %575 = vector.broadcast %cst_220 : f32 to vector<2x32xf32>
    %576 = arith.cmpf ogt, %574, %575 : vector<2x32xf32>
    %577 = arith.select %576, %571, %539 : vector<2x32xi1>, vector<2x32xf32>
    %578 = arith.select %576, %569, %540 : vector<2x32xi1>, vector<2x32xf32>
    %cst_221 = arith.constant 0.000000e+00 : f32
    %579 = vector.broadcast %cst_221 : f32 to vector<2x32xf32>
    %580 = arith.select %576, %571, %579 : vector<2x32xi1>, vector<2x32xf32>
    %581 = arith.index_cast %c0_i32_211 : i32 to index
    %c0_222 = arith.constant 0 : index
    %c0_223 = arith.constant 0 : index
    %582 = vector.load %arg9[%581, %c0_222, %c0_223] : memref<8x2x32xf32, #tpu.memory_space<vmem>>, vector<1x2x32xf32>
    %583 = vector.shape_cast %582 : vector<1x2x32xf32> to vector<2x32xf32>
    %584 = vector.shape_cast %580 : vector<2x32xf32> to vector<1x2x32xf32>
    tpu.vector_store %arg9[%581, %c0_222, %c0_223], %584 {strides = array<i32>} : memref<8x2x32xf32, #tpu.memory_space<vmem>>, vector<1x2x32xf32>,
    %c1_i32_224 = arith.constant 1 : i32
    %585 = arith.index_cast %c1_i32_224 : i32 to index
    %c0_225 = arith.constant 0 : index
    %c0_226 = arith.constant 0 : index
    %586 = vector.load %arg11[%585, %c0_225, %c0_226] : memref<8x2x128xf32, #tpu.memory_space<vmem>>, vector<1x2x128xf32>
    %587 = vector.shape_cast %586 : vector<1x2x128xf32> to vector<2x128xf32>
    %588 = arith.truncf %577 : vector<2x32xf32> to vector<2x32xbf16>
    %cst_227 = arith.constant dense<0.000000e+00> : vector<2x128xf32>
    %589 = tpu.matmul %588, %449, %cst_227 {dimension_numbers = #tpu.dot_dimension_numbers<[1], [0], [0], [1], [0, 0, 1, 1], [], []>} : vector<2x32xbf16>, vector<32x128xbf16>, vector<2x128xf32> -> vector<2x128xf32>
    %590 = arith.addf %587, %589 : vector<2x128xf32>
    %591 = vector.extract_strided_slice %590 {offsets = [0, 0], sizes = [2, 32], strides = [1, 1]} : vector<2x128xf32> to vector<2x32xf32>
    %592 = arith.negf %591 : vector<2x32xf32>
    %593 = math.exp %592 : vector<2x32xf32>
    %cst_228 = arith.constant 1.000000e+00 : f32
    %594 = vector.broadcast %cst_228 : f32 to vector<2x32xf32>
    %595 = arith.addf %594, %593 : vector<2x32xf32>
    %596 = arith.divf %594, %595 : vector<2x32xf32>
    %597 = vector.extract_strided_slice %590 {offsets = [0, 32], sizes = [2, 32], strides = [1, 1]} : vector<2x128xf32> to vector<2x32xf32>
    %598 = arith.negf %597 : vector<2x32xf32>
    %599 = math.exp %598 : vector<2x32xf32>
    %cst_229 = arith.constant 1.000000e+00 : f32
    %600 = vector.broadcast %cst_229 : f32 to vector<2x32xf32>
    %601 = arith.addf %600, %599 : vector<2x32xf32>
    %602 = arith.divf %600, %601 : vector<2x32xf32>
    %603 = vector.extract_strided_slice %590 {offsets = [0, 64], sizes = [2, 32], strides = [1, 1]} : vector<2x128xf32> to vector<2x32xf32>
    %604 = math.tanh %603 : vector<2x32xf32>
    %605 = vector.extract_strided_slice %590 {offsets = [0, 96], sizes = [2, 32], strides = [1, 1]} : vector<2x128xf32> to vector<2x32xf32>
    %606 = arith.negf %605 : vector<2x32xf32>
    %607 = math.exp %606 : vector<2x32xf32>
    %cst_230 = arith.constant 1.000000e+00 : f32
    %608 = vector.broadcast %cst_230 : f32 to vector<2x32xf32>
    %609 = arith.addf %608, %607 : vector<2x32xf32>
    %610 = arith.divf %608, %609 : vector<2x32xf32>
    %611 = arith.mulf %602, %578 : vector<2x32xf32>
    %612 = arith.mulf %596, %604 : vector<2x32xf32>
    %613 = arith.addf %611, %612 : vector<2x32xf32>
    %614 = math.tanh %613 : vector<2x32xf32>
    %615 = arith.mulf %610, %614 : vector<2x32xf32>
    %616 = arith.index_cast %c1_i32_224 : i32 to index
    %c0_231 = arith.constant 0 : index
    %c0_232 = arith.constant 0 : index
    %617 = vector.load %arg2[%616, %c0_231, %c0_232] : memref<8x2x32xf32, #tpu.memory_space<vmem>>, vector<1x2x32xf32>
    %618 = vector.shape_cast %617 : vector<1x2x32xf32> to vector<2x32xf32>
    %cst_233 = arith.constant 0.000000e+00 : f32
    %619 = vector.broadcast %cst_233 : f32 to vector<2x32xf32>
    %620 = arith.cmpf ogt, %618, %619 : vector<2x32xf32>
    %621 = arith.select %620, %615, %577 : vector<2x32xi1>, vector<2x32xf32>
    %622 = arith.select %620, %613, %578 : vector<2x32xi1>, vector<2x32xf32>
    %cst_234 = arith.constant 0.000000e+00 : f32
    %623 = vector.broadcast %cst_234 : f32 to vector<2x32xf32>
    %624 = arith.select %620, %615, %623 : vector<2x32xi1>, vector<2x32xf32>
    %625 = arith.index_cast %c1_i32_224 : i32 to index
    %c0_235 = arith.constant 0 : index
    %c0_236 = arith.constant 0 : index
    %626 = vector.load %arg9[%625, %c0_235, %c0_236] : memref<8x2x32xf32, #tpu.memory_space<vmem>>, vector<1x2x32xf32>
    %627 = vector.shape_cast %626 : vector<1x2x32xf32> to vector<2x32xf32>
    %628 = vector.shape_cast %624 : vector<2x32xf32> to vector<1x2x32xf32>
    tpu.vector_store %arg9[%625, %c0_235, %c0_236], %628 {strides = array<i32>} : memref<8x2x32xf32, #tpu.memory_space<vmem>>, vector<1x2x32xf32>,
    %c2_i32_237 = arith.constant 2 : i32
    %629 = arith.index_cast %c2_i32_237 : i32 to index
    %c0_238 = arith.constant 0 : index
    %c0_239 = arith.constant 0 : index
    %630 = vector.load %arg11[%629, %c0_238, %c0_239] : memref<8x2x128xf32, #tpu.memory_space<vmem>>, vector<1x2x128xf32>
    %631 = vector.shape_cast %630 : vector<1x2x128xf32> to vector<2x128xf32>
    %632 = arith.truncf %621 : vector<2x32xf32> to vector<2x32xbf16>
    %cst_240 = arith.constant dense<0.000000e+00> : vector<2x128xf32>
    %633 = tpu.matmul %632, %449, %cst_240 {dimension_numbers = #tpu.dot_dimension_numbers<[1], [0], [0], [1], [0, 0, 1, 1], [], []>} : vector<2x32xbf16>, vector<32x128xbf16>, vector<2x128xf32> -> vector<2x128xf32>
    %634 = arith.addf %631, %633 : vector<2x128xf32>
    %635 = vector.extract_strided_slice %634 {offsets = [0, 0], sizes = [2, 32], strides = [1, 1]} : vector<2x128xf32> to vector<2x32xf32>
    %636 = arith.negf %635 : vector<2x32xf32>
    %637 = math.exp %636 : vector<2x32xf32>
    %cst_241 = arith.constant 1.000000e+00 : f32
    %638 = vector.broadcast %cst_241 : f32 to vector<2x32xf32>
    %639 = arith.addf %638, %637 : vector<2x32xf32>
    %640 = arith.divf %638, %639 : vector<2x32xf32>
    %641 = vector.extract_strided_slice %634 {offsets = [0, 32], sizes = [2, 32], strides = [1, 1]} : vector<2x128xf32> to vector<2x32xf32>
    %642 = arith.negf %641 : vector<2x32xf32>
    %643 = math.exp %642 : vector<2x32xf32>
    %cst_242 = arith.constant 1.000000e+00 : f32
    %644 = vector.broadcast %cst_242 : f32 to vector<2x32xf32>
    %645 = arith.addf %644, %643 : vector<2x32xf32>
    %646 = arith.divf %644, %645 : vector<2x32xf32>
    %647 = vector.extract_strided_slice %634 {offsets = [0, 64], sizes = [2, 32], strides = [1, 1]} : vector<2x128xf32> to vector<2x32xf32>
    %648 = math.tanh %647 : vector<2x32xf32>
    %649 = vector.extract_strided_slice %634 {offsets = [0, 96], sizes = [2, 32], strides = [1, 1]} : vector<2x128xf32> to vector<2x32xf32>
    %650 = arith.negf %649 : vector<2x32xf32>
    %651 = math.exp %650 : vector<2x32xf32>
    %cst_243 = arith.constant 1.000000e+00 : f32
    %652 = vector.broadcast %cst_243 : f32 to vector<2x32xf32>
    %653 = arith.addf %652, %651 : vector<2x32xf32>
    %654 = arith.divf %652, %653 : vector<2x32xf32>
    %655 = arith.mulf %646, %622 : vector<2x32xf32>
    %656 = arith.mulf %640, %648 : vector<2x32xf32>
    %657 = arith.addf %655, %656 : vector<2x32xf32>
    %658 = math.tanh %657 : vector<2x32xf32>
    %659 = arith.mulf %654, %658 : vector<2x32xf32>
    %660 = arith.index_cast %c2_i32_237 : i32 to index
    %c0_244 = arith.constant 0 : index
    %c0_245 = arith.constant 0 : index
    %661 = vector.load %arg2[%660, %c0_244, %c0_245] : memref<8x2x32xf32, #tpu.memory_space<vmem>>, vector<1x2x32xf32>
    %662 = vector.shape_cast %661 : vector<1x2x32xf32> to vector<2x32xf32>
    %cst_246 = arith.constant 0.000000e+00 : f32
    %663 = vector.broadcast %cst_246 : f32 to vector<2x32xf32>
    %664 = arith.cmpf ogt, %662, %663 : vector<2x32xf32>
    %665 = arith.select %664, %659, %621 : vector<2x32xi1>, vector<2x32xf32>
    %666 = arith.select %664, %657, %622 : vector<2x32xi1>, vector<2x32xf32>
    %cst_247 = arith.constant 0.000000e+00 : f32
    %667 = vector.broadcast %cst_247 : f32 to vector<2x32xf32>
    %668 = arith.select %664, %659, %667 : vector<2x32xi1>, vector<2x32xf32>
    %669 = arith.index_cast %c2_i32_237 : i32 to index
    %c0_248 = arith.constant 0 : index
    %c0_249 = arith.constant 0 : index
    %670 = vector.load %arg9[%669, %c0_248, %c0_249] : memref<8x2x32xf32, #tpu.memory_space<vmem>>, vector<1x2x32xf32>
    %671 = vector.shape_cast %670 : vector<1x2x32xf32> to vector<2x32xf32>
    %672 = vector.shape_cast %668 : vector<2x32xf32> to vector<1x2x32xf32>
    tpu.vector_store %arg9[%669, %c0_248, %c0_249], %672 {strides = array<i32>} : memref<8x2x32xf32, #tpu.memory_space<vmem>>, vector<1x2x32xf32>,
    %c3_i32_250 = arith.constant 3 : i32
    %673 = arith.index_cast %c3_i32_250 : i32 to index
    %c0_251 = arith.constant 0 : index
    %c0_252 = arith.constant 0 : index
    %674 = vector.load %arg11[%673, %c0_251, %c0_252] : memref<8x2x128xf32, #tpu.memory_space<vmem>>, vector<1x2x128xf32>
    %675 = vector.shape_cast %674 : vector<1x2x128xf32> to vector<2x128xf32>
    %676 = arith.truncf %665 : vector<2x32xf32> to vector<2x32xbf16>
    %cst_253 = arith.constant dense<0.000000e+00> : vector<2x128xf32>
    %677 = tpu.matmul %676, %449, %cst_253 {dimension_numbers = #tpu.dot_dimension_numbers<[1], [0], [0], [1], [0, 0, 1, 1], [], []>} : vector<2x32xbf16>, vector<32x128xbf16>, vector<2x128xf32> -> vector<2x128xf32>
    %678 = arith.addf %675, %677 : vector<2x128xf32>
    %679 = vector.extract_strided_slice %678 {offsets = [0, 0], sizes = [2, 32], strides = [1, 1]} : vector<2x128xf32> to vector<2x32xf32>
    %680 = arith.negf %679 : vector<2x32xf32>
    %681 = math.exp %680 : vector<2x32xf32>
    %cst_254 = arith.constant 1.000000e+00 : f32
    %682 = vector.broadcast %cst_254 : f32 to vector<2x32xf32>
    %683 = arith.addf %682, %681 : vector<2x32xf32>
    %684 = arith.divf %682, %683 : vector<2x32xf32>
    %685 = vector.extract_strided_slice %678 {offsets = [0, 32], sizes = [2, 32], strides = [1, 1]} : vector<2x128xf32> to vector<2x32xf32>
    %686 = arith.negf %685 : vector<2x32xf32>
    %687 = math.exp %686 : vector<2x32xf32>
    %cst_255 = arith.constant 1.000000e+00 : f32
    %688 = vector.broadcast %cst_255 : f32 to vector<2x32xf32>
    %689 = arith.addf %688, %687 : vector<2x32xf32>
    %690 = arith.divf %688, %689 : vector<2x32xf32>
    %691 = vector.extract_strided_slice %678 {offsets = [0, 64], sizes = [2, 32], strides = [1, 1]} : vector<2x128xf32> to vector<2x32xf32>
    %692 = math.tanh %691 : vector<2x32xf32>
    %693 = vector.extract_strided_slice %678 {offsets = [0, 96], sizes = [2, 32], strides = [1, 1]} : vector<2x128xf32> to vector<2x32xf32>
    %694 = arith.negf %693 : vector<2x32xf32>
    %695 = math.exp %694 : vector<2x32xf32>
    %cst_256 = arith.constant 1.000000e+00 : f32
    %696 = vector.broadcast %cst_256 : f32 to vector<2x32xf32>
    %697 = arith.addf %696, %695 : vector<2x32xf32>
    %698 = arith.divf %696, %697 : vector<2x32xf32>
    %699 = arith.mulf %690, %666 : vector<2x32xf32>
    %700 = arith.mulf %684, %692 : vector<2x32xf32>
    %701 = arith.addf %699, %700 : vector<2x32xf32>
    %702 = math.tanh %701 : vector<2x32xf32>
    %703 = arith.mulf %698, %702 : vector<2x32xf32>
    %704 = arith.index_cast %c3_i32_250 : i32 to index
    %c0_257 = arith.constant 0 : index
    %c0_258 = arith.constant 0 : index
    %705 = vector.load %arg2[%704, %c0_257, %c0_258] : memref<8x2x32xf32, #tpu.memory_space<vmem>>, vector<1x2x32xf32>
    %706 = vector.shape_cast %705 : vector<1x2x32xf32> to vector<2x32xf32>
    %cst_259 = arith.constant 0.000000e+00 : f32
    %707 = vector.broadcast %cst_259 : f32 to vector<2x32xf32>
    %708 = arith.cmpf ogt, %706, %707 : vector<2x32xf32>
    %709 = arith.select %708, %703, %665 : vector<2x32xi1>, vector<2x32xf32>
    %710 = arith.select %708, %701, %666 : vector<2x32xi1>, vector<2x32xf32>
    %cst_260 = arith.constant 0.000000e+00 : f32
    %711 = vector.broadcast %cst_260 : f32 to vector<2x32xf32>
    %712 = arith.select %708, %703, %711 : vector<2x32xi1>, vector<2x32xf32>
    %713 = arith.index_cast %c3_i32_250 : i32 to index
    %c0_261 = arith.constant 0 : index
    %c0_262 = arith.constant 0 : index
    %714 = vector.load %arg9[%713, %c0_261, %c0_262] : memref<8x2x32xf32, #tpu.memory_space<vmem>>, vector<1x2x32xf32>
    %715 = vector.shape_cast %714 : vector<1x2x32xf32> to vector<2x32xf32>
    %716 = vector.shape_cast %712 : vector<2x32xf32> to vector<1x2x32xf32>
    tpu.vector_store %arg9[%713, %c0_261, %c0_262], %716 {strides = array<i32>} : memref<8x2x32xf32, #tpu.memory_space<vmem>>, vector<1x2x32xf32>,
    %c4_i32_263 = arith.constant 4 : i32
    %717 = arith.index_cast %c4_i32_263 : i32 to index
    %c0_264 = arith.constant 0 : index
    %c0_265 = arith.constant 0 : index
    %718 = vector.load %arg11[%717, %c0_264, %c0_265] : memref<8x2x128xf32, #tpu.memory_space<vmem>>, vector<1x2x128xf32>
    %719 = vector.shape_cast %718 : vector<1x2x128xf32> to vector<2x128xf32>
    %720 = arith.truncf %709 : vector<2x32xf32> to vector<2x32xbf16>
    %cst_266 = arith.constant dense<0.000000e+00> : vector<2x128xf32>
    %721 = tpu.matmul %720, %449, %cst_266 {dimension_numbers = #tpu.dot_dimension_numbers<[1], [0], [0], [1], [0, 0, 1, 1], [], []>} : vector<2x32xbf16>, vector<32x128xbf16>, vector<2x128xf32> -> vector<2x128xf32>
    %722 = arith.addf %719, %721 : vector<2x128xf32>
    %723 = vector.extract_strided_slice %722 {offsets = [0, 0], sizes = [2, 32], strides = [1, 1]} : vector<2x128xf32> to vector<2x32xf32>
    %724 = arith.negf %723 : vector<2x32xf32>
    %725 = math.exp %724 : vector<2x32xf32>
    %cst_267 = arith.constant 1.000000e+00 : f32
    %726 = vector.broadcast %cst_267 : f32 to vector<2x32xf32>
    %727 = arith.addf %726, %725 : vector<2x32xf32>
    %728 = arith.divf %726, %727 : vector<2x32xf32>
    %729 = vector.extract_strided_slice %722 {offsets = [0, 32], sizes = [2, 32], strides = [1, 1]} : vector<2x128xf32> to vector<2x32xf32>
    %730 = arith.negf %729 : vector<2x32xf32>
    %731 = math.exp %730 : vector<2x32xf32>
    %cst_268 = arith.constant 1.000000e+00 : f32
    %732 = vector.broadcast %cst_268 : f32 to vector<2x32xf32>
    %733 = arith.addf %732, %731 : vector<2x32xf32>
    %734 = arith.divf %732, %733 : vector<2x32xf32>
    %735 = vector.extract_strided_slice %722 {offsets = [0, 64], sizes = [2, 32], strides = [1, 1]} : vector<2x128xf32> to vector<2x32xf32>
    %736 = math.tanh %735 : vector<2x32xf32>
    %737 = vector.extract_strided_slice %722 {offsets = [0, 96], sizes = [2, 32], strides = [1, 1]} : vector<2x128xf32> to vector<2x32xf32>
    %738 = arith.negf %737 : vector<2x32xf32>
    %739 = math.exp %738 : vector<2x32xf32>
    %cst_269 = arith.constant 1.000000e+00 : f32
    %740 = vector.broadcast %cst_269 : f32 to vector<2x32xf32>
    %741 = arith.addf %740, %739 : vector<2x32xf32>
    %742 = arith.divf %740, %741 : vector<2x32xf32>
    %743 = arith.mulf %734, %710 : vector<2x32xf32>
    %744 = arith.mulf %728, %736 : vector<2x32xf32>
    %745 = arith.addf %743, %744 : vector<2x32xf32>
    %746 = math.tanh %745 : vector<2x32xf32>
    %747 = arith.mulf %742, %746 : vector<2x32xf32>
    %748 = arith.index_cast %c4_i32_263 : i32 to index
    %c0_270 = arith.constant 0 : index
    %c0_271 = arith.constant 0 : index
    %749 = vector.load %arg2[%748, %c0_270, %c0_271] : memref<8x2x32xf32, #tpu.memory_space<vmem>>, vector<1x2x32xf32>
    %750 = vector.shape_cast %749 : vector<1x2x32xf32> to vector<2x32xf32>
    %cst_272 = arith.constant 0.000000e+00 : f32
    %751 = vector.broadcast %cst_272 : f32 to vector<2x32xf32>
    %752 = arith.cmpf ogt, %750, %751 : vector<2x32xf32>
    %753 = arith.select %752, %747, %709 : vector<2x32xi1>, vector<2x32xf32>
    %754 = arith.select %752, %745, %710 : vector<2x32xi1>, vector<2x32xf32>
    %cst_273 = arith.constant 0.000000e+00 : f32
    %755 = vector.broadcast %cst_273 : f32 to vector<2x32xf32>
    %756 = arith.select %752, %747, %755 : vector<2x32xi1>, vector<2x32xf32>
    %757 = arith.index_cast %c4_i32_263 : i32 to index
    %c0_274 = arith.constant 0 : index
    %c0_275 = arith.constant 0 : index
    %758 = vector.load %arg9[%757, %c0_274, %c0_275] : memref<8x2x32xf32, #tpu.memory_space<vmem>>, vector<1x2x32xf32>
    %759 = vector.shape_cast %758 : vector<1x2x32xf32> to vector<2x32xf32>
    %760 = vector.shape_cast %756 : vector<2x32xf32> to vector<1x2x32xf32>
    tpu.vector_store %arg9[%757, %c0_274, %c0_275], %760 {strides = array<i32>} : memref<8x2x32xf32, #tpu.memory_space<vmem>>, vector<1x2x32xf32>,
    %c5_i32_276 = arith.constant 5 : i32
    %761 = arith.index_cast %c5_i32_276 : i32 to index
    %c0_277 = arith.constant 0 : index
    %c0_278 = arith.constant 0 : index
    %762 = vector.load %arg11[%761, %c0_277, %c0_278] : memref<8x2x128xf32, #tpu.memory_space<vmem>>, vector<1x2x128xf32>
    %763 = vector.shape_cast %762 : vector<1x2x128xf32> to vector<2x128xf32>
    %764 = arith.truncf %753 : vector<2x32xf32> to vector<2x32xbf16>
    %cst_279 = arith.constant dense<0.000000e+00> : vector<2x128xf32>
    %765 = tpu.matmul %764, %449, %cst_279 {dimension_numbers = #tpu.dot_dimension_numbers<[1], [0], [0], [1], [0, 0, 1, 1], [], []>} : vector<2x32xbf16>, vector<32x128xbf16>, vector<2x128xf32> -> vector<2x128xf32>
    %766 = arith.addf %763, %765 : vector<2x128xf32>
    %767 = vector.extract_strided_slice %766 {offsets = [0, 0], sizes = [2, 32], strides = [1, 1]} : vector<2x128xf32> to vector<2x32xf32>
    %768 = arith.negf %767 : vector<2x32xf32>
    %769 = math.exp %768 : vector<2x32xf32>
    %cst_280 = arith.constant 1.000000e+00 : f32
    %770 = vector.broadcast %cst_280 : f32 to vector<2x32xf32>
    %771 = arith.addf %770, %769 : vector<2x32xf32>
    %772 = arith.divf %770, %771 : vector<2x32xf32>
    %773 = vector.extract_strided_slice %766 {offsets = [0, 32], sizes = [2, 32], strides = [1, 1]} : vector<2x128xf32> to vector<2x32xf32>
    %774 = arith.negf %773 : vector<2x32xf32>
    %775 = math.exp %774 : vector<2x32xf32>
    %cst_281 = arith.constant 1.000000e+00 : f32
    %776 = vector.broadcast %cst_281 : f32 to vector<2x32xf32>
    %777 = arith.addf %776, %775 : vector<2x32xf32>
    %778 = arith.divf %776, %777 : vector<2x32xf32>
    %779 = vector.extract_strided_slice %766 {offsets = [0, 64], sizes = [2, 32], strides = [1, 1]} : vector<2x128xf32> to vector<2x32xf32>
    %780 = math.tanh %779 : vector<2x32xf32>
    %781 = vector.extract_strided_slice %766 {offsets = [0, 96], sizes = [2, 32], strides = [1, 1]} : vector<2x128xf32> to vector<2x32xf32>
    %782 = arith.negf %781 : vector<2x32xf32>
    %783 = math.exp %782 : vector<2x32xf32>
    %cst_282 = arith.constant 1.000000e+00 : f32
    %784 = vector.broadcast %cst_282 : f32 to vector<2x32xf32>
    %785 = arith.addf %784, %783 : vector<2x32xf32>
    %786 = arith.divf %784, %785 : vector<2x32xf32>
    %787 = arith.mulf %778, %754 : vector<2x32xf32>
    %788 = arith.mulf %772, %780 : vector<2x32xf32>
    %789 = arith.addf %787, %788 : vector<2x32xf32>
    %790 = math.tanh %789 : vector<2x32xf32>
    %791 = arith.mulf %786, %790 : vector<2x32xf32>
    %792 = arith.index_cast %c5_i32_276 : i32 to index
    %c0_283 = arith.constant 0 : index
    %c0_284 = arith.constant 0 : index
    %793 = vector.load %arg2[%792, %c0_283, %c0_284] : memref<8x2x32xf32, #tpu.memory_space<vmem>>, vector<1x2x32xf32>
    %794 = vector.shape_cast %793 : vector<1x2x32xf32> to vector<2x32xf32>
    %cst_285 = arith.constant 0.000000e+00 : f32
    %795 = vector.broadcast %cst_285 : f32 to vector<2x32xf32>
    %796 = arith.cmpf ogt, %794, %795 : vector<2x32xf32>
    %797 = arith.select %796, %791, %753 : vector<2x32xi1>, vector<2x32xf32>
    %798 = arith.select %796, %789, %754 : vector<2x32xi1>, vector<2x32xf32>
    %cst_286 = arith.constant 0.000000e+00 : f32
    %799 = vector.broadcast %cst_286 : f32 to vector<2x32xf32>
    %800 = arith.select %796, %791, %799 : vector<2x32xi1>, vector<2x32xf32>
    %801 = arith.index_cast %c5_i32_276 : i32 to index
    %c0_287 = arith.constant 0 : index
    %c0_288 = arith.constant 0 : index
    %802 = vector.load %arg9[%801, %c0_287, %c0_288] : memref<8x2x32xf32, #tpu.memory_space<vmem>>, vector<1x2x32xf32>
    %803 = vector.shape_cast %802 : vector<1x2x32xf32> to vector<2x32xf32>
    %804 = vector.shape_cast %800 : vector<2x32xf32> to vector<1x2x32xf32>
    tpu.vector_store %arg9[%801, %c0_287, %c0_288], %804 {strides = array<i32>} : memref<8x2x32xf32, #tpu.memory_space<vmem>>, vector<1x2x32xf32>,
    %c6_i32_289 = arith.constant 6 : i32
    %805 = arith.index_cast %c6_i32_289 : i32 to index
    %c0_290 = arith.constant 0 : index
    %c0_291 = arith.constant 0 : index
    %806 = vector.load %arg11[%805, %c0_290, %c0_291] : memref<8x2x128xf32, #tpu.memory_space<vmem>>, vector<1x2x128xf32>
    %807 = vector.shape_cast %806 : vector<1x2x128xf32> to vector<2x128xf32>
    %808 = arith.truncf %797 : vector<2x32xf32> to vector<2x32xbf16>
    %cst_292 = arith.constant dense<0.000000e+00> : vector<2x128xf32>
    %809 = tpu.matmul %808, %449, %cst_292 {dimension_numbers = #tpu.dot_dimension_numbers<[1], [0], [0], [1], [0, 0, 1, 1], [], []>} : vector<2x32xbf16>, vector<32x128xbf16>, vector<2x128xf32> -> vector<2x128xf32>
    %810 = arith.addf %807, %809 : vector<2x128xf32>
    %811 = vector.extract_strided_slice %810 {offsets = [0, 0], sizes = [2, 32], strides = [1, 1]} : vector<2x128xf32> to vector<2x32xf32>
    %812 = arith.negf %811 : vector<2x32xf32>
    %813 = math.exp %812 : vector<2x32xf32>
    %cst_293 = arith.constant 1.000000e+00 : f32
    %814 = vector.broadcast %cst_293 : f32 to vector<2x32xf32>
    %815 = arith.addf %814, %813 : vector<2x32xf32>
    %816 = arith.divf %814, %815 : vector<2x32xf32>
    %817 = vector.extract_strided_slice %810 {offsets = [0, 32], sizes = [2, 32], strides = [1, 1]} : vector<2x128xf32> to vector<2x32xf32>
    %818 = arith.negf %817 : vector<2x32xf32>
    %819 = math.exp %818 : vector<2x32xf32>
    %cst_294 = arith.constant 1.000000e+00 : f32
    %820 = vector.broadcast %cst_294 : f32 to vector<2x32xf32>
    %821 = arith.addf %820, %819 : vector<2x32xf32>
    %822 = arith.divf %820, %821 : vector<2x32xf32>
    %823 = vector.extract_strided_slice %810 {offsets = [0, 64], sizes = [2, 32], strides = [1, 1]} : vector<2x128xf32> to vector<2x32xf32>
    %824 = math.tanh %823 : vector<2x32xf32>
    %825 = vector.extract_strided_slice %810 {offsets = [0, 96], sizes = [2, 32], strides = [1, 1]} : vector<2x128xf32> to vector<2x32xf32>
    %826 = arith.negf %825 : vector<2x32xf32>
    %827 = math.exp %826 : vector<2x32xf32>
    %cst_295 = arith.constant 1.000000e+00 : f32
    %828 = vector.broadcast %cst_295 : f32 to vector<2x32xf32>
    %829 = arith.addf %828, %827 : vector<2x32xf32>
    %830 = arith.divf %828, %829 : vector<2x32xf32>
    %831 = arith.mulf %822, %798 : vector<2x32xf32>
    %832 = arith.mulf %816, %824 : vector<2x32xf32>
    %833 = arith.addf %831, %832 : vector<2x32xf32>
    %834 = math.tanh %833 : vector<2x32xf32>
    %835 = arith.mulf %830, %834 : vector<2x32xf32>
    %836 = arith.index_cast %c6_i32_289 : i32 to index
    %c0_296 = arith.constant 0 : index
    %c0_297 = arith.constant 0 : index
    %837 = vector.load %arg2[%836, %c0_296, %c0_297] : memref<8x2x32xf32, #tpu.memory_space<vmem>>, vector<1x2x32xf32>
    %838 = vector.shape_cast %837 : vector<1x2x32xf32> to vector<2x32xf32>
    %cst_298 = arith.constant 0.000000e+00 : f32
    %839 = vector.broadcast %cst_298 : f32 to vector<2x32xf32>
    %840 = arith.cmpf ogt, %838, %839 : vector<2x32xf32>
    %841 = arith.select %840, %835, %797 : vector<2x32xi1>, vector<2x32xf32>
    %842 = arith.select %840, %833, %798 : vector<2x32xi1>, vector<2x32xf32>
    %cst_299 = arith.constant 0.000000e+00 : f32
    %843 = vector.broadcast %cst_299 : f32 to vector<2x32xf32>
    %844 = arith.select %840, %835, %843 : vector<2x32xi1>, vector<2x32xf32>
    %845 = arith.index_cast %c6_i32_289 : i32 to index
    %c0_300 = arith.constant 0 : index
    %c0_301 = arith.constant 0 : index
    %846 = vector.load %arg9[%845, %c0_300, %c0_301] : memref<8x2x32xf32, #tpu.memory_space<vmem>>, vector<1x2x32xf32>
    %847 = vector.shape_cast %846 : vector<1x2x32xf32> to vector<2x32xf32>
    %848 = vector.shape_cast %844 : vector<2x32xf32> to vector<1x2x32xf32>
    tpu.vector_store %arg9[%845, %c0_300, %c0_301], %848 {strides = array<i32>} : memref<8x2x32xf32, #tpu.memory_space<vmem>>, vector<1x2x32xf32>,
    %c7_i32_302 = arith.constant 7 : i32
    %849 = arith.index_cast %c7_i32_302 : i32 to index
    %c0_303 = arith.constant 0 : index
    %c0_304 = arith.constant 0 : index
    %850 = vector.load %arg11[%849, %c0_303, %c0_304] : memref<8x2x128xf32, #tpu.memory_space<vmem>>, vector<1x2x128xf32>
    %851 = vector.shape_cast %850 : vector<1x2x128xf32> to vector<2x128xf32>
    %852 = arith.truncf %841 : vector<2x32xf32> to vector<2x32xbf16>
    %cst_305 = arith.constant dense<0.000000e+00> : vector<2x128xf32>
    %853 = tpu.matmul %852, %449, %cst_305 {dimension_numbers = #tpu.dot_dimension_numbers<[1], [0], [0], [1], [0, 0, 1, 1], [], []>} : vector<2x32xbf16>, vector<32x128xbf16>, vector<2x128xf32> -> vector<2x128xf32>
    %854 = arith.addf %851, %853 : vector<2x128xf32>
    %855 = vector.extract_strided_slice %854 {offsets = [0, 0], sizes = [2, 32], strides = [1, 1]} : vector<2x128xf32> to vector<2x32xf32>
    %856 = arith.negf %855 : vector<2x32xf32>
    %857 = math.exp %856 : vector<2x32xf32>
    %cst_306 = arith.constant 1.000000e+00 : f32
    %858 = vector.broadcast %cst_306 : f32 to vector<2x32xf32>
    %859 = arith.addf %858, %857 : vector<2x32xf32>
    %860 = arith.divf %858, %859 : vector<2x32xf32>
    %861 = vector.extract_strided_slice %854 {offsets = [0, 32], sizes = [2, 32], strides = [1, 1]} : vector<2x128xf32> to vector<2x32xf32>
    %862 = arith.negf %861 : vector<2x32xf32>
    %863 = math.exp %862 : vector<2x32xf32>
    %cst_307 = arith.constant 1.000000e+00 : f32
    %864 = vector.broadcast %cst_307 : f32 to vector<2x32xf32>
    %865 = arith.addf %864, %863 : vector<2x32xf32>
    %866 = arith.divf %864, %865 : vector<2x32xf32>
    %867 = vector.extract_strided_slice %854 {offsets = [0, 64], sizes = [2, 32], strides = [1, 1]} : vector<2x128xf32> to vector<2x32xf32>
    %868 = math.tanh %867 : vector<2x32xf32>
    %869 = vector.extract_strided_slice %854 {offsets = [0, 96], sizes = [2, 32], strides = [1, 1]} : vector<2x128xf32> to vector<2x32xf32>
    %870 = arith.negf %869 : vector<2x32xf32>
    %871 = math.exp %870 : vector<2x32xf32>
    %cst_308 = arith.constant 1.000000e+00 : f32
    %872 = vector.broadcast %cst_308 : f32 to vector<2x32xf32>
    %873 = arith.addf %872, %871 : vector<2x32xf32>
    %874 = arith.divf %872, %873 : vector<2x32xf32>
    %875 = arith.mulf %866, %842 : vector<2x32xf32>
    %876 = arith.mulf %860, %868 : vector<2x32xf32>
    %877 = arith.addf %875, %876 : vector<2x32xf32>
    %878 = math.tanh %877 : vector<2x32xf32>
    %879 = arith.mulf %874, %878 : vector<2x32xf32>
    %880 = arith.index_cast %c7_i32_302 : i32 to index
    %c0_309 = arith.constant 0 : index
    %c0_310 = arith.constant 0 : index
    %881 = vector.load %arg2[%880, %c0_309, %c0_310] : memref<8x2x32xf32, #tpu.memory_space<vmem>>, vector<1x2x32xf32>
    %882 = vector.shape_cast %881 : vector<1x2x32xf32> to vector<2x32xf32>
    %cst_311 = arith.constant 0.000000e+00 : f32
    %883 = vector.broadcast %cst_311 : f32 to vector<2x32xf32>
    %884 = arith.cmpf ogt, %882, %883 : vector<2x32xf32>
    %885 = arith.select %884, %879, %841 : vector<2x32xi1>, vector<2x32xf32>
    %886 = arith.select %884, %877, %842 : vector<2x32xi1>, vector<2x32xf32>
    %cst_312 = arith.constant 0.000000e+00 : f32
    %887 = vector.broadcast %cst_312 : f32 to vector<2x32xf32>
    %888 = arith.select %884, %879, %887 : vector<2x32xi1>, vector<2x32xf32>
    %889 = arith.index_cast %c7_i32_302 : i32 to index
    %c0_313 = arith.constant 0 : index
    %c0_314 = arith.constant 0 : index
    %890 = vector.load %arg9[%889, %c0_313, %c0_314] : memref<8x2x32xf32, #tpu.memory_space<vmem>>, vector<1x2x32xf32>
    %891 = vector.shape_cast %890 : vector<1x2x32xf32> to vector<2x32xf32>
    %892 = vector.shape_cast %888 : vector<2x32xf32> to vector<1x2x32xf32>
    tpu.vector_store %arg9[%889, %c0_313, %c0_314], %892 {strides = array<i32>} : memref<8x2x32xf32, #tpu.memory_space<vmem>>, vector<1x2x32xf32>,
    %c8_i32_315 = arith.constant 8 : i32
    %c1 = arith.constant 1 : index
    %c0_316 = arith.constant 0 : index
    %c0_317 = arith.constant 0 : index
    %893 = vector.load %arg10[%c1, %c0_316, %c0_317] : memref<2x2x32xf32, #tpu.memory_space<vmem>>, vector<1x2x32xf32>
    %894 = vector.shape_cast %893 : vector<1x2x32xf32> to vector<2x32xf32>
    %895 = vector.shape_cast %885 : vector<2x32xf32> to vector<1x2x32xf32>
    tpu.vector_store %arg10[%c1, %c0_316, %c0_317], %895 {strides = array<i32>} : memref<2x2x32xf32, #tpu.memory_space<vmem>>, vector<1x2x32xf32>,
    return
  }
  func.func @transform_0(%arg0: i32) -> (i32, i32, i32) {
    %c0_i32 = arith.constant 0 : i32
    %c0_i32_0 = arith.constant 0 : i32
    %c0_i32_1 = arith.constant 0 : i32
    %c0_i32_2 = arith.constant 0 : i32
    return %c0_i32, %c0_i32_0, %c0_i32_1 : i32, i32, i32
  }
  func.func @transform_1(%arg0: i32) -> (i32, i32, i32) {
    %c0_i32 = arith.constant 0 : i32
    %c0_i32_0 = arith.constant 0 : i32
    %c0_i32_1 = arith.constant 0 : i32
    %c0_i32_2 = arith.constant 0 : i32
    return %c0_i32, %c0_i32_0, %c0_i32_1 : i32, i32, i32
  }
  func.func @transform_2(%arg0: i32) -> (i32, i32) {
    %c0_i32 = arith.constant 0 : i32
    %c0_i32_0 = arith.constant 0 : i32
    %c0_i32_1 = arith.constant 0 : i32
    return %c0_i32, %c0_i32_0 : i32, i32
  }
  func.func @transform_3(%arg0: i32) -> (i32, i32) {
    %c0_i32 = arith.constant 0 : i32
    %c0_i32_0 = arith.constant 0 : i32
    %c0_i32_1 = arith.constant 0 : i32
    return %c0_i32, %c0_i32_0 : i32, i32
  }
  func.func @transform_4(%arg0: i32) -> (i32, i32) {
    %c0_i32 = arith.constant 0 : i32
    %c0_i32_0 = arith.constant 0 : i32
    %c0_i32_1 = arith.constant 0 : i32
    return %c0_i32, %c0_i32_0 : i32, i32
  }
  func.func @transform_5(%arg0: i32) -> (i32, i32) {
    %c0_i32 = arith.constant 0 : i32
    %c0_i32_0 = arith.constant 0 : i32
    %c0_i32_1 = arith.constant 0 : i32
    return %c0_i32, %c0_i32_0 : i32, i32
  }
  func.func @transform_6(%arg0: i32) -> (i32, i32) {
    %c0_i32 = arith.constant 0 : i32
    %c0_i32_0 = arith.constant 0 : i32
    %c0_i32_1 = arith.constant 0 : i32
    return %c0_i32, %c0_i32_0 : i32, i32
  }
  func.func @transform_7(%arg0: i32) -> (i32, i32) {
    %c0_i32 = arith.constant 0 : i32
    %c0_i32_0 = arith.constant 0 : i32
    %c0_i32_1 = arith.constant 0 : i32
    return %c0_i32, %c0_i32_0 : i32, i32
  }
  func.func @transform_8(%arg0: i32) -> (i32, i32, i32) {
    %c0_i32 = arith.constant 0 : i32
    %c0_i32_0 = arith.constant 0 : i32
    %c0_i32_1 = arith.constant 0 : i32
    %c0_i32_2 = arith.constant 0 : i32
    return %c0_i32, %c0_i32_0, %c0_i32_1 : i32, i32, i32
  }
  func.func @transform_9(%arg0: i32) -> (i32, i32, i32) {
    %c0_i32 = arith.constant 0 : i32
    %c0_i32_0 = arith.constant 0 : i32
    %c0_i32_1 = arith.constant 0 : i32
    %c0_i32_2 = arith.constant 0 : i32
    return %c0_i32, %c0_i32_0, %c0_i32_1 : i32, i32, i32
  }
}

</mosaic_0001>

<llo_original>
// kernel: _lstm_forward.1
$region0: #{_lstm_forward.1}
  #allocation0 [shape = 'u32[]', space=smem, size = 0x4, offset = 0x4, fixed_abs, tag = 'smem constant byte address 0x4 - core index']
  #allocation1 [shape = 'u32[72,128]{1,0:T(1,128)}', space=vmem, size = 0x9000, scoped, tag = 'internal scratch']
  #allocation2 [shape = 'f32[8,2,128]{2,1,0:T(2,128)}', space=vmem, size = 0x2000, scoped, tag = 'scratch operand']
  #allocation3 [shape = 'f32[8,2,32]{2,1,0:T(2,128)}', space=vmem, size = 0x2000, scoped, tag = 'scratch operand']
  %s0 = inlined_call_operand.vmem [shape: f32[8,2,16], index: 0, kind: input, shape index: {}]
  %s1 = inlined_call_operand.vmem [shape: f32[8,2,32], index: 1, kind: input, shape index: {}]
  %s2 = inlined_call_operand.hbm [shape: bf16[16,128], index: 2, kind: input, shape index: {}]
  %s3 = inlined_call_operand.vmem [shape: bf16[32,128], index: 3, kind: input, shape index: {}]
  %s4 = inlined_call_operand.vmem [shape: f32[1,128], index: 4, kind: input, shape index: {}]
  %s5 = inlined_call_operand.hbm [shape: bf16[32,128], index: 5, kind: input, shape index: {}]
  %s6 = inlined_call_operand.hbm [shape: bf16[32,128], index: 6, kind: input, shape index: {}]
  %s7 = inlined_call_operand.vmem [shape: f32[1,128], index: 7, kind: input, shape index: {}]
  %s8 = inlined_call_operand.hbm [shape: f32[8,2,32], index: 8, kind: output, shape index: {0}]
  %s9 = inlined_call_operand.hbm [shape: f32[2,2,32], index: 9, kind: output, shape index: {1}]
  %10 = xla_tuple %s8, %s9
  %s11 = sld [smem:[#allocation0]]
  $region62: #{_lstm_forward.1} parent=0
    _
  %s13 = ssub.s32 1, %s11
  %s14 = scalar_select 0, %s13, %s11
  $region1: #{_lstm_forward.1} parent=0
    #allocation4 [shape = 'u8[4096]{0}', space=vmem, size = 0x1000, scoped, tag = 'input window, operand 2, single buffered']
    #allocation5 [shape = 's32[1]{0}', space=sflag, size = 0x4, scoped, tag = 'scoped memory for _lstm_forward.1']
    #allocation6 [shape = 's32[1]{0}', space=sflag, size = 0x4, scoped, tag = 'scoped memory for _lstm_forward.1']
    #allocation7 [shape = 'u8[8192]{0}', space=vmem, size = 0x2000, scoped, tag = 'input window, operand 5, single buffered']
    #allocation8 [shape = 's32[1]{0}', space=sflag, size = 0x4, scoped, tag = 'scoped memory for _lstm_forward.1']
    #allocation9 [shape = 'u8[8192]{0}', space=vmem, size = 0x2000, scoped, tag = 'input window, operand 6, single buffered']
    #allocation10 [shape = 'u8[8192]{0}', space=vmem, size = 0x2000, scoped, tag = 'output window, operand 0, single buffered']
    #allocation11 [shape = 'u8[2048]{0}', space=vmem, size = 0x800, scoped, tag = 'output window, operand 1, single buffered']
    #allocation12 [shape = 's32[1]{0}', space=sflag, size = 0x4, scoped, tag = 'scoped memory for _lstm_forward.1']
    %15 = vsyncpa [#allocation5], 0
    %16 = vsyncpa [#allocation8], 0
    %17 = vsyncpa [#allocation6], 0
    %18 = vsyncpa [#allocation12], 0
    // Predicated region
    $region2: #{_lstm_forward.1} parent=1 // pred_check
      _
    $region3: #{_lstm_forward.1} parent=1 // pred_check_branch
      %20 = sbr.rel (0) target = $region5
    $region4: #{_lstm_forward.1} parent=1 // pred_region
      _
    $region5: #{_lstm_forward.1} parent=1 // pred_fallthru
      _
    // Predicated region
    $region6: #{_lstm_forward.1} parent=1 // pred_check
      _
    $region7: #{_lstm_forward.1} parent=1 // pred_check_branch
      %22 = sbr.rel (0) target = $region9
    $region8: #{_lstm_forward.1} parent=1 // pred_region
      _
    $region9: #{_lstm_forward.1} parent=1 // pred_fallthru
      _
    // Predicated region
    $region10: #{_lstm_forward.1} parent=1 // pred_check
      _
    $region11: #{_lstm_forward.1} parent=1 // pred_check_branch
      %24 = sbr.rel (0) target = $region13
    $region12: #{_lstm_forward.1} parent=1 // pred_region
      %26 = vsyncadd [#allocation5], 0
      %s27 = sshll.u32 %s2, 4
      %s28 = int_to_ptr.hbm [resolvable:$true] %s27
      %s29 = sshll.u32 [#allocation4], 4
      %s30 = int_to_ptr.vmem [resolvable:$true] %s29
      %35 = dma.hbm_to_vmem [thread:$0]  %s28, 128, %s30, [#allocation5], 64, 64, 4
    $region13: #{_lstm_forward.1} parent=1 // pred_fallthru
      _
    // Predicated region
    $region14: #{_lstm_forward.1} parent=1 // pred_check
      _
    $region15: #{_lstm_forward.1} parent=1 // pred_check_branch
      %37 = sbr.rel (0) target = $region17
    $region16: #{_lstm_forward.1} parent=1 // pred_region
      _
    $region17: #{_lstm_forward.1} parent=1 // pred_fallthru
      _
    // Predicated region
    $region18: #{_lstm_forward.1} parent=1 // pred_check
      _
    $region19: #{_lstm_forward.1} parent=1 // pred_check_branch
      %39 = sbr.rel (0) target = $region21
    $region20: #{_lstm_forward.1} parent=1 // pred_region
      _
    $region21: #{_lstm_forward.1} parent=1 // pred_fallthru
      _
    // Predicated region
    $region22: #{_lstm_forward.1} parent=1 // pred_check
      _
    $region23: #{_lstm_forward.1} parent=1 // pred_check_branch
      %41 = sbr.rel (0) target = $region25
    $region24: #{_lstm_forward.1} parent=1 // pred_region
      %43 = vsyncadd [#allocation8], 0
      %s44 = sshll.u32 %s5, 4
      %s45 = int_to_ptr.hbm [resolvable:$true] %s44
      %s46 = sshll.u32 [#allocation7], 4
      %s47 = int_to_ptr.vmem [resolvable:$true] %s46
      %52 = dma.hbm_to_vmem [thread:$0]  %s45, 256, %s47, [#allocation8], 64, 64, 4
    $region25: #{_lstm_forward.1} parent=1 // pred_fallthru
      _
    // Predicated region
    $region26: #{_lstm_forward.1} parent=1 // pred_check
      _
    $region27: #{_lstm_forward.1} parent=1 // pred_check_branch
      %54 = sbr.rel (0) target = $region29
    $region28: #{_lstm_forward.1} parent=1 // pred_region
      %56 = vsyncadd [#allocation8], 0
      %s57 = sshll.u32 %s6, 4
      %s58 = int_to_ptr.hbm [resolvable:$true] %s57
      %s59 = sshll.u32 [#allocation9], 4
      %s60 = int_to_ptr.vmem [resolvable:$true] %s59
      %65 = dma.hbm_to_vmem [thread:$0]  %s58, 256, %s60, [#allocation8], 64, 64, 4
    $region29: #{_lstm_forward.1} parent=1 // pred_fallthru
      _
    // Predicated region
    $region30: #{_lstm_forward.1} parent=1 // pred_check
      _
    $region31: #{_lstm_forward.1} parent=1 // pred_check_branch
      %67 = sbr.rel (0) target = $region33
    $region32: #{_lstm_forward.1} parent=1 // pred_region
      _
    $region33: #{_lstm_forward.1} parent=1 // pred_fallthru
      _
    // Predicated region
    $region34: #{_lstm_forward.1} parent=1 // pred_check
      _
    $region35: #{_lstm_forward.1} parent=1 // pred_check_branch
      %69 = sbr.rel (0) target = $region37
    $region36: #{_lstm_forward.1} parent=1 // pred_region
      %71 = dma.done [#allocation5], 128
    $region37: #{_lstm_forward.1} parent=1 // pred_fallthru
      _
    // Predicated region
    $region38: #{_lstm_forward.1} parent=1 // pred_check
      _
    $region39: #{_lstm_forward.1} parent=1 // pred_check_branch
      %73 = sbr.rel (0) target = $region41
    $region40: #{_lstm_forward.1} parent=1 // pred_region
      %75 = dma.done [#allocation8], 256
    $region41: #{_lstm_forward.1} parent=1 // pred_fallthru
      _
    // Predicated region
    $region42: #{_lstm_forward.1} parent=1 // pred_check
      _
    $region43: #{_lstm_forward.1} parent=1 // pred_check_branch
      %77 = sbr.rel (0) target = $region45
    $region44: #{_lstm_forward.1} parent=1 // pred_region
      %79 = dma.done [#allocation8], 256
    $region45: #{_lstm_forward.1} parent=1 // pred_fallthru
      _
    %v81 = vld [vmem:[#allocation4] sm:$0xf]
    %v82 = vld [vmem:[#allocation4 + $0x4] sm:$0xf]
    %v83 = vld [vmem:[%s3] sm:$0xf]
    %v84 = vld [vmem:[%s3 + $0x4] sm:$0xf]
    %v85 = vld [vmem:[%s3 + $0x8] sm:$0xf]
    %v86 = vld [vmem:[%s3 + $0xc] sm:$0xf]
    %v87 = vld [vmem:[%s4] sm:$0x1]
    %v88 = vld [vmem:[%s0] sm:$0x3]
    %v89 = vpack.c.bf16 %v88, %v88
    %v91 = vperm.slane %v87, 0
    %v95 = vunpack.c.l.b16 %v81
    %v96 = vunpack.c.l.b16 %v82
    %v97 = vpack.c.b16 %v96, %v95
    %vm99 = vcmask 130048
    %v101 = vsel %vm99, %v89, 0
    %103 = vmatpush.bf16.msra.mxu0 0
    %104 = vmatpush.bf16.msra.mxu0 0
    %105 = vmatpush.bf16.msra.mxu0 0
    %106 = vmatpush.bf16.msra.mxu0 0
    %107 = vmatpush.bf16.msra.mxu0 0
    %108 = vmatpush.bf16.msra.mxu0 0
    %109 = vmatpush.bf16.msra.mxu0 0
    %110 = vmatpush.bf16.msra.mxu0 %v97
    %111 = vmatmul.bf16.gmra.mxu0 %v101
    %v112 = vpop.f32.mrf.mxu0
    %v113 = vadd.f32 %v91, %v112
    %v114 = vpop.f32.mrf.mxu0
    %115 = vdwg.mxu0
    %116 = vst [vmem:[#allocation2] sm:$0x3] %v113
    %s117 = scalar_lea.vmem %s0, 2
    %v118 = vld [vmem:[%s117] sm:$0x3]
    %v119 = vpack.c.bf16 %v118, %v118
    %v121 = vsel %vm99, %v119, 0
    %123 = vmatpush.bf16.msra.mxu0 0
    %124 = vmatpush.bf16.msra.mxu0 0
    %125 = vmatpush.bf16.msra.mxu0 0
    %126 = vmatpush.bf16.msra.mxu0 0
    %127 = vmatpush.bf16.msra.mxu0 0
    %128 = vmatpush.bf16.msra.mxu0 0
    %129 = vmatpush.bf16.msra.mxu0 0
    %130 = vmatpush.bf16.msra.mxu0 %v97
    %131 = vmatmul.bf16.gmra.mxu0 %v121
    %v132 = vpop.f32.mrf.mxu0
    %v133 = vadd.f32 %v91, %v132
    %v134 = vpop.f32.mrf.mxu0
    %135 = vdwg.mxu0
    %s136 = scalar_lea.vmem [#allocation2], 2
    %137 = vst [vmem:[%s136] sm:$0x3] %v133
    %s138 = scalar_lea.vmem %s0, 4
    %v139 = vld [vmem:[%s138] sm:$0x3]
    %v140 = vpack.c.bf16 %v139, %v139
    %v142 = vsel %vm99, %v140, 0
    %144 = vmatpush.bf16.msra.mxu0 0
    %145 = vmatpush.bf16.msra.mxu0 0
    %146 = vmatpush.bf16.msra.mxu0 0
    %147 = vmatpush.bf16.msra.mxu0 0
    %148 = vmatpush.bf16.msra.mxu0 0
    %149 = vmatpush.bf16.msra.mxu0 0
    %150 = vmatpush.bf16.msra.mxu0 0
    %151 = vmatpush.bf16.msra.mxu0 %v97
    %152 = vmatmul.bf16.gmra.mxu0 %v142
    %v153 = vpop.f32.mrf.mxu0
    %v154 = vadd.f32 %v91, %v153
    %v155 = vpop.f32.mrf.mxu0
    %156 = vdwg.mxu0
    %s157 = scalar_lea.vmem [#allocation2], 4
    %158 = vst [vmem:[%s157] sm:$0x3] %v154
    %s159 = scalar_lea.vmem %s0, 6
    %v160 = vld [vmem:[%s159] sm:$0x3]
    %v161 = vpack.c.bf16 %v160, %v160
    %v163 = vsel %vm99, %v161, 0
    %165 = vmatpush.bf16.msra.mxu0 0
    %166 = vmatpush.bf16.msra.mxu0 0
    %167 = vmatpush.bf16.msra.mxu0 0
    %168 = vmatpush.bf16.msra.mxu0 0
    %169 = vmatpush.bf16.msra.mxu0 0
    %170 = vmatpush.bf16.msra.mxu0 0
    %171 = vmatpush.bf16.msra.mxu0 0
    %172 = vmatpush.bf16.msra.mxu0 %v97
    %173 = vmatmul.bf16.gmra.mxu0 %v163
    %v174 = vpop.f32.mrf.mxu0
    %v175 = vadd.f32 %v91, %v174
    %v176 = vpop.f32.mrf.mxu0
    %177 = vdwg.mxu0
    %s178 = scalar_lea.vmem [#allocation2], 6
    %179 = vst [vmem:[%s178] sm:$0x3] %v175
    %s180 = scalar_lea.vmem %s0, 8
    %v181 = vld [vmem:[%s180] sm:$0x3]
    %v182 = vpack.c.bf16 %v181, %v181
    %v184 = vsel %vm99, %v182, 0
    %186 = vmatpush.bf16.msra.mxu0 0
    %187 = vmatpush.bf16.msra.mxu0 0
    %188 = vmatpush.bf16.msra.mxu0 0
    %189 = vmatpush.bf16.msra.mxu0 0
    %190 = vmatpush.bf16.msra.mxu0 0
    %191 = vmatpush.bf16.msra.mxu0 0
    %192 = vmatpush.bf16.msra.mxu0 0
    %193 = vmatpush.bf16.msra.mxu0 %v97
    %194 = vmatmul.bf16.gmra.mxu0 %v184
    %v195 = vpop.f32.mrf.mxu0
    %v196 = vadd.f32 %v91, %v195
    %v197 = vpop.f32.mrf.mxu0
    %198 = vdwg.mxu0
    %s199 = scalar_lea.vmem [#allocation2], 8
    %200 = vst [vmem:[%s199] sm:$0x3] %v196
    %s201 = scalar_lea.vmem %s0, 10
    %v202 = vld [vmem:[%s201] sm:$0x3]
    %v203 = vpack.c.bf16 %v202, %v202
    %v205 = vsel %vm99, %v203, 0
    %207 = vmatpush.bf16.msra.mxu0 0
    %208 = vmatpush.bf16.msra.mxu0 0
    %209 = vmatpush.bf16.msra.mxu0 0
    %210 = vmatpush.bf16.msra.mxu0 0
    %211 = vmatpush.bf16.msra.mxu0 0
    %212 = vmatpush.bf16.msra.mxu0 0
    %213 = vmatpush.bf16.msra.mxu0 0
    %214 = vmatpush.bf16.msra.mxu0 %v97
    %215 = vmatmul.bf16.gmra.mxu0 %v205
    %v216 = vpop.f32.mrf.mxu0
    %v217 = vadd.f32 %v91, %v216
    %v218 = vpop.f32.mrf.mxu0
    %219 = vdwg.mxu0
    %s220 = scalar_lea.vmem [#allocation2], 10
    %221 = vst [vmem:[%s220] sm:$0x3] %v217
    %s222 = scalar_lea.vmem %s0, 12
    %v223 = vld [vmem:[%s222] sm:$0x3]
    %v224 = vpack.c.bf16 %v223, %v223
    %v226 = vsel %vm99, %v224, 0
    %228 = vmatpush.bf16.msra.mxu0 0
    %229 = vmatpush.bf16.msra.mxu0 0
    %230 = vmatpush.bf16.msra.mxu0 0
    %231 = vmatpush.bf16.msra.mxu0 0
    %232 = vmatpush.bf16.msra.mxu0 0
    %233 = vmatpush.bf16.msra.mxu0 0
    %234 = vmatpush.bf16.msra.mxu0 0
    %235 = vmatpush.bf16.msra.mxu0 %v97
    %236 = vmatmul.bf16.gmra.mxu0 %v226
    %v237 = vpop.f32.mrf.mxu0
    %v238 = vadd.f32 %v91, %v237
    %v239 = vpop.f32.mrf.mxu0
    %240 = vdwg.mxu0
    %s241 = scalar_lea.vmem [#allocation2], 12
    %242 = vst [vmem:[%s241] sm:$0x3] %v238
    %s243 = scalar_lea.vmem %s0, 14
    %v244 = vld [vmem:[%s243] sm:$0x3]
    %v245 = vpack.c.bf16 %v244, %v244
    %v247 = vsel %vm99, %v245, 0
    %249 = vmatpush.bf16.msra.mxu0 0
    %250 = vmatpush.bf16.msra.mxu0 0
    %251 = vmatpush.bf16.msra.mxu0 0
    %252 = vmatpush.bf16.msra.mxu0 0
    %253 = vmatpush.bf16.msra.mxu0 0
    %254 = vmatpush.bf16.msra.mxu0 0
    %255 = vmatpush.bf16.msra.mxu0 0
    %256 = vmatpush.bf16.msra.mxu0 %v97
    %257 = vmatmul.bf16.gmra.mxu0 %v247
    %v258 = vpop.f32.mrf.mxu0
    %v259 = vadd.f32 %v91, %v258
    %v260 = vpop.f32.mrf.mxu0
    %261 = vdwg.mxu0
    %s262 = scalar_lea.vmem [#allocation2], 14
    %263 = vst [vmem:[%s262] sm:$0x3] %v259
    %v264 = vld [vmem:[#allocation2] sm:$0x3]
    %v269 = vunpack.c.l.b16 %v83
    %v270 = vunpack.c.l.b16 %v84
    %v271 = vunpack.c.l.b16 %v85
    %v272 = vunpack.c.l.b16 %v86
    %v273 = vpack.c.b16 %v270, %v269
    %v274 = vpack.c.b16 %v272, %v271
    %vm277 = vcmask 261120
    %v279 = vsel %vm277, 0, 0
    %281 = vmatpush.bf16.msra.mxu0 0
    %282 = vmatpush.bf16.msra.mxu0 0
    %283 = vmatpush.bf16.msra.mxu0 0
    %284 = vmatpush.bf16.msra.mxu0 0
    %285 = vmatpush.bf16.msra.mxu0 0
    %286 = vmatpush.bf16.msra.mxu0 0
    %287 = vmatpush.bf16.msra.mxu0 %v274
    %288 = vmatpush.bf16.msra.mxu0 %v273
    %289 = vmatmul.bf16.gmra.mxu0 %v279
    %v290 = vpop.f32.mrf.mxu0
    %v291 = vadd.f32 0.0, %v290
    %v292 = vpop.f32.mrf.mxu0
    %293 = vdwg.mxu0
    %v294 = vadd.f32 %v264, %v291
    %v295 = vxor.u32 %v294, 2147483648
    %v296 = vmul.f32 %v295, 1.442695
    %v297 = vpow.pop %v296
    %v298 = vadd.f32 %v297, 1.0
    %v299 = vrcp.pop %v298
    %v300 = vmul.f32 %v298, %v299
    %v301 = vsub.f32 1.0, %v300
    %v302 = vmul.f32 %v299, %v301
    %v303 = vadd.f32 %v299, %v302
    %vm304 = vweird.f32 %v298
    %vm305 = vweird.f32 %v299
    %vm306 = vmor %vm304, %vm305
    %v307 = vsel %vm306, %v299, %v303
    %v308 = vand.u32 2147483647, %v298
    %vm309 = vcmp.eq.f32.partialorder %v308, 8.507059e+37
    %v310 = vand.u32 %v298, 2147483648
    %v311 = vor.u32 1.1754944e-38, %v310
    %v312 = vsel %vm309, %v311, %v307
    %v313 = vmul.f32 1.0, %v312
    %v314 = vtanh.pop %v294
    %v315 = vmul.f32 %v313, 0.0
    %317 = vrot.lane.b32.xlu0 %v314, 64
    %v318 = vpop.permute.xlu0 %317
    %v320 = vmul.f32 %v313, %v318
    %322 = vrot.lane.b32.xlu0 %v320, 32
    %v323 = vpop.permute.xlu0 %322
    %v325 = vadd.f32 %v315, %v323
    %v326 = vtanh.pop %v325
    %328 = vrot.lane.b32.xlu0 %v326, 64
    %v329 = vpop.permute.xlu0 %328
    %v331 = vmul.f32 %v313, %v329
    %v332 = vld [vmem:[%s1] sm:$0x3]
    %vm333 = vcmp.gt.f32.partialorder %v332, 0.0
    %335 = vrot.lane.b32.xlu0 %v331, 32
    %v336 = vpop.permute.xlu0 %335
    %v338 = vsel %vm333, %v336, 0.0
    %340 = vrot.lane.b32.xlu0 %v325, 96
    %v341 = vpop.permute.xlu0 %340
    %v343 = vsel %vm333, %v341, 0.0
    %vm344 = vcmask 254976
    %345 = vst.msk [vmem:[#allocation3] sm:$0x3] %vm344, %v338
    %v346 = vld [vmem:[%s136] sm:$0x3]
    %v347 = vpack.c.bf16 %v338, %v338
    %v349 = vsel %vm277, %v347, 0
    %351 = vmatpush.bf16.msra.mxu0 0
    %352 = vmatpush.bf16.msra.mxu0 0
    %353 = vmatpush.bf16.msra.mxu0 0
    %354 = vmatpush.bf16.msra.mxu0 0
    %355 = vmatpush.bf16.msra.mxu0 0
    %356 = vmatpush.bf16.msra.mxu0 0
    %357 = vmatpush.bf16.msra.mxu0 %v274
    %358 = vmatpush.bf16.msra.mxu0 %v273
    %359 = vmatmul.bf16.gmra.mxu0 %v349
    %v360 = vpop.f32.mrf.mxu0
    %v361 = vadd.f32 0.0, %v360
    %v362 = vpop.f32.mrf.mxu0
    %363 = vdwg.mxu0
    %v364 = vadd.f32 %v346, %v361
    %v365 = vxor.u32 %v364, 2147483648
    %v366 = vmul.f32 %v365, 1.442695
    %v367 = vpow.pop %v366
    %v368 = vadd.f32 %v367, 1.0
    %v369 = vrcp.pop %v368
    %v370 = vmul.f32 %v368, %v369
    %v371 = vsub.f32 1.0, %v370
    %v372 = vmul.f32 %v369, %v371
    %v373 = vadd.f32 %v369, %v372
    %vm374 = vweird.f32 %v368
    %vm375 = vweird.f32 %v369
    %vm376 = vmor %vm374, %vm375
    %v377 = vsel %vm376, %v369, %v373
    %v378 = vand.u32 2147483647, %v368
    %vm379 = vcmp.eq.f32.partialorder %v378, 8.507059e+37
    %v380 = vand.u32 %v368, 2147483648
    %v381 = vor.u32 1.1754944e-38, %v380
    %v382 = vsel %vm379, %v381, %v377
    %v383 = vmul.f32 1.0, %v382
    %v384 = vtanh.pop %v364
    %386 = vrot.lane.b32.xlu0 %v343, 32
    %v387 = vpop.permute.xlu0 %386
    %v389 = vmul.f32 %v383, %v387
    %391 = vrot.lane.b32.xlu0 %v384, 64
    %v392 = vpop.permute.xlu0 %391
    %v394 = vmul.f32 %v383, %v392
    %396 = vrot.lane.b32.xlu0 %v394, 32
    %v397 = vpop.permute.xlu0 %396
    %v399 = vadd.f32 %v389, %v397
    %v400 = vtanh.pop %v399
    %402 = vrot.lane.b32.xlu0 %v400, 64
    %v403 = vpop.permute.xlu0 %402
    %v405 = vmul.f32 %v383, %v403
    %s406 = scalar_lea.vmem %s1, 2
    %v407 = vld [vmem:[%s406] sm:$0x3]
    %vm408 = vcmp.gt.f32.partialorder %v407, 0.0
    %410 = vrot.lane.b32.xlu0 %v405, 32
    %v411 = vpop.permute.xlu0 %410
    %v413 = vsel %vm408, %v411, %v338
    %415 = vrot.lane.b32.xlu0 %v399, 96
    %v416 = vpop.permute.xlu0 %415
    %v418 = vsel %vm408, %v416, %v343
    %v419 = vsel %vm408, %v411, 0.0
    %s420 = scalar_lea.vmem [#allocation3], 2
    %421 = vst.msk [vmem:[%s420] sm:$0x3] %vm344, %v419
    %v422 = vld [vmem:[%s157] sm:$0x3]
    %v423 = vpack.c.bf16 %v413, %v413
    %v425 = vsel %vm277, %v423, 0
    %427 = vmatpush.bf16.msra.mxu0 0
    %428 = vmatpush.bf16.msra.mxu0 0
    %429 = vmatpush.bf16.msra.mxu0 0
    %430 = vmatpush.bf16.msra.mxu0 0
    %431 = vmatpush.bf16.msra.mxu0 0
    %432 = vmatpush.bf16.msra.mxu0 0
    %433 = vmatpush.bf16.msra.mxu0 %v274
    %434 = vmatpush.bf16.msra.mxu0 %v273
    %435 = vmatmul.bf16.gmra.mxu0 %v425
    %v436 = vpop.f32.mrf.mxu0
    %v437 = vadd.f32 0.0, %v436
    %v438 = vpop.f32.mrf.mxu0
    %439 = vdwg.mxu0
    %v440 = vadd.f32 %v422, %v437
    %v441 = vxor.u32 %v440, 2147483648
    %v442 = vmul.f32 %v441, 1.442695
    %v443 = vpow.pop %v442
    %v444 = vadd.f32 %v443, 1.0
    %v445 = vrcp.pop %v444
    %v446 = vmul.f32 %v444, %v445
    %v447 = vsub.f32 1.0, %v446
    %v448 = vmul.f32 %v445, %v447
    %v449 = vadd.f32 %v445, %v448
    %vm450 = vweird.f32 %v444
    %vm451 = vweird.f32 %v445
    %vm452 = vmor %vm450, %vm451
    %v453 = vsel %vm452, %v445, %v449
    %v454 = vand.u32 2147483647, %v444
    %vm455 = vcmp.eq.f32.partialorder %v454, 8.507059e+37
    %v456 = vand.u32 %v444, 2147483648
    %v457 = vor.u32 1.1754944e-38, %v456
    %v458 = vsel %vm455, %v457, %v453
    %v459 = vmul.f32 1.0, %v458
    %v460 = vtanh.pop %v440
    %462 = vrot.lane.b32.xlu0 %v418, 32
    %v463 = vpop.permute.xlu0 %462
    %v465 = vmul.f32 %v459, %v463
    %467 = vrot.lane.b32.xlu0 %v460, 64
    %v468 = vpop.permute.xlu0 %467
    %v470 = vmul.f32 %v459, %v468
    %472 = vrot.lane.b32.xlu0 %v470, 32
    %v473 = vpop.permute.xlu0 %472
    %v475 = vadd.f32 %v465, %v473
    %v476 = vtanh.pop %v475
    %478 = vrot.lane.b32.xlu0 %v476, 64
    %v479 = vpop.permute.xlu0 %478
    %v481 = vmul.f32 %v459, %v479
    %s482 = scalar_lea.vmem %s1, 4
    %v483 = vld [vmem:[%s482] sm:$0x3]
    %vm484 = vcmp.gt.f32.partialorder %v483, 0.0
    %486 = vrot.lane.b32.xlu0 %v481, 32
    %v487 = vpop.permute.xlu0 %486
    %v489 = vsel %vm484, %v487, %v413
    %491 = vrot.lane.b32.xlu0 %v475, 96
    %v492 = vpop.permute.xlu0 %491
    %v494 = vsel %vm484, %v492, %v418
    %v495 = vsel %vm484, %v487, 0.0
    %s496 = scalar_lea.vmem [#allocation3], 4
    %497 = vst.msk [vmem:[%s496] sm:$0x3] %vm344, %v495
    %v498 = vld [vmem:[%s178] sm:$0x3]
    %v499 = vpack.c.bf16 %v489, %v489
    %v501 = vsel %vm277, %v499, 0
    %503 = vmatpush.bf16.msra.mxu0 0
    %504 = vmatpush.bf16.msra.mxu0 0
    %505 = vmatpush.bf16.msra.mxu0 0
    %506 = vmatpush.bf16.msra.mxu0 0
    %507 = vmatpush.bf16.msra.mxu0 0
    %508 = vmatpush.bf16.msra.mxu0 0
    %509 = vmatpush.bf16.msra.mxu0 %v274
    %510 = vmatpush.bf16.msra.mxu0 %v273
    %511 = vmatmul.bf16.gmra.mxu0 %v501
    %v512 = vpop.f32.mrf.mxu0
    %v513 = vadd.f32 0.0, %v512
    %v514 = vpop.f32.mrf.mxu0
    %515 = vdwg.mxu0
    %v516 = vadd.f32 %v498, %v513
    %v517 = vxor.u32 %v516, 2147483648
    %v518 = vmul.f32 %v517, 1.442695
    %v519 = vpow.pop %v518
    %v520 = vadd.f32 %v519, 1.0
    %v521 = vrcp.pop %v520
    %v522 = vmul.f32 %v520, %v521
    %v523 = vsub.f32 1.0, %v522
    %v524 = vmul.f32 %v521, %v523
    %v525 = vadd.f32 %v521, %v524
    %vm526 = vweird.f32 %v520
    %vm527 = vweird.f32 %v521
    %vm528 = vmor %vm526, %vm527
    %v529 = vsel %vm528, %v521, %v525
    %v530 = vand.u32 2147483647, %v520
    %vm531 = vcmp.eq.f32.partialorder %v530, 8.507059e+37
    %v532 = vand.u32 %v520, 2147483648
    %v533 = vor.u32 1.1754944e-38, %v532
    %v534 = vsel %vm531, %v533, %v529
    %v535 = vmul.f32 1.0, %v534
    %v536 = vtanh.pop %v516
    %538 = vrot.lane.b32.xlu0 %v494, 32
    %v539 = vpop.permute.xlu0 %538
    %v541 = vmul.f32 %v535, %v539
    %543 = vrot.lane.b32.xlu0 %v536, 64
    %v544 = vpop.permute.xlu0 %543
    %v546 = vmul.f32 %v535, %v544
    %548 = vrot.lane.b32.xlu0 %v546, 32
    %v549 = vpop.permute.xlu0 %548
    %v551 = vadd.f32 %v541, %v549
    %v552 = vtanh.pop %v551
    %554 = vrot.lane.b32.xlu0 %v552, 64
    %v555 = vpop.permute.xlu0 %554
    %v557 = vmul.f32 %v535, %v555
    %s558 = scalar_lea.vmem %s1, 6
    %v559 = vld [vmem:[%s558] sm:$0x3]
    %vm560 = vcmp.gt.f32.partialorder %v559, 0.0
    %562 = vrot.lane.b32.xlu0 %v557, 32
    %v563 = vpop.permute.xlu0 %562
    %v565 = vsel %vm560, %v563, %v489
    %567 = vrot.lane.b32.xlu0 %v551, 96
    %v568 = vpop.permute.xlu0 %567
    %v570 = vsel %vm560, %v568, %v494
    %v571 = vsel %vm560, %v563, 0.0
    %s572 = scalar_lea.vmem [#allocation3], 6
    %573 = vst.msk [vmem:[%s572] sm:$0x3] %vm344, %v571
    %v574 = vld [vmem:[%s199] sm:$0x3]
    %v575 = vpack.c.bf16 %v565, %v565
    %v577 = vsel %vm277, %v575, 0
    %579 = vmatpush.bf16.msra.mxu0 0
    %580 = vmatpush.bf16.msra.mxu0 0
    %581 = vmatpush.bf16.msra.mxu0 0
    %582 = vmatpush.bf16.msra.mxu0 0
    %583 = vmatpush.bf16.msra.mxu0 0
    %584 = vmatpush.bf16.msra.mxu0 0
    %585 = vmatpush.bf16.msra.mxu0 %v274
    %586 = vmatpush.bf16.msra.mxu0 %v273
    %587 = vmatmul.bf16.gmra.mxu0 %v577
    %v588 = vpop.f32.mrf.mxu0
    %v589 = vadd.f32 0.0, %v588
    %v590 = vpop.f32.mrf.mxu0
    %591 = vdwg.mxu0
    %v592 = vadd.f32 %v574, %v589
    %v593 = vxor.u32 %v592, 2147483648
    %v594 = vmul.f32 %v593, 1.442695
    %v595 = vpow.pop %v594
    %v596 = vadd.f32 %v595, 1.0
    %v597 = vrcp.pop %v596
    %v598 = vmul.f32 %v596, %v597
    %v599 = vsub.f32 1.0, %v598
    %v600 = vmul.f32 %v597, %v599
    %v601 = vadd.f32 %v597, %v600
    %vm602 = vweird.f32 %v596
    %vm603 = vweird.f32 %v597
    %vm604 = vmor %vm602, %vm603
    %v605 = vsel %vm604, %v597, %v601
    %v606 = vand.u32 2147483647, %v596
    %vm607 = vcmp.eq.f32.partialorder %v606, 8.507059e+37
    %v608 = vand.u32 %v596, 2147483648
    %v609 = vor.u32 1.1754944e-38, %v608
    %v610 = vsel %vm607, %v609, %v605
    %v611 = vmul.f32 1.0, %v610
    %v612 = vtanh.pop %v592
    %614 = vrot.lane.b32.xlu0 %v570, 32
    %v615 = vpop.permute.xlu0 %614
    %v617 = vmul.f32 %v611, %v615
    %619 = vrot.lane.b32.xlu0 %v612, 64
    %v620 = vpop.permute.xlu0 %619
    %v622 = vmul.f32 %v611, %v620
    %624 = vrot.lane.b32.xlu0 %v622, 32
    %v625 = vpop.permute.xlu0 %624
    %v627 = vadd.f32 %v617, %v625
    %v628 = vtanh.pop %v627
    %630 = vrot.lane.b32.xlu0 %v628, 64
    %v631 = vpop.permute.xlu0 %630
    %v633 = vmul.f32 %v611, %v631
    %s634 = scalar_lea.vmem %s1, 8
    %v635 = vld [vmem:[%s634] sm:$0x3]
    %vm636 = vcmp.gt.f32.partialorder %v635, 0.0
    %638 = vrot.lane.b32.xlu0 %v633, 32
    %v639 = vpop.permute.xlu0 %638
    %v641 = vsel %vm636, %v639, %v565
    %643 = vrot.lane.b32.xlu0 %v627, 96
    %v644 = vpop.permute.xlu0 %643
    %v646 = vsel %vm636, %v644, %v570
    %v647 = vsel %vm636, %v639, 0.0
    %s648 = scalar_lea.vmem [#allocation3], 8
    %649 = vst.msk [vmem:[%s648] sm:$0x3] %vm344, %v647
    %v650 = vld [vmem:[%s220] sm:$0x3]
    %v651 = vpack.c.bf16 %v641, %v641
    %v653 = vsel %vm277, %v651, 0
    %655 = vmatpush.bf16.msra.mxu0 0
    %656 = vmatpush.bf16.msra.mxu0 0
    %657 = vmatpush.bf16.msra.mxu0 0
    %658 = vmatpush.bf16.msra.mxu0 0
    %659 = vmatpush.bf16.msra.mxu0 0
    %660 = vmatpush.bf16.msra.mxu0 0
    %661 = vmatpush.bf16.msra.mxu0 %v274
    %662 = vmatpush.bf16.msra.mxu0 %v273
    %663 = vmatmul.bf16.gmra.mxu0 %v653
    %v664 = vpop.f32.mrf.mxu0
    %v665 = vadd.f32 0.0, %v664
    %v666 = vpop.f32.mrf.mxu0
    %667 = vdwg.mxu0
    %v668 = vadd.f32 %v650, %v665
    %v669 = vxor.u32 %v668, 2147483648
    %v670 = vmul.f32 %v669, 1.442695
    %v671 = vpow.pop %v670
    %v672 = vadd.f32 %v671, 1.0
    %v673 = vrcp.pop %v672
    %v674 = vmul.f32 %v672, %v673
    %v675 = vsub.f32 1.0, %v674
    %v676 = vmul.f32 %v673, %v675
    %v677 = vadd.f32 %v673, %v676
    %vm678 = vweird.f32 %v672
    %vm679 = vweird.f32 %v673
    %vm680 = vmor %vm678, %vm679
    %v681 = vsel %vm680, %v673, %v677
    %v682 = vand.u32 2147483647, %v672
    %vm683 = vcmp.eq.f32.partialorder %v682, 8.507059e+37
    %v684 = vand.u32 %v672, 2147483648
    %v685 = vor.u32 1.1754944e-38, %v684
    %v686 = vsel %vm683, %v685, %v681
    %v687 = vmul.f32 1.0, %v686
    %v688 = vtanh.pop %v668
    %690 = vrot.lane.b32.xlu0 %v646, 32
    %v691 = vpop.permute.xlu0 %690
    %v693 = vmul.f32 %v687, %v691
    %695 = vrot.lane.b32.xlu0 %v688, 64
    %v696 = vpop.permute.xlu0 %695
    %v698 = vmul.f32 %v687, %v696
    %700 = vrot.lane.b32.xlu0 %v698, 32
    %v701 = vpop.permute.xlu0 %700
    %v703 = vadd.f32 %v693, %v701
    %v704 = vtanh.pop %v703
    %706 = vrot.lane.b32.xlu0 %v704, 64
    %v707 = vpop.permute.xlu0 %706
    %v709 = vmul.f32 %v687, %v707
    %s710 = scalar_lea.vmem %s1, 10
    %v711 = vld [vmem:[%s710] sm:$0x3]
    %vm712 = vcmp.gt.f32.partialorder %v711, 0.0
    %714 = vrot.lane.b32.xlu0 %v709, 32
    %v715 = vpop.permute.xlu0 %714
    %v717 = vsel %vm712, %v715, %v641
    %719 = vrot.lane.b32.xlu0 %v703, 96
    %v720 = vpop.permute.xlu0 %719
    %v722 = vsel %vm712, %v720, %v646
    %v723 = vsel %vm712, %v715, 0.0
    %s724 = scalar_lea.vmem [#allocation3], 10
    %725 = vst.msk [vmem:[%s724] sm:$0x3] %vm344, %v723
    %v726 = vld [vmem:[%s241] sm:$0x3]
    %v727 = vpack.c.bf16 %v717, %v717
    %v729 = vsel %vm277, %v727, 0
    %731 = vmatpush.bf16.msra.mxu0 0
    %732 = vmatpush.bf16.msra.mxu0 0
    %733 = vmatpush.bf16.msra.mxu0 0
    %734 = vmatpush.bf16.msra.mxu0 0
    %735 = vmatpush.bf16.msra.mxu0 0
    %736 = vmatpush.bf16.msra.mxu0 0
    %737 = vmatpush.bf16.msra.mxu0 %v274
    %738 = vmatpush.bf16.msra.mxu0 %v273
    %739 = vmatmul.bf16.gmra.mxu0 %v729
    %v740 = vpop.f32.mrf.mxu0
    %v741 = vadd.f32 0.0, %v740
    %v742 = vpop.f32.mrf.mxu0
    %743 = vdwg.mxu0
    %v744 = vadd.f32 %v726, %v741
    %v745 = vxor.u32 %v744, 2147483648
    %v746 = vmul.f32 %v745, 1.442695
    %v747 = vpow.pop %v746
    %v748 = vadd.f32 %v747, 1.0
    %v749 = vrcp.pop %v748
    %v750 = vmul.f32 %v748, %v749
    %v751 = vsub.f32 1.0, %v750
    %v752 = vmul.f32 %v749, %v751
    %v753 = vadd.f32 %v749, %v752
    %vm754 = vweird.f32 %v748
    %vm755 = vweird.f32 %v749
    %vm756 = vmor %vm754, %vm755
    %v757 = vsel %vm756, %v749, %v753
    %v758 = vand.u32 2147483647, %v748
    %vm759 = vcmp.eq.f32.partialorder %v758, 8.507059e+37
    %v760 = vand.u32 %v748, 2147483648
    %v761 = vor.u32 1.1754944e-38, %v760
    %v762 = vsel %vm759, %v761, %v757
    %v763 = vmul.f32 1.0, %v762
    %v764 = vtanh.pop %v744
    %766 = vrot.lane.b32.xlu0 %v722, 32
    %v767 = vpop.permute.xlu0 %766
    %v769 = vmul.f32 %v763, %v767
    %771 = vrot.lane.b32.xlu0 %v764, 64
    %v772 = vpop.permute.xlu0 %771
    %v774 = vmul.f32 %v763, %v772
    %776 = vrot.lane.b32.xlu0 %v774, 32
    %v777 = vpop.permute.xlu0 %776
    %v779 = vadd.f32 %v769, %v777
    %v780 = vtanh.pop %v779
    %782 = vrot.lane.b32.xlu0 %v780, 64
    %v783 = vpop.permute.xlu0 %782
    %v785 = vmul.f32 %v763, %v783
    %s786 = scalar_lea.vmem %s1, 12
    %v787 = vld [vmem:[%s786] sm:$0x3]
    %vm788 = vcmp.gt.f32.partialorder %v787, 0.0
    %790 = vrot.lane.b32.xlu0 %v785, 32
    %v791 = vpop.permute.xlu0 %790
    %v793 = vsel %vm788, %v791, %v717
    %795 = vrot.lane.b32.xlu0 %v779, 96
    %v796 = vpop.permute.xlu0 %795
    %v798 = vsel %vm788, %v796, %v722
    %v799 = vsel %vm788, %v791, 0.0
    %s800 = scalar_lea.vmem [#allocation3], 12
    %801 = vst.msk [vmem:[%s800] sm:$0x3] %vm344, %v799
    %v802 = vld [vmem:[%s262] sm:$0x3]
    %v803 = vpack.c.bf16 %v793, %v793
    %v805 = vsel %vm277, %v803, 0
    %807 = vmatpush.bf16.msra.mxu0 0
    %808 = vmatpush.bf16.msra.mxu0 0
    %809 = vmatpush.bf16.msra.mxu0 0
    %810 = vmatpush.bf16.msra.mxu0 0
    %811 = vmatpush.bf16.msra.mxu0 0
    %812 = vmatpush.bf16.msra.mxu0 0
    %813 = vmatpush.bf16.msra.mxu0 %v274
    %814 = vmatpush.bf16.msra.mxu0 %v273
    %815 = vmatmul.bf16.gmra.mxu0 %v805
    %v816 = vpop.f32.mrf.mxu0
    %v817 = vadd.f32 0.0, %v816
    %v818 = vpop.f32.mrf.mxu0
    %819 = vdwg.mxu0
    %v820 = vadd.f32 %v802, %v817
    %v821 = vxor.u32 %v820, 2147483648
    %v822 = vmul.f32 %v821, 1.442695
    %v823 = vpow.pop %v822
    %v824 = vadd.f32 %v823, 1.0
    %v825 = vrcp.pop %v824
    %v826 = vmul.f32 %v824, %v825
    %v827 = vsub.f32 1.0, %v826
    %v828 = vmul.f32 %v825, %v827
    %v829 = vadd.f32 %v825, %v828
    %vm830 = vweird.f32 %v824
    %vm831 = vweird.f32 %v825
    %vm832 = vmor %vm830, %vm831
    %v833 = vsel %vm832, %v825, %v829
    %v834 = vand.u32 2147483647, %v824
    %vm835 = vcmp.eq.f32.partialorder %v834, 8.507059e+37
    %v836 = vand.u32 %v824, 2147483648
    %v837 = vor.u32 1.1754944e-38, %v836
    %v838 = vsel %vm835, %v837, %v833
    %v839 = vmul.f32 1.0, %v838
    %v840 = vtanh.pop %v820
    %842 = vrot.lane.b32.xlu0 %v798, 32
    %v843 = vpop.permute.xlu0 %842
    %v845 = vmul.f32 %v839, %v843
    %847 = vrot.lane.b32.xlu0 %v840, 64
    %v848 = vpop.permute.xlu0 %847
    %v850 = vmul.f32 %v839, %v848
    %852 = vrot.lane.b32.xlu0 %v850, 32
    %v853 = vpop.permute.xlu0 %852
    %v855 = vadd.f32 %v845, %v853
    %v856 = vtanh.pop %v855
    %858 = vrot.lane.b32.xlu0 %v856, 64
    %v859 = vpop.permute.xlu0 %858
    %v861 = vmul.f32 %v839, %v859
    %s862 = scalar_lea.vmem %s1, 14
    %v863 = vld [vmem:[%s862] sm:$0x3]
    %vm864 = vcmp.gt.f32.partialorder %v863, 0.0
    %866 = vrot.lane.b32.xlu0 %v861, 32
    %v867 = vpop.permute.xlu0 %866
    %v869 = vsel %vm864, %v867, %v793
    %v870 = vsel %vm864, %v867, 0.0
    %s871 = scalar_lea.vmem [#allocation3], 14
    %872 = vst.msk [vmem:[%s871] sm:$0x3] %vm344, %v870
    %873 = vst.msk [vmem:[#allocation11] sm:$0x3] %vm344, %v869
    %v874 = vld [vmem:[#allocation7] sm:$0xf]
    %v875 = vld [vmem:[#allocation7 + $0x4] sm:$0xf]
    %v876 = vld [vmem:[#allocation7 + $0x8] sm:$0xf]
    %v877 = vld [vmem:[#allocation7 + $0xc] sm:$0xf]
    %v878 = vld [vmem:[#allocation9] sm:$0xf]
    %v879 = vld [vmem:[#allocation9 + $0x4] sm:$0xf]
    %v880 = vld [vmem:[#allocation9 + $0x8] sm:$0xf]
    %v881 = vld [vmem:[#allocation9 + $0xc] sm:$0xf]
    %v882 = vld [vmem:[%s7] sm:$0x1]
    %v883 = vld [vmem:[#allocation3] sm:$0x3]
    %v884 = vpack.c.bf16 %v883, %v883
    %v886 = vperm.slane %v882, 0
    %v892 = vunpack.c.l.b16 %v874
    %v893 = vunpack.c.l.b16 %v875
    %v894 = vunpack.c.l.b16 %v876
    %v895 = vunpack.c.l.b16 %v877
    %v896 = vpack.c.b16 %v893, %v892
    %v897 = vpack.c.b16 %v895, %v894
    %v901 = vsel %vm277, %v884, 0
    %903 = vmatpush.bf16.msra.mxu0 0
    %904 = vmatpush.bf16.msra.mxu0 0
    %905 = vmatpush.bf16.msra.mxu0 0
    %906 = vmatpush.bf16.msra.mxu0 0
    %907 = vmatpush.bf16.msra.mxu0 0
    %908 = vmatpush.bf16.msra.mxu0 0
    %909 = vmatpush.bf16.msra.mxu0 %v897
    %910 = vmatpush.bf16.msra.mxu0 %v896
    %911 = vmatmul.bf16.gmra.mxu0 %v901
    %v912 = vpop.f32.mrf.mxu0
    %v913 = vadd.f32 %v886, %v912
    %v914 = vpop.f32.mrf.mxu0
    %915 = vdwg.mxu0
    %916 = vst [vmem:[#allocation2] sm:$0x3] %v913
    %v917 = vld [vmem:[%s420] sm:$0x3]
    %v918 = vpack.c.bf16 %v917, %v917
    %v920 = vsel %vm277, %v918, 0
    %922 = vmatpush.bf16.msra.mxu0 0
    %923 = vmatpush.bf16.msra.mxu0 0
    %924 = vmatpush.bf16.msra.mxu0 0
    %925 = vmatpush.bf16.msra.mxu0 0
    %926 = vmatpush.bf16.msra.mxu0 0
    %927 = vmatpush.bf16.msra.mxu0 0
    %928 = vmatpush.bf16.msra.mxu0 %v897
    %929 = vmatpush.bf16.msra.mxu0 %v896
    %930 = vmatmul.bf16.gmra.mxu0 %v920
    %v931 = vpop.f32.mrf.mxu0
    %v932 = vadd.f32 %v886, %v931
    %v933 = vpop.f32.mrf.mxu0
    %934 = vdwg.mxu0
    %935 = vst [vmem:[%s136] sm:$0x3] %v932
    %v936 = vld [vmem:[%s496] sm:$0x3]
    %v937 = vpack.c.bf16 %v936, %v936
    %v939 = vsel %vm277, %v937, 0
    %941 = vmatpush.bf16.msra.mxu0 0
    %942 = vmatpush.bf16.msra.mxu0 0
    %943 = vmatpush.bf16.msra.mxu0 0
    %944 = vmatpush.bf16.msra.mxu0 0
    %945 = vmatpush.bf16.msra.mxu0 0
    %946 = vmatpush.bf16.msra.mxu0 0
    %947 = vmatpush.bf16.msra.mxu0 %v897
    %948 = vmatpush.bf16.msra.mxu0 %v896
    %949 = vmatmul.bf16.gmra.mxu0 %v939
    %v950 = vpop.f32.mrf.mxu0
    %v951 = vadd.f32 %v886, %v950
    %v952 = vpop.f32.mrf.mxu0
    %953 = vdwg.mxu0
    %954 = vst [vmem:[%s157] sm:$0x3] %v951
    %v955 = vld [vmem:[%s572] sm:$0x3]
    %v956 = vpack.c.bf16 %v955, %v955
    %v958 = vsel %vm277, %v956, 0
    %960 = vmatpush.bf16.msra.mxu0 0
    %961 = vmatpush.bf16.msra.mxu0 0
    %962 = vmatpush.bf16.msra.mxu0 0
    %963 = vmatpush.bf16.msra.mxu0 0
    %964 = vmatpush.bf16.msra.mxu0 0
    %965 = vmatpush.bf16.msra.mxu0 0
    %966 = vmatpush.bf16.msra.mxu0 %v897
    %967 = vmatpush.bf16.msra.mxu0 %v896
    %968 = vmatmul.bf16.gmra.mxu0 %v958
    %v969 = vpop.f32.mrf.mxu0
    %v970 = vadd.f32 %v886, %v969
    %v971 = vpop.f32.mrf.mxu0
    %972 = vdwg.mxu0
    %973 = vst [vmem:[%s178] sm:$0x3] %v970
    %v974 = vld [vmem:[%s648] sm:$0x3]
    %v975 = vpack.c.bf16 %v974, %v974
    %v977 = vsel %vm277, %v975, 0
    %979 = vmatpush.bf16.msra.mxu0 0
    %980 = vmatpush.bf16.msra.mxu0 0
    %981 = vmatpush.bf16.msra.mxu0 0
    %982 = vmatpush.bf16.msra.mxu0 0
    %983 = vmatpush.bf16.msra.mxu0 0
    %984 = vmatpush.bf16.msra.mxu0 0
    %985 = vmatpush.bf16.msra.mxu0 %v897
    %986 = vmatpush.bf16.msra.mxu0 %v896
    %987 = vmatmul.bf16.gmra.mxu0 %v977
    %v988 = vpop.f32.mrf.mxu0
    %v989 = vadd.f32 %v886, %v988
    %v990 = vpop.f32.mrf.mxu0
    %991 = vdwg.mxu0
    %992 = vst [vmem:[%s199] sm:$0x3] %v989
    %v993 = vld [vmem:[%s724] sm:$0x3]
    %v994 = vpack.c.bf16 %v993, %v993
    %v996 = vsel %vm277, %v994, 0
    %998 = vmatpush.bf16.msra.mxu0 0
    %999 = vmatpush.bf16.msra.mxu0 0
    %1000 = vmatpush.bf16.msra.mxu0 0
    %1001 = vmatpush.bf16.msra.mxu0 0
    %1002 = vmatpush.bf16.msra.mxu0 0
    %1003 = vmatpush.bf16.msra.mxu0 0
    %1004 = vmatpush.bf16.msra.mxu0 %v897
    %1005 = vmatpush.bf16.msra.mxu0 %v896
    %1006 = vmatmul.bf16.gmra.mxu0 %v996
    %v1007 = vpop.f32.mrf.mxu0
    %v1008 = vadd.f32 %v886, %v1007
    %v1009 = vpop.f32.mrf.mxu0
    %1010 = vdwg.mxu0
    %1011 = vst [vmem:[%s220] sm:$0x3] %v1008
    %v1012 = vld [vmem:[%s800] sm:$0x3]
    %v1013 = vpack.c.bf16 %v1012, %v1012
    %v1015 = vsel %vm277, %v1013, 0
    %1017 = vmatpush.bf16.msra.mxu0 0
    %1018 = vmatpush.bf16.msra.mxu0 0
    %1019 = vmatpush.bf16.msra.mxu0 0
    %1020 = vmatpush.bf16.msra.mxu0 0
    %1021 = vmatpush.bf16.msra.mxu0 0
    %1022 = vmatpush.bf16.msra.mxu0 0
    %1023 = vmatpush.bf16.msra.mxu0 %v897
    %1024 = vmatpush.bf16.msra.mxu0 %v896
    %1025 = vmatmul.bf16.gmra.mxu0 %v1015
    %v1026 = vpop.f32.mrf.mxu0
    %v1027 = vadd.f32 %v886, %v1026
    %v1028 = vpop.f32.mrf.mxu0
    %1029 = vdwg.mxu0
    %1030 = vst [vmem:[%s241] sm:$0x3] %v1027
    %v1031 = vld [vmem:[%s871] sm:$0x3]
    %v1032 = vpack.c.bf16 %v1031, %v1031
    %v1034 = vsel %vm277, %v1032, 0
    %1036 = vmatpush.bf16.msra.mxu0 0
    %1037 = vmatpush.bf16.msra.mxu0 0
    %1038 = vmatpush.bf16.msra.mxu0 0
    %1039 = vmatpush.bf16.msra.mxu0 0
    %1040 = vmatpush.bf16.msra.mxu0 0
    %1041 = vmatpush.bf16.msra.mxu0 0
    %1042 = vmatpush.bf16.msra.mxu0 %v897
    %1043 = vmatpush.bf16.msra.mxu0 %v896
    %1044 = vmatmul.bf16.gmra.mxu0 %v1034
    %v1045 = vpop.f32.mrf.mxu0
    %v1046 = vadd.f32 %v886, %v1045
    %v1047 = vpop.f32.mrf.mxu0
    %1048 = vdwg.mxu0
    %1049 = vst [vmem:[%s262] sm:$0x3] %v1046
    %v1050 = vld [vmem:[#allocation2] sm:$0x3]
    %v1055 = vunpack.c.l.b16 %v878
    %v1056 = vunpack.c.l.b16 %v879
    %v1057 = vunpack.c.l.b16 %v880
    %v1058 = vunpack.c.l.b16 %v881
    %v1059 = vpack.c.b16 %v1056, %v1055
    %v1060 = vpack.c.b16 %v1058, %v1057
    %1063 = vmatpush.bf16.msra.mxu0 0
    %1064 = vmatpush.bf16.msra.mxu0 0
    %1065 = vmatpush.bf16.msra.mxu0 0
    %1066 = vmatpush.bf16.msra.mxu0 0
    %1067 = vmatpush.bf16.msra.mxu0 0
    %1068 = vmatpush.bf16.msra.mxu0 0
    %1069 = vmatpush.bf16.msra.mxu0 %v1060
    %1070 = vmatpush.bf16.msra.mxu0 %v1059
    %1071 = vmatmul.bf16.gmra.mxu0 %v279
    %v1072 = vpop.f32.mrf.mxu0
    %v1073 = vadd.f32 0.0, %v1072
    %v1074 = vpop.f32.mrf.mxu0
    %1075 = vdwg.mxu0
    %v1076 = vadd.f32 %v1050, %v1073
    %v1077 = vxor.u32 %v1076, 2147483648
    %v1078 = vmul.f32 %v1077, 1.442695
    %v1079 = vpow.pop %v1078
    %v1080 = vadd.f32 %v1079, 1.0
    %v1081 = vrcp.pop %v1080
    %v1082 = vmul.f32 %v1080, %v1081
    %v1083 = vsub.f32 1.0, %v1082
    %v1084 = vmul.f32 %v1081, %v1083
    %v1085 = vadd.f32 %v1081, %v1084
    %vm1086 = vweird.f32 %v1080
    %vm1087 = vweird.f32 %v1081
    %vm1088 = vmor %vm1086, %vm1087
    %v1089 = vsel %vm1088, %v1081, %v1085
    %v1090 = vand.u32 2147483647, %v1080
    %vm1091 = vcmp.eq.f32.partialorder %v1090, 8.507059e+37
    %v1092 = vand.u32 %v1080, 2147483648
    %v1093 = vor.u32 1.1754944e-38, %v1092
    %v1094 = vsel %vm1091, %v1093, %v1089
    %v1095 = vmul.f32 1.0, %v1094
    %v1096 = vtanh.pop %v1076
    %v1097 = vmul.f32 %v1095, 0.0
    %1099 = vrot.lane.b32.xlu0 %v1096, 64
    %v1100 = vpop.permute.xlu0 %1099
    %v1102 = vmul.f32 %v1095, %v1100
    %1104 = vrot.lane.b32.xlu0 %v1102, 32
    %v1105 = vpop.permute.xlu0 %1104
    %v1107 = vadd.f32 %v1097, %v1105
    %v1108 = vtanh.pop %v1107
    %1110 = vrot.lane.b32.xlu0 %v1108, 64
    %v1111 = vpop.permute.xlu0 %1110
    %v1113 = vmul.f32 %v1095, %v1111
    %v1114 = vld [vmem:[%s1] sm:$0x3]
    %vm1115 = vcmp.gt.f32.partialorder %v1114, 0.0
    %1117 = vrot.lane.b32.xlu0 %v1113, 32
    %v1118 = vpop.permute.xlu0 %1117
    %v1120 = vsel %vm1115, %v1118, 0.0
    %1122 = vrot.lane.b32.xlu0 %v1107, 96
    %v1123 = vpop.permute.xlu0 %1122
    %v1125 = vsel %vm1115, %v1123, 0.0
    %1126 = vst.msk [vmem:[#allocation10] sm:$0x3] %vm344, %v1120
    %v1127 = vld [vmem:[%s136] sm:$0x3]
    %v1128 = vpack.c.bf16 %v1120, %v1120
    %v1130 = vsel %vm277, %v1128, 0
    %1132 = vmatpush.bf16.msra.mxu0 0
    %1133 = vmatpush.bf16.msra.mxu0 0
    %1134 = vmatpush.bf16.msra.mxu0 0
    %1135 = vmatpush.bf16.msra.mxu0 0
    %1136 = vmatpush.bf16.msra.mxu0 0
    %1137 = vmatpush.bf16.msra.mxu0 0
    %1138 = vmatpush.bf16.msra.mxu0 %v1060
    %1139 = vmatpush.bf16.msra.mxu0 %v1059
    %1140 = vmatmul.bf16.gmra.mxu0 %v1130
    %v1141 = vpop.f32.mrf.mxu0
    %v1142 = vadd.f32 0.0, %v1141
    %v1143 = vpop.f32.mrf.mxu0
    %1144 = vdwg.mxu0
    %v1145 = vadd.f32 %v1127, %v1142
    %v1146 = vxor.u32 %v1145, 2147483648
    %v1147 = vmul.f32 %v1146, 1.442695
    %v1148 = vpow.pop %v1147
    %v1149 = vadd.f32 %v1148, 1.0
    %v1150 = vrcp.pop %v1149
    %v1151 = vmul.f32 %v1149, %v1150
    %v1152 = vsub.f32 1.0, %v1151
    %v1153 = vmul.f32 %v1150, %v1152
    %v1154 = vadd.f32 %v1150, %v1153
    %vm1155 = vweird.f32 %v1149
    %vm1156 = vweird.f32 %v1150
    %vm1157 = vmor %vm1155, %vm1156
    %v1158 = vsel %vm1157, %v1150, %v1154
    %v1159 = vand.u32 2147483647, %v1149
    %vm1160 = vcmp.eq.f32.partialorder %v1159, 8.507059e+37
    %v1161 = vand.u32 %v1149, 2147483648
    %v1162 = vor.u32 1.1754944e-38, %v1161
    %v1163 = vsel %vm1160, %v1162, %v1158
    %v1164 = vmul.f32 1.0, %v1163
    %v1165 = vtanh.pop %v1145
    %1167 = vrot.lane.b32.xlu0 %v1125, 32
    %v1168 = vpop.permute.xlu0 %1167
    %v1170 = vmul.f32 %v1164, %v1168
    %1172 = vrot.lane.b32.xlu0 %v1165, 64
    %v1173 = vpop.permute.xlu0 %1172
    %v1175 = vmul.f32 %v1164, %v1173
    %1177 = vrot.lane.b32.xlu0 %v1175, 32
    %v1178 = vpop.permute.xlu0 %1177
    %v1180 = vadd.f32 %v1170, %v1178
    %v1181 = vtanh.pop %v1180
    %1183 = vrot.lane.b32.xlu0 %v1181, 64
    %v1184 = vpop.permute.xlu0 %1183
    %v1186 = vmul.f32 %v1164, %v1184
    %v1187 = vld [vmem:[%s406] sm:$0x3]
    %vm1188 = vcmp.gt.f32.partialorder %v1187, 0.0
    %1190 = vrot.lane.b32.xlu0 %v1186, 32
    %v1191 = vpop.permute.xlu0 %1190
    %v1193 = vsel %vm1188, %v1191, %v1120
    %1195 = vrot.lane.b32.xlu0 %v1180, 96
    %v1196 = vpop.permute.xlu0 %1195
    %v1198 = vsel %vm1188, %v1196, %v1125
    %v1199 = vsel %vm1188, %v1191, 0.0
    %s1200 = scalar_lea.vmem [#allocation10], 2
    %1201 = vst.msk [vmem:[%s1200] sm:$0x3] %vm344, %v1199
    %v1202 = vld [vmem:[%s157] sm:$0x3]
    %v1203 = vpack.c.bf16 %v1193, %v1193
    %v1205 = vsel %vm277, %v1203, 0
    %1207 = vmatpush.bf16.msra.mxu0 0
    %1208 = vmatpush.bf16.msra.mxu0 0
    %1209 = vmatpush.bf16.msra.mxu0 0
    %1210 = vmatpush.bf16.msra.mxu0 0
    %1211 = vmatpush.bf16.msra.mxu0 0
    %1212 = vmatpush.bf16.msra.mxu0 0
    %1213 = vmatpush.bf16.msra.mxu0 %v1060
    %1214 = vmatpush.bf16.msra.mxu0 %v1059
    %1215 = vmatmul.bf16.gmra.mxu0 %v1205
    %v1216 = vpop.f32.mrf.mxu0
    %v1217 = vadd.f32 0.0, %v1216
    %v1218 = vpop.f32.mrf.mxu0
    %1219 = vdwg.mxu0
    %v1220 = vadd.f32 %v1202, %v1217
    %v1221 = vxor.u32 %v1220, 2147483648
    %v1222 = vmul.f32 %v1221, 1.442695
    %v1223 = vpow.pop %v1222
    %v1224 = vadd.f32 %v1223, 1.0
    %v1225 = vrcp.pop %v1224
    %v1226 = vmul.f32 %v1224, %v1225
    %v1227 = vsub.f32 1.0, %v1226
    %v1228 = vmul.f32 %v1225, %v1227
    %v1229 = vadd.f32 %v1225, %v1228
    %vm1230 = vweird.f32 %v1224
    %vm1231 = vweird.f32 %v1225
    %vm1232 = vmor %vm1230, %vm1231
    %v1233 = vsel %vm1232, %v1225, %v1229
    %v1234 = vand.u32 2147483647, %v1224
    %vm1235 = vcmp.eq.f32.partialorder %v1234, 8.507059e+37
    %v1236 = vand.u32 %v1224, 2147483648
    %v1237 = vor.u32 1.1754944e-38, %v1236
    %v1238 = vsel %vm1235, %v1237, %v1233
    %v1239 = vmul.f32 1.0, %v1238
    %v1240 = vtanh.pop %v1220
    %1242 = vrot.lane.b32.xlu0 %v1198, 32
    %v1243 = vpop.permute.xlu0 %1242
    %v1245 = vmul.f32 %v1239, %v1243
    %1247 = vrot.lane.b32.xlu0 %v1240, 64
    %v1248 = vpop.permute.xlu0 %1247
    %v1250 = vmul.f32 %v1239, %v1248
    %1252 = vrot.lane.b32.xlu0 %v1250, 32
    %v1253 = vpop.permute.xlu0 %1252
    %v1255 = vadd.f32 %v1245, %v1253
    %v1256 = vtanh.pop %v1255
    %1258 = vrot.lane.b32.xlu0 %v1256, 64
    %v1259 = vpop.permute.xlu0 %1258
    %v1261 = vmul.f32 %v1239, %v1259
    %v1262 = vld [vmem:[%s482] sm:$0x3]
    %vm1263 = vcmp.gt.f32.partialorder %v1262, 0.0
    %1265 = vrot.lane.b32.xlu0 %v1261, 32
    %v1266 = vpop.permute.xlu0 %1265
    %v1268 = vsel %vm1263, %v1266, %v1193
    %1270 = vrot.lane.b32.xlu0 %v1255, 96
    %v1271 = vpop.permute.xlu0 %1270
    %v1273 = vsel %vm1263, %v1271, %v1198
    %v1274 = vsel %vm1263, %v1266, 0.0
    %s1275 = scalar_lea.vmem [#allocation10], 4
    %1276 = vst.msk [vmem:[%s1275] sm:$0x3] %vm344, %v1274
    %v1277 = vld [vmem:[%s178] sm:$0x3]
    %v1278 = vpack.c.bf16 %v1268, %v1268
    %v1280 = vsel %vm277, %v1278, 0
    %1282 = vmatpush.bf16.msra.mxu0 0
    %1283 = vmatpush.bf16.msra.mxu0 0
    %1284 = vmatpush.bf16.msra.mxu0 0
    %1285 = vmatpush.bf16.msra.mxu0 0
    %1286 = vmatpush.bf16.msra.mxu0 0
    %1287 = vmatpush.bf16.msra.mxu0 0
    %1288 = vmatpush.bf16.msra.mxu0 %v1060
    %1289 = vmatpush.bf16.msra.mxu0 %v1059
    %1290 = vmatmul.bf16.gmra.mxu0 %v1280
    %v1291 = vpop.f32.mrf.mxu0
    %v1292 = vadd.f32 0.0, %v1291
    %v1293 = vpop.f32.mrf.mxu0
    %1294 = vdwg.mxu0
    %v1295 = vadd.f32 %v1277, %v1292
    %v1296 = vxor.u32 %v1295, 2147483648
    %v1297 = vmul.f32 %v1296, 1.442695
    %v1298 = vpow.pop %v1297
    %v1299 = vadd.f32 %v1298, 1.0
    %v1300 = vrcp.pop %v1299
    %v1301 = vmul.f32 %v1299, %v1300
    %v1302 = vsub.f32 1.0, %v1301
    %v1303 = vmul.f32 %v1300, %v1302
    %v1304 = vadd.f32 %v1300, %v1303
    %vm1305 = vweird.f32 %v1299
    %vm1306 = vweird.f32 %v1300
    %vm1307 = vmor %vm1305, %vm1306
    %v1308 = vsel %vm1307, %v1300, %v1304
    %v1309 = vand.u32 2147483647, %v1299
    %vm1310 = vcmp.eq.f32.partialorder %v1309, 8.507059e+37
    %v1311 = vand.u32 %v1299, 2147483648
    %v1312 = vor.u32 1.1754944e-38, %v1311
    %v1313 = vsel %vm1310, %v1312, %v1308
    %v1314 = vmul.f32 1.0, %v1313
    %v1315 = vtanh.pop %v1295
    %1317 = vrot.lane.b32.xlu0 %v1273, 32
    %v1318 = vpop.permute.xlu0 %1317
    %v1320 = vmul.f32 %v1314, %v1318
    %1322 = vrot.lane.b32.xlu0 %v1315, 64
    %v1323 = vpop.permute.xlu0 %1322
    %v1325 = vmul.f32 %v1314, %v1323
    %1327 = vrot.lane.b32.xlu0 %v1325, 32
    %v1328 = vpop.permute.xlu0 %1327
    %v1330 = vadd.f32 %v1320, %v1328
    %v1331 = vtanh.pop %v1330
    %1333 = vrot.lane.b32.xlu0 %v1331, 64
    %v1334 = vpop.permute.xlu0 %1333
    %v1336 = vmul.f32 %v1314, %v1334
    %v1337 = vld [vmem:[%s558] sm:$0x3]
    %vm1338 = vcmp.gt.f32.partialorder %v1337, 0.0
    %1340 = vrot.lane.b32.xlu0 %v1336, 32
    %v1341 = vpop.permute.xlu0 %1340
    %v1343 = vsel %vm1338, %v1341, %v1268
    %1345 = vrot.lane.b32.xlu0 %v1330, 96
    %v1346 = vpop.permute.xlu0 %1345
    %v1348 = vsel %vm1338, %v1346, %v1273
    %v1349 = vsel %vm1338, %v1341, 0.0
    %s1350 = scalar_lea.vmem [#allocation10], 6
    %1351 = vst.msk [vmem:[%s1350] sm:$0x3] %vm344, %v1349
    %v1352 = vld [vmem:[%s199] sm:$0x3]
    %v1353 = vpack.c.bf16 %v1343, %v1343
    %v1355 = vsel %vm277, %v1353, 0
    %1357 = vmatpush.bf16.msra.mxu0 0
    %1358 = vmatpush.bf16.msra.mxu0 0
    %1359 = vmatpush.bf16.msra.mxu0 0
    %1360 = vmatpush.bf16.msra.mxu0 0
    %1361 = vmatpush.bf16.msra.mxu0 0
    %1362 = vmatpush.bf16.msra.mxu0 0
    %1363 = vmatpush.bf16.msra.mxu0 %v1060
    %1364 = vmatpush.bf16.msra.mxu0 %v1059
    %1365 = vmatmul.bf16.gmra.mxu0 %v1355
    %v1366 = vpop.f32.mrf.mxu0
    %v1367 = vadd.f32 0.0, %v1366
    %v1368 = vpop.f32.mrf.mxu0
    %1369 = vdwg.mxu0
    %v1370 = vadd.f32 %v1352, %v1367
    %v1371 = vxor.u32 %v1370, 2147483648
    %v1372 = vmul.f32 %v1371, 1.442695
    %v1373 = vpow.pop %v1372
    %v1374 = vadd.f32 %v1373, 1.0
    %v1375 = vrcp.pop %v1374
    %v1376 = vmul.f32 %v1374, %v1375
    %v1377 = vsub.f32 1.0, %v1376
    %v1378 = vmul.f32 %v1375, %v1377
    %v1379 = vadd.f32 %v1375, %v1378
    %vm1380 = vweird.f32 %v1374
    %vm1381 = vweird.f32 %v1375
    %vm1382 = vmor %vm1380, %vm1381
    %v1383 = vsel %vm1382, %v1375, %v1379
    %v1384 = vand.u32 2147483647, %v1374
    %vm1385 = vcmp.eq.f32.partialorder %v1384, 8.507059e+37
    %v1386 = vand.u32 %v1374, 2147483648
    %v1387 = vor.u32 1.1754944e-38, %v1386
    %v1388 = vsel %vm1385, %v1387, %v1383
    %v1389 = vmul.f32 1.0, %v1388
    %v1390 = vtanh.pop %v1370
    %1392 = vrot.lane.b32.xlu0 %v1348, 32
    %v1393 = vpop.permute.xlu0 %1392
    %v1395 = vmul.f32 %v1389, %v1393
    %1397 = vrot.lane.b32.xlu0 %v1390, 64
    %v1398 = vpop.permute.xlu0 %1397
    %v1400 = vmul.f32 %v1389, %v1398
    %1402 = vrot.lane.b32.xlu0 %v1400, 32
    %v1403 = vpop.permute.xlu0 %1402
    %v1405 = vadd.f32 %v1395, %v1403
    %v1406 = vtanh.pop %v1405
    %1408 = vrot.lane.b32.xlu0 %v1406, 64
    %v1409 = vpop.permute.xlu0 %1408
    %v1411 = vmul.f32 %v1389, %v1409
    %v1412 = vld [vmem:[%s634] sm:$0x3]
    %vm1413 = vcmp.gt.f32.partialorder %v1412, 0.0
    %1415 = vrot.lane.b32.xlu0 %v1411, 32
    %v1416 = vpop.permute.xlu0 %1415
    %v1418 = vsel %vm1413, %v1416, %v1343
    %1420 = vrot.lane.b32.xlu0 %v1405, 96
    %v1421 = vpop.permute.xlu0 %1420
    %v1423 = vsel %vm1413, %v1421, %v1348
    %v1424 = vsel %vm1413, %v1416, 0.0
    %s1425 = scalar_lea.vmem [#allocation10], 8
    %1426 = vst.msk [vmem:[%s1425] sm:$0x3] %vm344, %v1424
    %v1427 = vld [vmem:[%s220] sm:$0x3]
    %v1428 = vpack.c.bf16 %v1418, %v1418
    %v1430 = vsel %vm277, %v1428, 0
    %1432 = vmatpush.bf16.msra.mxu0 0
    %1433 = vmatpush.bf16.msra.mxu0 0
    %1434 = vmatpush.bf16.msra.mxu0 0
    %1435 = vmatpush.bf16.msra.mxu0 0
    %1436 = vmatpush.bf16.msra.mxu0 0
    %1437 = vmatpush.bf16.msra.mxu0 0
    %1438 = vmatpush.bf16.msra.mxu0 %v1060
    %1439 = vmatpush.bf16.msra.mxu0 %v1059
    %1440 = vmatmul.bf16.gmra.mxu0 %v1430
    %v1441 = vpop.f32.mrf.mxu0
    %v1442 = vadd.f32 0.0, %v1441
    %v1443 = vpop.f32.mrf.mxu0
    %1444 = vdwg.mxu0
    %v1445 = vadd.f32 %v1427, %v1442
    %v1446 = vxor.u32 %v1445, 2147483648
    %v1447 = vmul.f32 %v1446, 1.442695
    %v1448 = vpow.pop %v1447
    %v1449 = vadd.f32 %v1448, 1.0
    %v1450 = vrcp.pop %v1449
    %v1451 = vmul.f32 %v1449, %v1450
    %v1452 = vsub.f32 1.0, %v1451
    %v1453 = vmul.f32 %v1450, %v1452
    %v1454 = vadd.f32 %v1450, %v1453
    %vm1455 = vweird.f32 %v1449
    %vm1456 = vweird.f32 %v1450
    %vm1457 = vmor %vm1455, %vm1456
    %v1458 = vsel %vm1457, %v1450, %v1454
    %v1459 = vand.u32 2147483647, %v1449
    %vm1460 = vcmp.eq.f32.partialorder %v1459, 8.507059e+37
    %v1461 = vand.u32 %v1449, 2147483648
    %v1462 = vor.u32 1.1754944e-38, %v1461
    %v1463 = vsel %vm1460, %v1462, %v1458
    %v1464 = vmul.f32 1.0, %v1463
    %v1465 = vtanh.pop %v1445
    %1467 = vrot.lane.b32.xlu0 %v1423, 32
    %v1468 = vpop.permute.xlu0 %1467
    %v1470 = vmul.f32 %v1464, %v1468
    %1472 = vrot.lane.b32.xlu0 %v1465, 64
    %v1473 = vpop.permute.xlu0 %1472
    %v1475 = vmul.f32 %v1464, %v1473
    %1477 = vrot.lane.b32.xlu0 %v1475, 32
    %v1478 = vpop.permute.xlu0 %1477
    %v1480 = vadd.f32 %v1470, %v1478
    %v1481 = vtanh.pop %v1480
    %1483 = vrot.lane.b32.xlu0 %v1481, 64
    %v1484 = vpop.permute.xlu0 %1483
    %v1486 = vmul.f32 %v1464, %v1484
    %v1487 = vld [vmem:[%s710] sm:$0x3]
    %vm1488 = vcmp.gt.f32.partialorder %v1487, 0.0
    %1490 = vrot.lane.b32.xlu0 %v1486, 32
    %v1491 = vpop.permute.xlu0 %1490
    %v1493 = vsel %vm1488, %v1491, %v1418
    %1495 = vrot.lane.b32.xlu0 %v1480, 96
    %v1496 = vpop.permute.xlu0 %1495
    %v1498 = vsel %vm1488, %v1496, %v1423
    %v1499 = vsel %vm1488, %v1491, 0.0
    %s1500 = scalar_lea.vmem [#allocation10], 10
    %1501 = vst.msk [vmem:[%s1500] sm:$0x3] %vm344, %v1499
    %v1502 = vld [vmem:[%s241] sm:$0x3]
    %v1503 = vpack.c.bf16 %v1493, %v1493
    %v1505 = vsel %vm277, %v1503, 0
    %1507 = vmatpush.bf16.msra.mxu0 0
    %1508 = vmatpush.bf16.msra.mxu0 0
    %1509 = vmatpush.bf16.msra.mxu0 0
    %1510 = vmatpush.bf16.msra.mxu0 0
    %1511 = vmatpush.bf16.msra.mxu0 0
    %1512 = vmatpush.bf16.msra.mxu0 0
    %1513 = vmatpush.bf16.msra.mxu0 %v1060
    %1514 = vmatpush.bf16.msra.mxu0 %v1059
    %1515 = vmatmul.bf16.gmra.mxu0 %v1505
    %v1516 = vpop.f32.mrf.mxu0
    %v1517 = vadd.f32 0.0, %v1516
    %v1518 = vpop.f32.mrf.mxu0
    %1519 = vdwg.mxu0
    %v1520 = vadd.f32 %v1502, %v1517
    %v1521 = vxor.u32 %v1520, 2147483648
    %v1522 = vmul.f32 %v1521, 1.442695
    %v1523 = vpow.pop %v1522
    %v1524 = vadd.f32 %v1523, 1.0
    %v1525 = vrcp.pop %v1524
    %v1526 = vmul.f32 %v1524, %v1525
    %v1527 = vsub.f32 1.0, %v1526
    %v1528 = vmul.f32 %v1525, %v1527
    %v1529 = vadd.f32 %v1525, %v1528
    %vm1530 = vweird.f32 %v1524
    %vm1531 = vweird.f32 %v1525
    %vm1532 = vmor %vm1530, %vm1531
    %v1533 = vsel %vm1532, %v1525, %v1529
    %v1534 = vand.u32 2147483647, %v1524
    %vm1535 = vcmp.eq.f32.partialorder %v1534, 8.507059e+37
    %v1536 = vand.u32 %v1524, 2147483648
    %v1537 = vor.u32 1.1754944e-38, %v1536
    %v1538 = vsel %vm1535, %v1537, %v1533
    %v1539 = vmul.f32 1.0, %v1538
    %v1540 = vtanh.pop %v1520
    %1542 = vrot.lane.b32.xlu0 %v1498, 32
    %v1543 = vpop.permute.xlu0 %1542
    %v1545 = vmul.f32 %v1539, %v1543
    %1547 = vrot.lane.b32.xlu0 %v1540, 64
    %v1548 = vpop.permute.xlu0 %1547
    %v1550 = vmul.f32 %v1539, %v1548
    %1552 = vrot.lane.b32.xlu0 %v1550, 32
    %v1553 = vpop.permute.xlu0 %1552
    %v1555 = vadd.f32 %v1545, %v1553
    %v1556 = vtanh.pop %v1555
    %1558 = vrot.lane.b32.xlu0 %v1556, 64
    %v1559 = vpop.permute.xlu0 %1558
    %v1561 = vmul.f32 %v1539, %v1559
    %v1562 = vld [vmem:[%s786] sm:$0x3]
    %vm1563 = vcmp.gt.f32.partialorder %v1562, 0.0
    %1565 = vrot.lane.b32.xlu0 %v1561, 32
    %v1566 = vpop.permute.xlu0 %1565
    %v1568 = vsel %vm1563, %v1566, %v1493
    %1570 = vrot.lane.b32.xlu0 %v1555, 96
    %v1571 = vpop.permute.xlu0 %1570
    %v1573 = vsel %vm1563, %v1571, %v1498
    %v1574 = vsel %vm1563, %v1566, 0.0
    %s1575 = scalar_lea.vmem [#allocation10], 12
    %1576 = vst.msk [vmem:[%s1575] sm:$0x3] %vm344, %v1574
    %v1577 = vld [vmem:[%s262] sm:$0x3]
    %v1578 = vpack.c.bf16 %v1568, %v1568
    %v1580 = vsel %vm277, %v1578, 0
    %1582 = vmatpush.bf16.msra.mxu0 0
    %1583 = vmatpush.bf16.msra.mxu0 0
    %1584 = vmatpush.bf16.msra.mxu0 0
    %1585 = vmatpush.bf16.msra.mxu0 0
    %1586 = vmatpush.bf16.msra.mxu0 0
    %1587 = vmatpush.bf16.msra.mxu0 0
    %1588 = vmatpush.bf16.msra.mxu0 %v1060
    %1589 = vmatpush.bf16.msra.mxu0 %v1059
    %1590 = vmatmul.bf16.gmra.mxu0 %v1580
    %v1591 = vpop.f32.mrf.mxu0
    %v1592 = vadd.f32 0.0, %v1591
    %v1593 = vpop.f32.mrf.mxu0
    %1594 = vdwg.mxu0
    %v1595 = vadd.f32 %v1577, %v1592
    %v1596 = vxor.u32 %v1595, 2147483648
    %v1597 = vmul.f32 %v1596, 1.442695
    %v1598 = vpow.pop %v1597
    %v1599 = vadd.f32 %v1598, 1.0
    %v1600 = vrcp.pop %v1599
    %v1601 = vmul.f32 %v1599, %v1600
    %v1602 = vsub.f32 1.0, %v1601
    %v1603 = vmul.f32 %v1600, %v1602
    %v1604 = vadd.f32 %v1600, %v1603
    %vm1605 = vweird.f32 %v1599
    %vm1606 = vweird.f32 %v1600
    %vm1607 = vmor %vm1605, %vm1606
    %v1608 = vsel %vm1607, %v1600, %v1604
    %v1609 = vand.u32 2147483647, %v1599
    %vm1610 = vcmp.eq.f32.partialorder %v1609, 8.507059e+37
    %v1611 = vand.u32 %v1599, 2147483648
    %v1612 = vor.u32 1.1754944e-38, %v1611
    %v1613 = vsel %vm1610, %v1612, %v1608
    %v1614 = vmul.f32 1.0, %v1613
    %v1615 = vtanh.pop %v1595
    %1617 = vrot.lane.b32.xlu0 %v1573, 32
    %v1618 = vpop.permute.xlu0 %1617
    %v1620 = vmul.f32 %v1614, %v1618
    %1622 = vrot.lane.b32.xlu0 %v1615, 64
    %v1623 = vpop.permute.xlu0 %1622
    %v1625 = vmul.f32 %v1614, %v1623
    %1627 = vrot.lane.b32.xlu0 %v1625, 32
    %v1628 = vpop.permute.xlu0 %1627
    %v1630 = vadd.f32 %v1620, %v1628
    %v1631 = vtanh.pop %v1630
    %1633 = vrot.lane.b32.xlu0 %v1631, 64
    %v1634 = vpop.permute.xlu0 %1633
    %v1636 = vmul.f32 %v1614, %v1634
    %v1637 = vld [vmem:[%s862] sm:$0x3]
    %vm1638 = vcmp.gt.f32.partialorder %v1637, 0.0
    %1640 = vrot.lane.b32.xlu0 %v1636, 32
    %v1641 = vpop.permute.xlu0 %1640
    %v1643 = vsel %vm1638, %v1641, %v1568
    %v1644 = vsel %vm1638, %v1641, 0.0
    %s1645 = scalar_lea.vmem [#allocation10], 14
    %1646 = vst.msk [vmem:[%s1645] sm:$0x3] %vm344, %v1644
    %s1647 = scalar_lea.vmem [#allocation11], 2
    %1648 = vst.msk [vmem:[%s1647] sm:$0x3] %vm344, %v1643
    // Predicated region
    $region46: #{_lstm_forward.1} parent=1 // pred_check
      _
    $region47: #{_lstm_forward.1} parent=1 // pred_check_branch
      %1650 = sbr.rel (0) target = $region49
    $region48: #{_lstm_forward.1} parent=1 // pred_region
      %1652 = vsyncadd [#allocation6], 0
      %s1653 = sshll.u32 [#allocation10], 4
      %s1654 = int_to_ptr.vmem [resolvable:$true] %s1653
      %s1655 = sshll.u32 %s8, 4
      %s1656 = int_to_ptr.hbm [resolvable:$true] %s1655
      %1661 = dma.vmem_to_hbm [thread:$0]  %s1654, 256, %s1656, [#allocation6], 32, 32, 2
    $region49: #{_lstm_forward.1} parent=1 // pred_fallthru
      _
    // Predicated region
    $region50: #{_lstm_forward.1} parent=1 // pred_check
      _
    $region51: #{_lstm_forward.1} parent=1 // pred_check_branch
      %1663 = sbr.rel (0) target = $region53
    $region52: #{_lstm_forward.1} parent=1 // pred_region
      %1665 = vsyncadd [#allocation12], 0
      %s1666 = sshll.u32 [#allocation11], 4
      %s1667 = int_to_ptr.vmem [resolvable:$true] %s1666
      %s1668 = sshll.u32 %s9, 4
      %s1669 = int_to_ptr.hbm [resolvable:$true] %s1668
      %1674 = dma.vmem_to_hbm [thread:$0]  %s1667, 64, %s1669, [#allocation12], 32, 32, 2
    $region53: #{_lstm_forward.1} parent=1 // pred_fallthru
      _
    // Predicated region
    $region54: #{_lstm_forward.1} parent=1 // pred_check
      _
    $region55: #{_lstm_forward.1} parent=1 // pred_check_branch
      %1676 = sbr.rel (0) target = $region57
    $region56: #{_lstm_forward.1} parent=1 // pred_region
      %1678 = dma.done [#allocation6], 256
    $region57: #{_lstm_forward.1} parent=1 // pred_fallthru
      _
    // Predicated region
    $region58: #{_lstm_forward.1} parent=1 // pred_check
      _
    $region59: #{_lstm_forward.1} parent=1 // pred_check_branch
      %1680 = sbr.rel (0) target = $region61
    $region60: #{_lstm_forward.1} parent=1 // pred_region
      %1682 = dma.done [#allocation12], 64
    $region61: #{_lstm_forward.1} parent=1 // pred_fallthru
      _
    %1683 = vsyncpa [#allocation5], 1
    %1684 = vsyncpa [#allocation8], 1
    %1685 = vsyncpa [#allocation6], 1
    %1686 = vsyncpa [#allocation12], 1

</llo_original>
